<compile_context>
chip_gen: v6e
topology: v6e:2x2x1
jax: 0.10.0
libtpu: 0.0.40
codegen_flags: <defaults>
</compile_context>

<pallas_src>
import math

import jax
import jax.numpy as jnp
from jax.experimental import pallas as pl
from jax.experimental.pallas import tpu as pltpu


def _make_mha_kernel(num_heads: int, head_dim: int, seq_len: int, batch: int):
    E = num_heads * head_dim
    L = seq_len
    N = batch
    inv_heads = 1.0 / num_heads

    def kernel(x_ref, wqkv_ref, bqkv_ref, wo_ref, bo_ref,
               out_ref, attw_ref, ctx_ref):
        # x_ref: (N*L, E), batch-major rows (row = n*L + l).
        x = x_ref[...].astype(jnp.float32)

        # Fused QKV projection for ALL batch elements at once (M = N*L).
        # The 1/sqrt(head_dim) scale is pre-folded into the q part of wqkv/bqkv.
        qkv = jnp.dot(x, wqkv_ref[...],
                      preferred_element_type=jnp.float32) + bqkv_ref[...]

        # Static loops: batch and head counts are compile-time constants.
        # TODO(synk): head loop kept unrolled (head_dim=4 lane slices) instead
        # of a single head-batched dot_general -- batching heads needs
        # minor-dim reshapes/transposes whose Mosaic lowering is not
        # guaranteed at head_dim=4; the dominant matmuls are fused already.
        for n in range(N):
            r0 = n * L
            qn = qkv[r0:r0 + L, 0 * E:1 * E]
            kn = qkv[r0:r0 + L, 1 * E:2 * E]
            vn = qkv[r0:r0 + L, 2 * E:3 * E]
            attw_sum = jnp.zeros((L, L), jnp.float32)
            for h in range(num_heads):
                lo = h * head_dim
                qh = qn[:, lo:lo + head_dim]                  # (L, hd)
                kh = kn[:, lo:lo + head_dim]
                vh = vn[:, lo:lo + head_dim]
                # scores = qh @ kh^T (contract head_dim, no explicit transpose)
                s = jax.lax.dot_general(qh, kh, (((1,), (1,)), ((), ())),
                                        preferred_element_type=jnp.float32)
                m = jnp.max(s, axis=-1, keepdims=True)
                p = jnp.exp(s - m)
                inv = pl.reciprocal(jnp.sum(p, axis=-1, keepdims=True),
                                    approx=False)
                w = p * inv                                   # softmax, (L, L)
                # Context head -> VMEM scratch at its static column offset
                # (avoids the per-batch concatenate of 8 (L, hd) pieces).
                ctx_ref[r0:r0 + L, lo:lo + head_dim] = jnp.dot(
                    w, vh, preferred_element_type=jnp.float32)
                attw_sum = attw_sum + w
            attw_ref[n] = (attw_sum * inv_heads).astype(attw_ref.dtype)

        # Single fused output projection for all batch elements (M = N*L).
        out = jnp.dot(ctx_ref[...], wo_ref[...],
                      preferred_element_type=jnp.float32) + bo_ref[...]
        for n in range(N):
            # Write directly in the (L, N, E) output layout (no wrapper transpose).
            out_ref[:, n, :] = out[n * L:(n + 1) * L, :].astype(out_ref.dtype)

    return kernel


def init_params(key, input_size, embedding_size):
    """Deterministic synthetic parameters (same shapes as the torch module)."""
    E = embedding_size
    ks = jax.random.split(key, 5)
    emb = 0.1 * jax.random.normal(ks[0], (input_size, E), jnp.float32)
    emb = emb.at[0].set(0.0)  # padding_idx=0
    bound = 1.0 / math.sqrt(E)
    in_proj_w = jax.random.uniform(ks[1], (3 * E, E), jnp.float32, -bound, bound)
    in_proj_b = jax.random.uniform(ks[2], (3 * E,), jnp.float32, -bound, bound)
    out_proj_w = jax.random.uniform(ks[3], (E, E), jnp.float32, -bound, bound)
    out_proj_b = jax.random.uniform(ks[4], (E,), jnp.float32, -bound, bound)
    return dict(embedding=emb, in_proj_weight=in_proj_w, in_proj_bias=in_proj_b,
                out_proj_weight=out_proj_w, out_proj_bias=out_proj_b)


def teacher_encoder_attention(input_seqs, input_lengths, params, num_heads=8):
    """input_seqs: (L, N) int32 ids. Returns (attn_output (L,N,E), attn_weights (N,L,L))."""
    del input_lengths  # matches the reference forward: no key_padding_mask applied
    emb_table = params["embedding"]
    E = emb_table.shape[1]
    head_dim = E // num_heads
    L, N = input_seqs.shape
    scale = 1.0 / math.sqrt(head_dim)

    # Embedding gather directly in batch-major row order: transposing the tiny
    # (L, N) int id array is free, so no (L, N, E) activation transpose is
    # emitted around the pallas_call.  Dropout: eval-mode identity.
    # TODO(synk): training-mode dropout (random mask) not implemented.
    ids_bm = jnp.transpose(input_seqs).reshape(-1)            # (N*L,) batch-major
    x = jnp.take(emb_table, ids_bm, axis=0)                   # (N*L, E)

    # Fused QKV weight (E, 3E) = [q | k | v], with 1/sqrt(hd) folded into q.
    w = params["in_proj_weight"]
    b = params["in_proj_bias"]
    wqkv = jnp.concatenate([w[0 * E:1 * E].T * scale,
                            w[1 * E:2 * E].T,
                            w[2 * E:3 * E].T], axis=1)        # (E, 3E)
    bqkv = jnp.concatenate([b[0 * E:1 * E] * scale,
                            b[1 * E:2 * E],
                            b[2 * E:3 * E]]).reshape(1, 3 * E)
    wo = params["out_proj_weight"].T                          # (E, E)
    bo = params["out_proj_bias"].reshape(1, E)

    kernel = _make_mha_kernel(num_heads, head_dim, L, N)

    def full(shape):
        zeros = (0,) * len(shape)
        return pl.BlockSpec(shape, lambda i: zeros)

    # Whole problem in one grid step: per-batch work (L=8, E=32) is far below
    # the ~600-cycle per-grid-step pipeline overhead, so folding all batch
    # elements into one step (M = N*L for the big matmuls) is the right call
    # at this size.  (For large N, tile the batch back over a "parallel" grid
    # axis so v7x's two TensorCores both get work.)
    out, attw = pl.pallas_call(
        kernel,
        out_shape=(jax.ShapeDtypeStruct((L, N, E), x.dtype),
                   jax.ShapeDtypeStruct((N, L, L), jnp.float32)),
        grid=(1,),
        in_specs=[full((N * L, E)),          # activations (batch-major rows)
                  full((E, 3 * E)),          # fused QKV weight
                  full((1, 3 * E)),          # fused QKV bias
                  full((E, E)),              # output projection weight
                  full((1, E))],             # output projection bias
        out_specs=(full((L, N, E)),          # attn_output, torch layout
                   full((N, L, L))),         # head-averaged attention weights
        scratch_shapes=[pltpu.VMEM((N * L, E), jnp.float32)],  # context (all heads)
        compiler_params=pltpu.CompilerParams(
            dimension_semantics=("arbitrary",),
            vmem_limit_bytes=8 * 1024 * 1024),
    )(x, wqkv, bqkv, wo, bo)

    return out, attw


def _reference(input_seqs, params, num_heads=8):
    """Pure-JAX reference matching torch.nn.MultiheadAttention math (eval mode)."""
    E = params["embedding"].shape[1]
    hd = E // num_heads
    x = jnp.take(params["embedding"], input_seqs, axis=0)     # (L, N, E)
    L, N, _ = x.shape
    w = params["in_proj_weight"]
    b = params["in_proj_bias"]
    q = x @ w[:E].T + b[:E]
    k = x @ w[E:2 * E].T + b[E:2 * E]
    v = x @ w[2 * E:].T + b[2 * E:]

    def heads(t):  # (L, N, E) -> (N, H, L, hd)
        return t.reshape(L, N, num_heads, hd).transpose(1, 2, 0, 3)

    qh, kh, vh = heads(q) / math.sqrt(hd), heads(k), heads(v)
    s = jnp.einsum("nhld,nhmd->nhlm", qh, kh)
    aw = jax.nn.softmax(s, axis=-1)                            # (N, H, L, L)
    ctx = jnp.einsum("nhlm,nhmd->nhld", aw, vh)                # (N, H, L, hd)
    ctx = ctx.transpose(2, 0, 1, 3).reshape(L, N, E)
    out = ctx @ params["out_proj_weight"].T + params["out_proj_bias"]
    return out, aw.mean(axis=1)


if __name__ == "__main__":
    VOCAB, E, HIDDEN = 50, 32, 64
    L, N = 8, 2

    key = jax.random.PRNGKey(0)
    k_param, k_seq = jax.random.split(key)
    params = init_params(k_param, VOCAB, E)

    input_seqs = jax.random.randint(k_seq, (L, N), 0, VOCAB, dtype=jnp.int32)
    input_lengths = jnp.full((N,), L, dtype=jnp.int32)

    attn_out, attn_w = teacher_encoder_attention(input_seqs, input_lengths, params)
    attn_out = jax.block_until_ready(attn_out)
    attn_w = jax.block_until_ready(attn_w)

    ref_out, ref_w = _reference(input_seqs, params)
    assert attn_out.shape == (L, N, E) and attn_w.shape == (N, L, L)
    assert jnp.allclose(attn_out, ref_out, rtol=1e-4, atol=1e-4)
    assert jnp.allclose(attn_w, ref_w, rtol=1e-4, atol=1e-4)

    print("KERNEL_OK")
</pallas_src>

<mosaic_0001>
module attributes {stable_mosaic.version = 11 : i64} {
  func.func @kernel(%arg0: i32, %arg1: memref<16x32xf32, #tpu.memory_space<vmem>>, %arg2: memref<32x96xf32, #tpu.memory_space<vmem>>, %arg3: memref<1x96xf32, #tpu.memory_space<vmem>>, %arg4: memref<32x32xf32, #tpu.memory_space<vmem>>, %arg5: memref<1x32xf32, #tpu.memory_space<vmem>>, %arg6: memref<8x2x32xf32, #tpu.memory_space<vmem>>, %arg7: memref<2x8x8xf32, #tpu.memory_space<vmem>>, %arg8: memref<16x32xf32, #tpu.memory_space<vmem>>) attributes {dimension_semantics = [#tpu.dimension_semantics<arbitrary>], iteration_bounds = array<i64: 1>, scalar_prefetch = 0 : i64, scratch_operands = 1 : i64, tpu.core_type = #tpu.core_type<tc>, window_params = [{pipeline_mode = #tpu.pipeline_mode<synchronous>, transform_indices = @transform_0, window_bounds = array<i64: 16, 32>}, {pipeline_mode = #tpu.pipeline_mode<synchronous>, transform_indices = @transform_1, window_bounds = array<i64: 32, 96>}, {pipeline_mode = #tpu.pipeline_mode<synchronous>, transform_indices = @transform_2, window_bounds = array<i64: 1, 96>}, {pipeline_mode = #tpu.pipeline_mode<synchronous>, transform_indices = @transform_3, window_bounds = array<i64: 32, 32>}, {pipeline_mode = #tpu.pipeline_mode<synchronous>, transform_indices = @transform_4, window_bounds = array<i64: 1, 32>}, {pipeline_mode = #tpu.pipeline_mode<synchronous>, transform_indices = @transform_5, window_bounds = array<i64: 8, 2, 32>}, {pipeline_mode = #tpu.pipeline_mode<synchronous>, transform_indices = @transform_6, window_bounds = array<i64: 2, 8, 8>}]} {
    %c0 = arith.constant 0 : index
    %c0_0 = arith.constant 0 : index
    %0 = vector.load %arg1[%c0, %c0_0] : memref<16x32xf32, #tpu.memory_space<vmem>>, vector<16x32xf32>
    %c0_1 = arith.constant 0 : index
    %c0_2 = arith.constant 0 : index
    %1 = vector.load %arg2[%c0_1, %c0_2] : memref<32x96xf32, #tpu.memory_space<vmem>>, vector<32x96xf32>
    %cst = arith.constant dense<0.000000e+00> : vector<16x96xf32>
    %2 = tpu.matmul %0, %1, %cst {dimension_numbers = #tpu.dot_dimension_numbers<[1], [0], [0], [1], [0, 0, 1, 1], [], []>} : vector<16x32xf32>, vector<32x96xf32>, vector<16x96xf32> -> vector<16x96xf32>
    %c0_3 = arith.constant 0 : index
    %c0_4 = arith.constant 0 : index
    %3 = vector.load %arg3[%c0_3, %c0_4] : memref<1x96xf32, #tpu.memory_space<vmem>>, vector<1x96xf32>
    %4 = vector.broadcast %3 : vector<1x96xf32> to vector<16x96xf32>
    %5 = arith.addf %2, %4 : vector<16x96xf32>
    %6 = vector.extract_strided_slice %5 {offsets = [0, 0], sizes = [8, 32], strides = [1, 1]} : vector<16x96xf32> to vector<8x32xf32>
    %7 = vector.extract_strided_slice %5 {offsets = [0, 32], sizes = [8, 32], strides = [1, 1]} : vector<16x96xf32> to vector<8x32xf32>
    %8 = vector.extract_strided_slice %5 {offsets = [0, 64], sizes = [8, 32], strides = [1, 1]} : vector<16x96xf32> to vector<8x32xf32>
    %cst_5 = arith.constant 0.000000e+00 : f32
    %9 = vector.broadcast %cst_5 : f32 to vector<8x8xf32>
    %10 = vector.extract_strided_slice %6 {offsets = [0, 0], sizes = [8, 4], strides = [1, 1]} : vector<8x32xf32> to vector<8x4xf32>
    %11 = vector.extract_strided_slice %7 {offsets = [0, 0], sizes = [8, 4], strides = [1, 1]} : vector<8x32xf32> to vector<8x4xf32>
    %12 = vector.extract_strided_slice %8 {offsets = [0, 0], sizes = [8, 4], strides = [1, 1]} : vector<8x32xf32> to vector<8x4xf32>
    %cst_6 = arith.constant dense<0.000000e+00> : vector<8x8xf32>
    %13 = tpu.matmul %10, %11, %cst_6 {dimension_numbers = #tpu.dot_dimension_numbers<[1], [1], [0], [0], [0, 0, 1, 0], [], []>} : vector<8x4xf32>, vector<8x4xf32>, vector<8x8xf32> -> vector<8x8xf32>
    %cst_7 = arith.constant dense<0xFF800000> : vector<8xf32>
    %14 = vector.multi_reduction <maximumf>, %13, %cst_7 [1] : vector<8x8xf32> to vector<8xf32>
    %15 = vector.shape_cast %14 : vector<8xf32> to vector<8x1xf32>
    %16 = vector.broadcast %15 : vector<8x1xf32> to vector<8x8xf32>
    %17 = arith.subf %13, %16 : vector<8x8xf32>
    %18 = math.exp %17 : vector<8x8xf32>
    %cst_8 = arith.constant dense<0.000000e+00> : vector<8xf32>
    %19 = vector.multi_reduction <add>, %18, %cst_8 [1] : vector<8x8xf32> to vector<8xf32>
    %20 = vector.shape_cast %19 : vector<8xf32> to vector<8x1xf32>
    %21 = tpu.reciprocal %20 : vector<8x1xf32> -> vector<8x1xf32>
    %22 = vector.broadcast %21 : vector<8x1xf32> to vector<8x8xf32>
    %23 = arith.mulf %18, %22 : vector<8x8xf32>
    %cst_9 = arith.constant dense<0.000000e+00> : vector<8x4xf32>
    %24 = tpu.matmul %23, %12, %cst_9 {dimension_numbers = #tpu.dot_dimension_numbers<[1], [0], [0], [1], [0, 0, 1, 1], [], []>} : vector<8x8xf32>, vector<8x4xf32>, vector<8x4xf32> -> vector<8x4xf32>
    %c0_10 = arith.constant 0 : index
    %c0_11 = arith.constant 0 : index
    %25 = vector.load %arg8[%c0_10, %c0_11] : memref<16x32xf32, #tpu.memory_space<vmem>>, vector<8x4xf32>
    tpu.vector_store %arg8[%c0_10, %c0_11], %24 {strides = array<i32>} : memref<16x32xf32, #tpu.memory_space<vmem>>, vector<8x4xf32>,
    %26 = arith.addf %9, %23 : vector<8x8xf32>
    %27 = vector.extract_strided_slice %6 {offsets = [0, 4], sizes = [8, 4], strides = [1, 1]} : vector<8x32xf32> to vector<8x4xf32>
    %28 = vector.extract_strided_slice %7 {offsets = [0, 4], sizes = [8, 4], strides = [1, 1]} : vector<8x32xf32> to vector<8x4xf32>
    %29 = vector.extract_strided_slice %8 {offsets = [0, 4], sizes = [8, 4], strides = [1, 1]} : vector<8x32xf32> to vector<8x4xf32>
    %cst_12 = arith.constant dense<0.000000e+00> : vector<8x8xf32>
    %30 = tpu.matmul %27, %28, %cst_12 {dimension_numbers = #tpu.dot_dimension_numbers<[1], [1], [0], [0], [0, 0, 1, 0], [], []>} : vector<8x4xf32>, vector<8x4xf32>, vector<8x8xf32> -> vector<8x8xf32>
    %cst_13 = arith.constant dense<0xFF800000> : vector<8xf32>
    %31 = vector.multi_reduction <maximumf>, %30, %cst_13 [1] : vector<8x8xf32> to vector<8xf32>
    %32 = vector.shape_cast %31 : vector<8xf32> to vector<8x1xf32>
    %33 = vector.broadcast %32 : vector<8x1xf32> to vector<8x8xf32>
    %34 = arith.subf %30, %33 : vector<8x8xf32>
    %35 = math.exp %34 : vector<8x8xf32>
    %cst_14 = arith.constant dense<0.000000e+00> : vector<8xf32>
    %36 = vector.multi_reduction <add>, %35, %cst_14 [1] : vector<8x8xf32> to vector<8xf32>
    %37 = vector.shape_cast %36 : vector<8xf32> to vector<8x1xf32>
    %38 = tpu.reciprocal %37 : vector<8x1xf32> -> vector<8x1xf32>
    %39 = vector.broadcast %38 : vector<8x1xf32> to vector<8x8xf32>
    %40 = arith.mulf %35, %39 : vector<8x8xf32>
    %cst_15 = arith.constant dense<0.000000e+00> : vector<8x4xf32>
    %41 = tpu.matmul %40, %29, %cst_15 {dimension_numbers = #tpu.dot_dimension_numbers<[1], [0], [0], [1], [0, 0, 1, 1], [], []>} : vector<8x8xf32>, vector<8x4xf32>, vector<8x4xf32> -> vector<8x4xf32>
    %c0_16 = arith.constant 0 : index
    %c4 = arith.constant 4 : index
    %42 = vector.load %arg8[%c0_16, %c4] : memref<16x32xf32, #tpu.memory_space<vmem>>, vector<8x4xf32>
    tpu.vector_store %arg8[%c0_16, %c4], %41 {strides = array<i32>} : memref<16x32xf32, #tpu.memory_space<vmem>>, vector<8x4xf32>,
    %43 = arith.addf %26, %40 : vector<8x8xf32>
    %44 = vector.extract_strided_slice %6 {offsets = [0, 8], sizes = [8, 4], strides = [1, 1]} : vector<8x32xf32> to vector<8x4xf32>
    %45 = vector.extract_strided_slice %7 {offsets = [0, 8], sizes = [8, 4], strides = [1, 1]} : vector<8x32xf32> to vector<8x4xf32>
    %46 = vector.extract_strided_slice %8 {offsets = [0, 8], sizes = [8, 4], strides = [1, 1]} : vector<8x32xf32> to vector<8x4xf32>
    %cst_17 = arith.constant dense<0.000000e+00> : vector<8x8xf32>
    %47 = tpu.matmul %44, %45, %cst_17 {dimension_numbers = #tpu.dot_dimension_numbers<[1], [1], [0], [0], [0, 0, 1, 0], [], []>} : vector<8x4xf32>, vector<8x4xf32>, vector<8x8xf32> -> vector<8x8xf32>
    %cst_18 = arith.constant dense<0xFF800000> : vector<8xf32>
    %48 = vector.multi_reduction <maximumf>, %47, %cst_18 [1] : vector<8x8xf32> to vector<8xf32>
    %49 = vector.shape_cast %48 : vector<8xf32> to vector<8x1xf32>
    %50 = vector.broadcast %49 : vector<8x1xf32> to vector<8x8xf32>
    %51 = arith.subf %47, %50 : vector<8x8xf32>
    %52 = math.exp %51 : vector<8x8xf32>
    %cst_19 = arith.constant dense<0.000000e+00> : vector<8xf32>
    %53 = vector.multi_reduction <add>, %52, %cst_19 [1] : vector<8x8xf32> to vector<8xf32>
    %54 = vector.shape_cast %53 : vector<8xf32> to vector<8x1xf32>
    %55 = tpu.reciprocal %54 : vector<8x1xf32> -> vector<8x1xf32>
    %56 = vector.broadcast %55 : vector<8x1xf32> to vector<8x8xf32>
    %57 = arith.mulf %52, %56 : vector<8x8xf32>
    %cst_20 = arith.constant dense<0.000000e+00> : vector<8x4xf32>
    %58 = tpu.matmul %57, %46, %cst_20 {dimension_numbers = #tpu.dot_dimension_numbers<[1], [0], [0], [1], [0, 0, 1, 1], [], []>} : vector<8x8xf32>, vector<8x4xf32>, vector<8x4xf32> -> vector<8x4xf32>
    %c0_21 = arith.constant 0 : index
    %c8 = arith.constant 8 : index
    %59 = vector.load %arg8[%c0_21, %c8] : memref<16x32xf32, #tpu.memory_space<vmem>>, vector<8x4xf32>
    tpu.vector_store %arg8[%c0_21, %c8], %58 {strides = array<i32>} : memref<16x32xf32, #tpu.memory_space<vmem>>, vector<8x4xf32>,
    %60 = arith.addf %43, %57 : vector<8x8xf32>
    %61 = vector.extract_strided_slice %6 {offsets = [0, 12], sizes = [8, 4], strides = [1, 1]} : vector<8x32xf32> to vector<8x4xf32>
    %62 = vector.extract_strided_slice %7 {offsets = [0, 12], sizes = [8, 4], strides = [1, 1]} : vector<8x32xf32> to vector<8x4xf32>
    %63 = vector.extract_strided_slice %8 {offsets = [0, 12], sizes = [8, 4], strides = [1, 1]} : vector<8x32xf32> to vector<8x4xf32>
    %cst_22 = arith.constant dense<0.000000e+00> : vector<8x8xf32>
    %64 = tpu.matmul %61, %62, %cst_22 {dimension_numbers = #tpu.dot_dimension_numbers<[1], [1], [0], [0], [0, 0, 1, 0], [], []>} : vector<8x4xf32>, vector<8x4xf32>, vector<8x8xf32> -> vector<8x8xf32>
    %cst_23 = arith.constant dense<0xFF800000> : vector<8xf32>
    %65 = vector.multi_reduction <maximumf>, %64, %cst_23 [1] : vector<8x8xf32> to vector<8xf32>
    %66 = vector.shape_cast %65 : vector<8xf32> to vector<8x1xf32>
    %67 = vector.broadcast %66 : vector<8x1xf32> to vector<8x8xf32>
    %68 = arith.subf %64, %67 : vector<8x8xf32>
    %69 = math.exp %68 : vector<8x8xf32>
    %cst_24 = arith.constant dense<0.000000e+00> : vector<8xf32>
    %70 = vector.multi_reduction <add>, %69, %cst_24 [1] : vector<8x8xf32> to vector<8xf32>
    %71 = vector.shape_cast %70 : vector<8xf32> to vector<8x1xf32>
    %72 = tpu.reciprocal %71 : vector<8x1xf32> -> vector<8x1xf32>
    %73 = vector.broadcast %72 : vector<8x1xf32> to vector<8x8xf32>
    %74 = arith.mulf %69, %73 : vector<8x8xf32>
    %cst_25 = arith.constant dense<0.000000e+00> : vector<8x4xf32>
    %75 = tpu.matmul %74, %63, %cst_25 {dimension_numbers = #tpu.dot_dimension_numbers<[1], [0], [0], [1], [0, 0, 1, 1], [], []>} : vector<8x8xf32>, vector<8x4xf32>, vector<8x4xf32> -> vector<8x4xf32>
    %c0_26 = arith.constant 0 : index
    %c12 = arith.constant 12 : index
    %76 = vector.load %arg8[%c0_26, %c12] : memref<16x32xf32, #tpu.memory_space<vmem>>, vector<8x4xf32>
    tpu.vector_store %arg8[%c0_26, %c12], %75 {strides = array<i32>} : memref<16x32xf32, #tpu.memory_space<vmem>>, vector<8x4xf32>,
    %77 = arith.addf %60, %74 : vector<8x8xf32>
    %78 = vector.extract_strided_slice %6 {offsets = [0, 16], sizes = [8, 4], strides = [1, 1]} : vector<8x32xf32> to vector<8x4xf32>
    %79 = vector.extract_strided_slice %7 {offsets = [0, 16], sizes = [8, 4], strides = [1, 1]} : vector<8x32xf32> to vector<8x4xf32>
    %80 = vector.extract_strided_slice %8 {offsets = [0, 16], sizes = [8, 4], strides = [1, 1]} : vector<8x32xf32> to vector<8x4xf32>
    %cst_27 = arith.constant dense<0.000000e+00> : vector<8x8xf32>
    %81 = tpu.matmul %78, %79, %cst_27 {dimension_numbers = #tpu.dot_dimension_numbers<[1], [1], [0], [0], [0, 0, 1, 0], [], []>} : vector<8x4xf32>, vector<8x4xf32>, vector<8x8xf32> -> vector<8x8xf32>
    %cst_28 = arith.constant dense<0xFF800000> : vector<8xf32>
    %82 = vector.multi_reduction <maximumf>, %81, %cst_28 [1] : vector<8x8xf32> to vector<8xf32>
    %83 = vector.shape_cast %82 : vector<8xf32> to vector<8x1xf32>
    %84 = vector.broadcast %83 : vector<8x1xf32> to vector<8x8xf32>
    %85 = arith.subf %81, %84 : vector<8x8xf32>
    %86 = math.exp %85 : vector<8x8xf32>
    %cst_29 = arith.constant dense<0.000000e+00> : vector<8xf32>
    %87 = vector.multi_reduction <add>, %86, %cst_29 [1] : vector<8x8xf32> to vector<8xf32>
    %88 = vector.shape_cast %87 : vector<8xf32> to vector<8x1xf32>
    %89 = tpu.reciprocal %88 : vector<8x1xf32> -> vector<8x1xf32>
    %90 = vector.broadcast %89 : vector<8x1xf32> to vector<8x8xf32>
    %91 = arith.mulf %86, %90 : vector<8x8xf32>
    %cst_30 = arith.constant dense<0.000000e+00> : vector<8x4xf32>
    %92 = tpu.matmul %91, %80, %cst_30 {dimension_numbers = #tpu.dot_dimension_numbers<[1], [0], [0], [1], [0, 0, 1, 1], [], []>} : vector<8x8xf32>, vector<8x4xf32>, vector<8x4xf32> -> vector<8x4xf32>
    %c0_31 = arith.constant 0 : index
    %c16 = arith.constant 16 : index
    %93 = vector.load %arg8[%c0_31, %c16] : memref<16x32xf32, #tpu.memory_space<vmem>>, vector<8x4xf32>
    tpu.vector_store %arg8[%c0_31, %c16], %92 {strides = array<i32>} : memref<16x32xf32, #tpu.memory_space<vmem>>, vector<8x4xf32>,
    %94 = arith.addf %77, %91 : vector<8x8xf32>
    %95 = vector.extract_strided_slice %6 {offsets = [0, 20], sizes = [8, 4], strides = [1, 1]} : vector<8x32xf32> to vector<8x4xf32>
    %96 = vector.extract_strided_slice %7 {offsets = [0, 20], sizes = [8, 4], strides = [1, 1]} : vector<8x32xf32> to vector<8x4xf32>
    %97 = vector.extract_strided_slice %8 {offsets = [0, 20], sizes = [8, 4], strides = [1, 1]} : vector<8x32xf32> to vector<8x4xf32>
    %cst_32 = arith.constant dense<0.000000e+00> : vector<8x8xf32>
    %98 = tpu.matmul %95, %96, %cst_32 {dimension_numbers = #tpu.dot_dimension_numbers<[1], [1], [0], [0], [0, 0, 1, 0], [], []>} : vector<8x4xf32>, vector<8x4xf32>, vector<8x8xf32> -> vector<8x8xf32>
    %cst_33 = arith.constant dense<0xFF800000> : vector<8xf32>
    %99 = vector.multi_reduction <maximumf>, %98, %cst_33 [1] : vector<8x8xf32> to vector<8xf32>
    %100 = vector.shape_cast %99 : vector<8xf32> to vector<8x1xf32>
    %101 = vector.broadcast %100 : vector<8x1xf32> to vector<8x8xf32>
    %102 = arith.subf %98, %101 : vector<8x8xf32>
    %103 = math.exp %102 : vector<8x8xf32>
    %cst_34 = arith.constant dense<0.000000e+00> : vector<8xf32>
    %104 = vector.multi_reduction <add>, %103, %cst_34 [1] : vector<8x8xf32> to vector<8xf32>
    %105 = vector.shape_cast %104 : vector<8xf32> to vector<8x1xf32>
    %106 = tpu.reciprocal %105 : vector<8x1xf32> -> vector<8x1xf32>
    %107 = vector.broadcast %106 : vector<8x1xf32> to vector<8x8xf32>
    %108 = arith.mulf %103, %107 : vector<8x8xf32>
    %cst_35 = arith.constant dense<0.000000e+00> : vector<8x4xf32>
    %109 = tpu.matmul %108, %97, %cst_35 {dimension_numbers = #tpu.dot_dimension_numbers<[1], [0], [0], [1], [0, 0, 1, 1], [], []>} : vector<8x8xf32>, vector<8x4xf32>, vector<8x4xf32> -> vector<8x4xf32>
    %c0_36 = arith.constant 0 : index
    %c20 = arith.constant 20 : index
    %110 = vector.load %arg8[%c0_36, %c20] : memref<16x32xf32, #tpu.memory_space<vmem>>, vector<8x4xf32>
    tpu.vector_store %arg8[%c0_36, %c20], %109 {strides = array<i32>} : memref<16x32xf32, #tpu.memory_space<vmem>>, vector<8x4xf32>,
    %111 = arith.addf %94, %108 : vector<8x8xf32>
    %112 = vector.extract_strided_slice %6 {offsets = [0, 24], sizes = [8, 4], strides = [1, 1]} : vector<8x32xf32> to vector<8x4xf32>
    %113 = vector.extract_strided_slice %7 {offsets = [0, 24], sizes = [8, 4], strides = [1, 1]} : vector<8x32xf32> to vector<8x4xf32>
    %114 = vector.extract_strided_slice %8 {offsets = [0, 24], sizes = [8, 4], strides = [1, 1]} : vector<8x32xf32> to vector<8x4xf32>
    %cst_37 = arith.constant dense<0.000000e+00> : vector<8x8xf32>
    %115 = tpu.matmul %112, %113, %cst_37 {dimension_numbers = #tpu.dot_dimension_numbers<[1], [1], [0], [0], [0, 0, 1, 0], [], []>} : vector<8x4xf32>, vector<8x4xf32>, vector<8x8xf32> -> vector<8x8xf32>
    %cst_38 = arith.constant dense<0xFF800000> : vector<8xf32>
    %116 = vector.multi_reduction <maximumf>, %115, %cst_38 [1] : vector<8x8xf32> to vector<8xf32>
    %117 = vector.shape_cast %116 : vector<8xf32> to vector<8x1xf32>
    %118 = vector.broadcast %117 : vector<8x1xf32> to vector<8x8xf32>
    %119 = arith.subf %115, %118 : vector<8x8xf32>
    %120 = math.exp %119 : vector<8x8xf32>
    %cst_39 = arith.constant dense<0.000000e+00> : vector<8xf32>
    %121 = vector.multi_reduction <add>, %120, %cst_39 [1] : vector<8x8xf32> to vector<8xf32>
    %122 = vector.shape_cast %121 : vector<8xf32> to vector<8x1xf32>
    %123 = tpu.reciprocal %122 : vector<8x1xf32> -> vector<8x1xf32>
    %124 = vector.broadcast %123 : vector<8x1xf32> to vector<8x8xf32>
    %125 = arith.mulf %120, %124 : vector<8x8xf32>
    %cst_40 = arith.constant dense<0.000000e+00> : vector<8x4xf32>
    %126 = tpu.matmul %125, %114, %cst_40 {dimension_numbers = #tpu.dot_dimension_numbers<[1], [0], [0], [1], [0, 0, 1, 1], [], []>} : vector<8x8xf32>, vector<8x4xf32>, vector<8x4xf32> -> vector<8x4xf32>
    %c0_41 = arith.constant 0 : index
    %c24 = arith.constant 24 : index
    %127 = vector.load %arg8[%c0_41, %c24] : memref<16x32xf32, #tpu.memory_space<vmem>>, vector<8x4xf32>
    tpu.vector_store %arg8[%c0_41, %c24], %126 {strides = array<i32>} : memref<16x32xf32, #tpu.memory_space<vmem>>, vector<8x4xf32>,
    %128 = arith.addf %111, %125 : vector<8x8xf32>
    %129 = vector.extract_strided_slice %6 {offsets = [0, 28], sizes = [8, 4], strides = [1, 1]} : vector<8x32xf32> to vector<8x4xf32>
    %130 = vector.extract_strided_slice %7 {offsets = [0, 28], sizes = [8, 4], strides = [1, 1]} : vector<8x32xf32> to vector<8x4xf32>
    %131 = vector.extract_strided_slice %8 {offsets = [0, 28], sizes = [8, 4], strides = [1, 1]} : vector<8x32xf32> to vector<8x4xf32>
    %cst_42 = arith.constant dense<0.000000e+00> : vector<8x8xf32>
    %132 = tpu.matmul %129, %130, %cst_42 {dimension_numbers = #tpu.dot_dimension_numbers<[1], [1], [0], [0], [0, 0, 1, 0], [], []>} : vector<8x4xf32>, vector<8x4xf32>, vector<8x8xf32> -> vector<8x8xf32>
    %cst_43 = arith.constant dense<0xFF800000> : vector<8xf32>
    %133 = vector.multi_reduction <maximumf>, %132, %cst_43 [1] : vector<8x8xf32> to vector<8xf32>
    %134 = vector.shape_cast %133 : vector<8xf32> to vector<8x1xf32>
    %135 = vector.broadcast %134 : vector<8x1xf32> to vector<8x8xf32>
    %136 = arith.subf %132, %135 : vector<8x8xf32>
    %137 = math.exp %136 : vector<8x8xf32>
    %cst_44 = arith.constant dense<0.000000e+00> : vector<8xf32>
    %138 = vector.multi_reduction <add>, %137, %cst_44 [1] : vector<8x8xf32> to vector<8xf32>
    %139 = vector.shape_cast %138 : vector<8xf32> to vector<8x1xf32>
    %140 = tpu.reciprocal %139 : vector<8x1xf32> -> vector<8x1xf32>
    %141 = vector.broadcast %140 : vector<8x1xf32> to vector<8x8xf32>
    %142 = arith.mulf %137, %141 : vector<8x8xf32>
    %cst_45 = arith.constant dense<0.000000e+00> : vector<8x4xf32>
    %143 = tpu.matmul %142, %131, %cst_45 {dimension_numbers = #tpu.dot_dimension_numbers<[1], [0], [0], [1], [0, 0, 1, 1], [], []>} : vector<8x8xf32>, vector<8x4xf32>, vector<8x4xf32> -> vector<8x4xf32>
    %c0_46 = arith.constant 0 : index
    %c28 = arith.constant 28 : index
    %144 = vector.load %arg8[%c0_46, %c28] : memref<16x32xf32, #tpu.memory_space<vmem>>, vector<8x4xf32>
    tpu.vector_store %arg8[%c0_46, %c28], %143 {strides = array<i32>} : memref<16x32xf32, #tpu.memory_space<vmem>>, vector<8x4xf32>,
    %145 = arith.addf %128, %142 : vector<8x8xf32>
    %cst_47 = arith.constant 1.250000e-01 : f32
    %146 = vector.broadcast %cst_47 : f32 to vector<8x8xf32>
    %147 = arith.mulf %145, %146 : vector<8x8xf32>
    %c0_48 = arith.constant 0 : index
    %c0_49 = arith.constant 0 : index
    %c0_50 = arith.constant 0 : index
    %148 = vector.load %arg7[%c0_48, %c0_49, %c0_50] : memref<2x8x8xf32, #tpu.memory_space<vmem>>, vector<1x8x8xf32>
    %149 = vector.shape_cast %148 : vector<1x8x8xf32> to vector<8x8xf32>
    %150 = vector.shape_cast %147 : vector<8x8xf32> to vector<1x8x8xf32>
    tpu.vector_store %arg7[%c0_48, %c0_49, %c0_50], %150 {strides = array<i32>} : memref<2x8x8xf32, #tpu.memory_space<vmem>>, vector<1x8x8xf32>,
    %151 = vector.extract_strided_slice %5 {offsets = [8, 0], sizes = [8, 32], strides = [1, 1]} : vector<16x96xf32> to vector<8x32xf32>
    %152 = vector.extract_strided_slice %5 {offsets = [8, 32], sizes = [8, 32], strides = [1, 1]} : vector<16x96xf32> to vector<8x32xf32>
    %153 = vector.extract_strided_slice %5 {offsets = [8, 64], sizes = [8, 32], strides = [1, 1]} : vector<16x96xf32> to vector<8x32xf32>
    %cst_51 = arith.constant 0.000000e+00 : f32
    %154 = vector.broadcast %cst_51 : f32 to vector<8x8xf32>
    %155 = vector.extract_strided_slice %151 {offsets = [0, 0], sizes = [8, 4], strides = [1, 1]} : vector<8x32xf32> to vector<8x4xf32>
    %156 = vector.extract_strided_slice %152 {offsets = [0, 0], sizes = [8, 4], strides = [1, 1]} : vector<8x32xf32> to vector<8x4xf32>
    %157 = vector.extract_strided_slice %153 {offsets = [0, 0], sizes = [8, 4], strides = [1, 1]} : vector<8x32xf32> to vector<8x4xf32>
    %cst_52 = arith.constant dense<0.000000e+00> : vector<8x8xf32>
    %158 = tpu.matmul %155, %156, %cst_52 {dimension_numbers = #tpu.dot_dimension_numbers<[1], [1], [0], [0], [0, 0, 1, 0], [], []>} : vector<8x4xf32>, vector<8x4xf32>, vector<8x8xf32> -> vector<8x8xf32>
    %cst_53 = arith.constant dense<0xFF800000> : vector<8xf32>
    %159 = vector.multi_reduction <maximumf>, %158, %cst_53 [1] : vector<8x8xf32> to vector<8xf32>
    %160 = vector.shape_cast %159 : vector<8xf32> to vector<8x1xf32>
    %161 = vector.broadcast %160 : vector<8x1xf32> to vector<8x8xf32>
    %162 = arith.subf %158, %161 : vector<8x8xf32>
    %163 = math.exp %162 : vector<8x8xf32>
    %cst_54 = arith.constant dense<0.000000e+00> : vector<8xf32>
    %164 = vector.multi_reduction <add>, %163, %cst_54 [1] : vector<8x8xf32> to vector<8xf32>
    %165 = vector.shape_cast %164 : vector<8xf32> to vector<8x1xf32>
    %166 = tpu.reciprocal %165 : vector<8x1xf32> -> vector<8x1xf32>
    %167 = vector.broadcast %166 : vector<8x1xf32> to vector<8x8xf32>
    %168 = arith.mulf %163, %167 : vector<8x8xf32>
    %cst_55 = arith.constant dense<0.000000e+00> : vector<8x4xf32>
    %169 = tpu.matmul %168, %157, %cst_55 {dimension_numbers = #tpu.dot_dimension_numbers<[1], [0], [0], [1], [0, 0, 1, 1], [], []>} : vector<8x8xf32>, vector<8x4xf32>, vector<8x4xf32> -> vector<8x4xf32>
    %c8_56 = arith.constant 8 : index
    %c0_57 = arith.constant 0 : index
    %170 = vector.load %arg8[%c8_56, %c0_57] : memref<16x32xf32, #tpu.memory_space<vmem>>, vector<8x4xf32>
    tpu.vector_store %arg8[%c8_56, %c0_57], %169 {strides = array<i32>} : memref<16x32xf32, #tpu.memory_space<vmem>>, vector<8x4xf32>,
    %171 = arith.addf %154, %168 : vector<8x8xf32>
    %172 = vector.extract_strided_slice %151 {offsets = [0, 4], sizes = [8, 4], strides = [1, 1]} : vector<8x32xf32> to vector<8x4xf32>
    %173 = vector.extract_strided_slice %152 {offsets = [0, 4], sizes = [8, 4], strides = [1, 1]} : vector<8x32xf32> to vector<8x4xf32>
    %174 = vector.extract_strided_slice %153 {offsets = [0, 4], sizes = [8, 4], strides = [1, 1]} : vector<8x32xf32> to vector<8x4xf32>
    %cst_58 = arith.constant dense<0.000000e+00> : vector<8x8xf32>
    %175 = tpu.matmul %172, %173, %cst_58 {dimension_numbers = #tpu.dot_dimension_numbers<[1], [1], [0], [0], [0, 0, 1, 0], [], []>} : vector<8x4xf32>, vector<8x4xf32>, vector<8x8xf32> -> vector<8x8xf32>
    %cst_59 = arith.constant dense<0xFF800000> : vector<8xf32>
    %176 = vector.multi_reduction <maximumf>, %175, %cst_59 [1] : vector<8x8xf32> to vector<8xf32>
    %177 = vector.shape_cast %176 : vector<8xf32> to vector<8x1xf32>
    %178 = vector.broadcast %177 : vector<8x1xf32> to vector<8x8xf32>
    %179 = arith.subf %175, %178 : vector<8x8xf32>
    %180 = math.exp %179 : vector<8x8xf32>
    %cst_60 = arith.constant dense<0.000000e+00> : vector<8xf32>
    %181 = vector.multi_reduction <add>, %180, %cst_60 [1] : vector<8x8xf32> to vector<8xf32>
    %182 = vector.shape_cast %181 : vector<8xf32> to vector<8x1xf32>
    %183 = tpu.reciprocal %182 : vector<8x1xf32> -> vector<8x1xf32>
    %184 = vector.broadcast %183 : vector<8x1xf32> to vector<8x8xf32>
    %185 = arith.mulf %180, %184 : vector<8x8xf32>
    %cst_61 = arith.constant dense<0.000000e+00> : vector<8x4xf32>
    %186 = tpu.matmul %185, %174, %cst_61 {dimension_numbers = #tpu.dot_dimension_numbers<[1], [0], [0], [1], [0, 0, 1, 1], [], []>} : vector<8x8xf32>, vector<8x4xf32>, vector<8x4xf32> -> vector<8x4xf32>
    %c8_62 = arith.constant 8 : index
    %c4_63 = arith.constant 4 : index
    %187 = vector.load %arg8[%c8_62, %c4_63] : memref<16x32xf32, #tpu.memory_space<vmem>>, vector<8x4xf32>
    tpu.vector_store %arg8[%c8_62, %c4_63], %186 {strides = array<i32>} : memref<16x32xf32, #tpu.memory_space<vmem>>, vector<8x4xf32>,
    %188 = arith.addf %171, %185 : vector<8x8xf32>
    %189 = vector.extract_strided_slice %151 {offsets = [0, 8], sizes = [8, 4], strides = [1, 1]} : vector<8x32xf32> to vector<8x4xf32>
    %190 = vector.extract_strided_slice %152 {offsets = [0, 8], sizes = [8, 4], strides = [1, 1]} : vector<8x32xf32> to vector<8x4xf32>
    %191 = vector.extract_strided_slice %153 {offsets = [0, 8], sizes = [8, 4], strides = [1, 1]} : vector<8x32xf32> to vector<8x4xf32>
    %cst_64 = arith.constant dense<0.000000e+00> : vector<8x8xf32>
    %192 = tpu.matmul %189, %190, %cst_64 {dimension_numbers = #tpu.dot_dimension_numbers<[1], [1], [0], [0], [0, 0, 1, 0], [], []>} : vector<8x4xf32>, vector<8x4xf32>, vector<8x8xf32> -> vector<8x8xf32>
    %cst_65 = arith.constant dense<0xFF800000> : vector<8xf32>
    %193 = vector.multi_reduction <maximumf>, %192, %cst_65 [1] : vector<8x8xf32> to vector<8xf32>
    %194 = vector.shape_cast %193 : vector<8xf32> to vector<8x1xf32>
    %195 = vector.broadcast %194 : vector<8x1xf32> to vector<8x8xf32>
    %196 = arith.subf %192, %195 : vector<8x8xf32>
    %197 = math.exp %196 : vector<8x8xf32>
    %cst_66 = arith.constant dense<0.000000e+00> : vector<8xf32>
    %198 = vector.multi_reduction <add>, %197, %cst_66 [1] : vector<8x8xf32> to vector<8xf32>
    %199 = vector.shape_cast %198 : vector<8xf32> to vector<8x1xf32>
    %200 = tpu.reciprocal %199 : vector<8x1xf32> -> vector<8x1xf32>
    %201 = vector.broadcast %200 : vector<8x1xf32> to vector<8x8xf32>
    %202 = arith.mulf %197, %201 : vector<8x8xf32>
    %cst_67 = arith.constant dense<0.000000e+00> : vector<8x4xf32>
    %203 = tpu.matmul %202, %191, %cst_67 {dimension_numbers = #tpu.dot_dimension_numbers<[1], [0], [0], [1], [0, 0, 1, 1], [], []>} : vector<8x8xf32>, vector<8x4xf32>, vector<8x4xf32> -> vector<8x4xf32>
    %c8_68 = arith.constant 8 : index
    %c8_69 = arith.constant 8 : index
    %204 = vector.load %arg8[%c8_68, %c8_69] : memref<16x32xf32, #tpu.memory_space<vmem>>, vector<8x4xf32>
    tpu.vector_store %arg8[%c8_68, %c8_69], %203 {strides = array<i32>} : memref<16x32xf32, #tpu.memory_space<vmem>>, vector<8x4xf32>,
    %205 = arith.addf %188, %202 : vector<8x8xf32>
    %206 = vector.extract_strided_slice %151 {offsets = [0, 12], sizes = [8, 4], strides = [1, 1]} : vector<8x32xf32> to vector<8x4xf32>
    %207 = vector.extract_strided_slice %152 {offsets = [0, 12], sizes = [8, 4], strides = [1, 1]} : vector<8x32xf32> to vector<8x4xf32>
    %208 = vector.extract_strided_slice %153 {offsets = [0, 12], sizes = [8, 4], strides = [1, 1]} : vector<8x32xf32> to vector<8x4xf32>
    %cst_70 = arith.constant dense<0.000000e+00> : vector<8x8xf32>
    %209 = tpu.matmul %206, %207, %cst_70 {dimension_numbers = #tpu.dot_dimension_numbers<[1], [1], [0], [0], [0, 0, 1, 0], [], []>} : vector<8x4xf32>, vector<8x4xf32>, vector<8x8xf32> -> vector<8x8xf32>
    %cst_71 = arith.constant dense<0xFF800000> : vector<8xf32>
    %210 = vector.multi_reduction <maximumf>, %209, %cst_71 [1] : vector<8x8xf32> to vector<8xf32>
    %211 = vector.shape_cast %210 : vector<8xf32> to vector<8x1xf32>
    %212 = vector.broadcast %211 : vector<8x1xf32> to vector<8x8xf32>
    %213 = arith.subf %209, %212 : vector<8x8xf32>
    %214 = math.exp %213 : vector<8x8xf32>
    %cst_72 = arith.constant dense<0.000000e+00> : vector<8xf32>
    %215 = vector.multi_reduction <add>, %214, %cst_72 [1] : vector<8x8xf32> to vector<8xf32>
    %216 = vector.shape_cast %215 : vector<8xf32> to vector<8x1xf32>
    %217 = tpu.reciprocal %216 : vector<8x1xf32> -> vector<8x1xf32>
    %218 = vector.broadcast %217 : vector<8x1xf32> to vector<8x8xf32>
    %219 = arith.mulf %214, %218 : vector<8x8xf32>
    %cst_73 = arith.constant dense<0.000000e+00> : vector<8x4xf32>
    %220 = tpu.matmul %219, %208, %cst_73 {dimension_numbers = #tpu.dot_dimension_numbers<[1], [0], [0], [1], [0, 0, 1, 1], [], []>} : vector<8x8xf32>, vector<8x4xf32>, vector<8x4xf32> -> vector<8x4xf32>
    %c8_74 = arith.constant 8 : index
    %c12_75 = arith.constant 12 : index
    %221 = vector.load %arg8[%c8_74, %c12_75] : memref<16x32xf32, #tpu.memory_space<vmem>>, vector<8x4xf32>
    tpu.vector_store %arg8[%c8_74, %c12_75], %220 {strides = array<i32>} : memref<16x32xf32, #tpu.memory_space<vmem>>, vector<8x4xf32>,
    %222 = arith.addf %205, %219 : vector<8x8xf32>
    %223 = vector.extract_strided_slice %151 {offsets = [0, 16], sizes = [8, 4], strides = [1, 1]} : vector<8x32xf32> to vector<8x4xf32>
    %224 = vector.extract_strided_slice %152 {offsets = [0, 16], sizes = [8, 4], strides = [1, 1]} : vector<8x32xf32> to vector<8x4xf32>
    %225 = vector.extract_strided_slice %153 {offsets = [0, 16], sizes = [8, 4], strides = [1, 1]} : vector<8x32xf32> to vector<8x4xf32>
    %cst_76 = arith.constant dense<0.000000e+00> : vector<8x8xf32>
    %226 = tpu.matmul %223, %224, %cst_76 {dimension_numbers = #tpu.dot_dimension_numbers<[1], [1], [0], [0], [0, 0, 1, 0], [], []>} : vector<8x4xf32>, vector<8x4xf32>, vector<8x8xf32> -> vector<8x8xf32>
    %cst_77 = arith.constant dense<0xFF800000> : vector<8xf32>
    %227 = vector.multi_reduction <maximumf>, %226, %cst_77 [1] : vector<8x8xf32> to vector<8xf32>
    %228 = vector.shape_cast %227 : vector<8xf32> to vector<8x1xf32>
    %229 = vector.broadcast %228 : vector<8x1xf32> to vector<8x8xf32>
    %230 = arith.subf %226, %229 : vector<8x8xf32>
    %231 = math.exp %230 : vector<8x8xf32>
    %cst_78 = arith.constant dense<0.000000e+00> : vector<8xf32>
    %232 = vector.multi_reduction <add>, %231, %cst_78 [1] : vector<8x8xf32> to vector<8xf32>
    %233 = vector.shape_cast %232 : vector<8xf32> to vector<8x1xf32>
    %234 = tpu.reciprocal %233 : vector<8x1xf32> -> vector<8x1xf32>
    %235 = vector.broadcast %234 : vector<8x1xf32> to vector<8x8xf32>
    %236 = arith.mulf %231, %235 : vector<8x8xf32>
    %cst_79 = arith.constant dense<0.000000e+00> : vector<8x4xf32>
    %237 = tpu.matmul %236, %225, %cst_79 {dimension_numbers = #tpu.dot_dimension_numbers<[1], [0], [0], [1], [0, 0, 1, 1], [], []>} : vector<8x8xf32>, vector<8x4xf32>, vector<8x4xf32> -> vector<8x4xf32>
    %c8_80 = arith.constant 8 : index
    %c16_81 = arith.constant 16 : index
    %238 = vector.load %arg8[%c8_80, %c16_81] : memref<16x32xf32, #tpu.memory_space<vmem>>, vector<8x4xf32>
    tpu.vector_store %arg8[%c8_80, %c16_81], %237 {strides = array<i32>} : memref<16x32xf32, #tpu.memory_space<vmem>>, vector<8x4xf32>,
    %239 = arith.addf %222, %236 : vector<8x8xf32>
    %240 = vector.extract_strided_slice %151 {offsets = [0, 20], sizes = [8, 4], strides = [1, 1]} : vector<8x32xf32> to vector<8x4xf32>
    %241 = vector.extract_strided_slice %152 {offsets = [0, 20], sizes = [8, 4], strides = [1, 1]} : vector<8x32xf32> to vector<8x4xf32>
    %242 = vector.extract_strided_slice %153 {offsets = [0, 20], sizes = [8, 4], strides = [1, 1]} : vector<8x32xf32> to vector<8x4xf32>
    %cst_82 = arith.constant dense<0.000000e+00> : vector<8x8xf32>
    %243 = tpu.matmul %240, %241, %cst_82 {dimension_numbers = #tpu.dot_dimension_numbers<[1], [1], [0], [0], [0, 0, 1, 0], [], []>} : vector<8x4xf32>, vector<8x4xf32>, vector<8x8xf32> -> vector<8x8xf32>
    %cst_83 = arith.constant dense<0xFF800000> : vector<8xf32>
    %244 = vector.multi_reduction <maximumf>, %243, %cst_83 [1] : vector<8x8xf32> to vector<8xf32>
    %245 = vector.shape_cast %244 : vector<8xf32> to vector<8x1xf32>
    %246 = vector.broadcast %245 : vector<8x1xf32> to vector<8x8xf32>
    %247 = arith.subf %243, %246 : vector<8x8xf32>
    %248 = math.exp %247 : vector<8x8xf32>
    %cst_84 = arith.constant dense<0.000000e+00> : vector<8xf32>
    %249 = vector.multi_reduction <add>, %248, %cst_84 [1] : vector<8x8xf32> to vector<8xf32>
    %250 = vector.shape_cast %249 : vector<8xf32> to vector<8x1xf32>
    %251 = tpu.reciprocal %250 : vector<8x1xf32> -> vector<8x1xf32>
    %252 = vector.broadcast %251 : vector<8x1xf32> to vector<8x8xf32>
    %253 = arith.mulf %248, %252 : vector<8x8xf32>
    %cst_85 = arith.constant dense<0.000000e+00> : vector<8x4xf32>
    %254 = tpu.matmul %253, %242, %cst_85 {dimension_numbers = #tpu.dot_dimension_numbers<[1], [0], [0], [1], [0, 0, 1, 1], [], []>} : vector<8x8xf32>, vector<8x4xf32>, vector<8x4xf32> -> vector<8x4xf32>
    %c8_86 = arith.constant 8 : index
    %c20_87 = arith.constant 20 : index
    %255 = vector.load %arg8[%c8_86, %c20_87] : memref<16x32xf32, #tpu.memory_space<vmem>>, vector<8x4xf32>
    tpu.vector_store %arg8[%c8_86, %c20_87], %254 {strides = array<i32>} : memref<16x32xf32, #tpu.memory_space<vmem>>, vector<8x4xf32>,
    %256 = arith.addf %239, %253 : vector<8x8xf32>
    %257 = vector.extract_strided_slice %151 {offsets = [0, 24], sizes = [8, 4], strides = [1, 1]} : vector<8x32xf32> to vector<8x4xf32>
    %258 = vector.extract_strided_slice %152 {offsets = [0, 24], sizes = [8, 4], strides = [1, 1]} : vector<8x32xf32> to vector<8x4xf32>
    %259 = vector.extract_strided_slice %153 {offsets = [0, 24], sizes = [8, 4], strides = [1, 1]} : vector<8x32xf32> to vector<8x4xf32>
    %cst_88 = arith.constant dense<0.000000e+00> : vector<8x8xf32>
    %260 = tpu.matmul %257, %258, %cst_88 {dimension_numbers = #tpu.dot_dimension_numbers<[1], [1], [0], [0], [0, 0, 1, 0], [], []>} : vector<8x4xf32>, vector<8x4xf32>, vector<8x8xf32> -> vector<8x8xf32>
    %cst_89 = arith.constant dense<0xFF800000> : vector<8xf32>
    %261 = vector.multi_reduction <maximumf>, %260, %cst_89 [1] : vector<8x8xf32> to vector<8xf32>
    %262 = vector.shape_cast %261 : vector<8xf32> to vector<8x1xf32>
    %263 = vector.broadcast %262 : vector<8x1xf32> to vector<8x8xf32>
    %264 = arith.subf %260, %263 : vector<8x8xf32>
    %265 = math.exp %264 : vector<8x8xf32>
    %cst_90 = arith.constant dense<0.000000e+00> : vector<8xf32>
    %266 = vector.multi_reduction <add>, %265, %cst_90 [1] : vector<8x8xf32> to vector<8xf32>
    %267 = vector.shape_cast %266 : vector<8xf32> to vector<8x1xf32>
    %268 = tpu.reciprocal %267 : vector<8x1xf32> -> vector<8x1xf32>
    %269 = vector.broadcast %268 : vector<8x1xf32> to vector<8x8xf32>
    %270 = arith.mulf %265, %269 : vector<8x8xf32>
    %cst_91 = arith.constant dense<0.000000e+00> : vector<8x4xf32>
    %271 = tpu.matmul %270, %259, %cst_91 {dimension_numbers = #tpu.dot_dimension_numbers<[1], [0], [0], [1], [0, 0, 1, 1], [], []>} : vector<8x8xf32>, vector<8x4xf32>, vector<8x4xf32> -> vector<8x4xf32>
    %c8_92 = arith.constant 8 : index
    %c24_93 = arith.constant 24 : index
    %272 = vector.load %arg8[%c8_92, %c24_93] : memref<16x32xf32, #tpu.memory_space<vmem>>, vector<8x4xf32>
    tpu.vector_store %arg8[%c8_92, %c24_93], %271 {strides = array<i32>} : memref<16x32xf32, #tpu.memory_space<vmem>>, vector<8x4xf32>,
    %273 = arith.addf %256, %270 : vector<8x8xf32>
    %274 = vector.extract_strided_slice %151 {offsets = [0, 28], sizes = [8, 4], strides = [1, 1]} : vector<8x32xf32> to vector<8x4xf32>
    %275 = vector.extract_strided_slice %152 {offsets = [0, 28], sizes = [8, 4], strides = [1, 1]} : vector<8x32xf32> to vector<8x4xf32>
    %276 = vector.extract_strided_slice %153 {offsets = [0, 28], sizes = [8, 4], strides = [1, 1]} : vector<8x32xf32> to vector<8x4xf32>
    %cst_94 = arith.constant dense<0.000000e+00> : vector<8x8xf32>
    %277 = tpu.matmul %274, %275, %cst_94 {dimension_numbers = #tpu.dot_dimension_numbers<[1], [1], [0], [0], [0, 0, 1, 0], [], []>} : vector<8x4xf32>, vector<8x4xf32>, vector<8x8xf32> -> vector<8x8xf32>
    %cst_95 = arith.constant dense<0xFF800000> : vector<8xf32>
    %278 = vector.multi_reduction <maximumf>, %277, %cst_95 [1] : vector<8x8xf32> to vector<8xf32>
    %279 = vector.shape_cast %278 : vector<8xf32> to vector<8x1xf32>
    %280 = vector.broadcast %279 : vector<8x1xf32> to vector<8x8xf32>
    %281 = arith.subf %277, %280 : vector<8x8xf32>
    %282 = math.exp %281 : vector<8x8xf32>
    %cst_96 = arith.constant dense<0.000000e+00> : vector<8xf32>
    %283 = vector.multi_reduction <add>, %282, %cst_96 [1] : vector<8x8xf32> to vector<8xf32>
    %284 = vector.shape_cast %283 : vector<8xf32> to vector<8x1xf32>
    %285 = tpu.reciprocal %284 : vector<8x1xf32> -> vector<8x1xf32>
    %286 = vector.broadcast %285 : vector<8x1xf32> to vector<8x8xf32>
    %287 = arith.mulf %282, %286 : vector<8x8xf32>
    %cst_97 = arith.constant dense<0.000000e+00> : vector<8x4xf32>
    %288 = tpu.matmul %287, %276, %cst_97 {dimension_numbers = #tpu.dot_dimension_numbers<[1], [0], [0], [1], [0, 0, 1, 1], [], []>} : vector<8x8xf32>, vector<8x4xf32>, vector<8x4xf32> -> vector<8x4xf32>
    %c8_98 = arith.constant 8 : index
    %c28_99 = arith.constant 28 : index
    %289 = vector.load %arg8[%c8_98, %c28_99] : memref<16x32xf32, #tpu.memory_space<vmem>>, vector<8x4xf32>
    tpu.vector_store %arg8[%c8_98, %c28_99], %288 {strides = array<i32>} : memref<16x32xf32, #tpu.memory_space<vmem>>, vector<8x4xf32>,
    %290 = arith.addf %273, %287 : vector<8x8xf32>
    %cst_100 = arith.constant 1.250000e-01 : f32
    %291 = vector.broadcast %cst_100 : f32 to vector<8x8xf32>
    %292 = arith.mulf %290, %291 : vector<8x8xf32>
    %c1 = arith.constant 1 : index
    %c0_101 = arith.constant 0 : index
    %c0_102 = arith.constant 0 : index
    %293 = vector.load %arg7[%c1, %c0_101, %c0_102] : memref<2x8x8xf32, #tpu.memory_space<vmem>>, vector<1x8x8xf32>
    %294 = vector.shape_cast %293 : vector<1x8x8xf32> to vector<8x8xf32>
    %295 = vector.shape_cast %292 : vector<8x8xf32> to vector<1x8x8xf32>
    tpu.vector_store %arg7[%c1, %c0_101, %c0_102], %295 {strides = array<i32>} : memref<2x8x8xf32, #tpu.memory_space<vmem>>, vector<1x8x8xf32>,
    %c0_103 = arith.constant 0 : index
    %c0_104 = arith.constant 0 : index
    %296 = vector.load %arg8[%c0_103, %c0_104] : memref<16x32xf32, #tpu.memory_space<vmem>>, vector<16x32xf32>
    %c0_105 = arith.constant 0 : index
    %c0_106 = arith.constant 0 : index
    %297 = vector.load %arg4[%c0_105, %c0_106] : memref<32x32xf32, #tpu.memory_space<vmem>>, vector<32x32xf32>
    %cst_107 = arith.constant dense<0.000000e+00> : vector<16x32xf32>
    %298 = tpu.matmul %296, %297, %cst_107 {dimension_numbers = #tpu.dot_dimension_numbers<[1], [0], [0], [1], [0, 0, 1, 1], [], []>} : vector<16x32xf32>, vector<32x32xf32>, vector<16x32xf32> -> vector<16x32xf32>
    %c0_108 = arith.constant 0 : index
    %c0_109 = arith.constant 0 : index
    %299 = vector.load %arg5[%c0_108, %c0_109] : memref<1x32xf32, #tpu.memory_space<vmem>>, vector<1x32xf32>
    %300 = vector.broadcast %299 : vector<1x32xf32> to vector<16x32xf32>
    %301 = arith.addf %298, %300 : vector<16x32xf32>
    %302 = vector.extract_strided_slice %301 {offsets = [0, 0], sizes = [8, 32], strides = [1, 1]} : vector<16x32xf32> to vector<8x32xf32>
    %c0_110 = arith.constant 0 : index
    %c0_111 = arith.constant 0 : index
    %c0_112 = arith.constant 0 : index
    %303 = vector.load %arg6[%c0_110, %c0_111, %c0_112] : memref<8x2x32xf32, #tpu.memory_space<vmem>>, vector<8x1x32xf32>
    %304 = vector.shape_cast %303 : vector<8x1x32xf32> to vector<8x32xf32>
    %305 = vector.shape_cast %302 : vector<8x32xf32> to vector<8x1x32xf32>
    tpu.vector_store %arg6[%c0_110, %c0_111, %c0_112], %305 {strides = array<i32>} : memref<8x2x32xf32, #tpu.memory_space<vmem>>, vector<8x1x32xf32>,
    %306 = vector.extract_strided_slice %301 {offsets = [8, 0], sizes = [8, 32], strides = [1, 1]} : vector<16x32xf32> to vector<8x32xf32>
    %c0_113 = arith.constant 0 : index
    %c1_114 = arith.constant 1 : index
    %c0_115 = arith.constant 0 : index
    %307 = vector.load %arg6[%c0_113, %c1_114, %c0_115] : memref<8x2x32xf32, #tpu.memory_space<vmem>>, vector<8x1x32xf32>
    %308 = vector.shape_cast %307 : vector<8x1x32xf32> to vector<8x32xf32>
    %309 = vector.shape_cast %306 : vector<8x32xf32> to vector<8x1x32xf32>
    tpu.vector_store %arg6[%c0_113, %c1_114, %c0_115], %309 {strides = array<i32>} : memref<8x2x32xf32, #tpu.memory_space<vmem>>, vector<8x1x32xf32>,
    return
  }
  func.func @transform_0(%arg0: i32) -> (i32, i32) {
    %c0_i32 = arith.constant 0 : i32
    %c0_i32_0 = arith.constant 0 : i32
    %c0_i32_1 = arith.constant 0 : i32
    return %c0_i32, %c0_i32_0 : i32, i32
  }
  func.func @transform_1(%arg0: i32) -> (i32, i32) {
    %c0_i32 = arith.constant 0 : i32
    %c0_i32_0 = arith.constant 0 : i32
    %c0_i32_1 = arith.constant 0 : i32
    return %c0_i32, %c0_i32_0 : i32, i32
  }
  func.func @transform_2(%arg0: i32) -> (i32, i32) {
    %c0_i32 = arith.constant 0 : i32
    %c0_i32_0 = arith.constant 0 : i32
    %c0_i32_1 = arith.constant 0 : i32
    return %c0_i32, %c0_i32_0 : i32, i32
  }
  func.func @transform_3(%arg0: i32) -> (i32, i32) {
    %c0_i32 = arith.constant 0 : i32
    %c0_i32_0 = arith.constant 0 : i32
    %c0_i32_1 = arith.constant 0 : i32
    return %c0_i32, %c0_i32_0 : i32, i32
  }
  func.func @transform_4(%arg0: i32) -> (i32, i32) {
    %c0_i32 = arith.constant 0 : i32
    %c0_i32_0 = arith.constant 0 : i32
    %c0_i32_1 = arith.constant 0 : i32
    return %c0_i32, %c0_i32_0 : i32, i32
  }
  func.func @transform_5(%arg0: i32) -> (i32, i32, i32) {
    %c0_i32 = arith.constant 0 : i32
    %c0_i32_0 = arith.constant 0 : i32
    %c0_i32_1 = arith.constant 0 : i32
    %c0_i32_2 = arith.constant 0 : i32
    return %c0_i32, %c0_i32_0, %c0_i32_1 : i32, i32, i32
  }
  func.func @transform_6(%arg0: i32) -> (i32, i32, i32) {
    %c0_i32 = arith.constant 0 : i32
    %c0_i32_0 = arith.constant 0 : i32
    %c0_i32_1 = arith.constant 0 : i32
    %c0_i32_2 = arith.constant 0 : i32
    return %c0_i32, %c0_i32_0, %c0_i32_1 : i32, i32, i32
  }
}

</mosaic_0001>

<llo_original>
// kernel: tpu_custom_call.1
$region0: #{tpu_custom_call.1}
  #allocation0 [shape = 'u32[]', space=smem, size = 0x4, offset = 0x4, fixed_abs, tag = 'smem constant byte address 0x4 - core index']
  #allocation1 [shape = 'u32[144,128]{1,0:T(1,128)}', space=vmem, size = 0x12000, scoped, tag = 'internal scratch']
  #allocation2 [shape = 'f32[16,32]{1,0:T(8,128)}', space=vmem, size = 0x2000, scoped, tag = 'scratch operand']
  %s0 = inlined_call_operand.hbm [shape: f32[16,32], index: 0, kind: input, shape index: {}]
  %s1 = inlined_call_operand.hbm [shape: f32[32,96], index: 1, kind: input, shape index: {}]
  %s2 = inlined_call_operand.vmem [shape: f32[1,96], index: 2, kind: input, shape index: {}]
  %s3 = inlined_call_operand.hbm [shape: f32[32,32], index: 3, kind: input, shape index: {}]
  %s4 = inlined_call_operand.vmem [shape: f32[1,32], index: 4, kind: input, shape index: {}]
  %s5 = inlined_call_operand.hbm [shape: f32[8,2,32], index: 5, kind: output, shape index: {0}]
  %s6 = inlined_call_operand.hbm [shape: f32[2,8,8], index: 6, kind: output, shape index: {1}]
  %7 = xla_tuple %s5, %s6
  %s8 = sld [smem:[#allocation0]]
  $region50: #{tpu_custom_call.1} parent=0
    _
  %s10 = ssub.s32 1, %s8
  %s11 = scalar_select 0, %s10, %s8
  $region1: #{tpu_custom_call.1} parent=0
    #allocation3 [shape = 'u8[8192]{0}', space=vmem, size = 0x2000, scoped, tag = 'input window, operand 0, single buffered']
    #allocation4 [shape = 's32[1]{0}', space=sflag, size = 0x4, scoped, tag = 'scoped memory for tpu_custom_call.1']
    #allocation5 [shape = 's32[1]{0}', space=sflag, size = 0x4, scoped, tag = 'scoped memory for tpu_custom_call.1']
    #allocation6 [shape = 'u8[16384]{0}', space=vmem, size = 0x4000, scoped, tag = 'input window, operand 1, single buffered']
    #allocation7 [shape = 's32[1]{0}', space=sflag, size = 0x4, scoped, tag = 'scoped memory for tpu_custom_call.1']
    #allocation8 [shape = 'u8[16384]{0}', space=vmem, size = 0x4000, scoped, tag = 'input window, operand 3, single buffered']
    #allocation9 [shape = 'u8[8192]{0}', space=vmem, size = 0x2000, scoped, tag = 'output window, operand 0, single buffered']
    #allocation10 [shape = 'u8[8192]{0}', space=vmem, size = 0x2000, scoped, tag = 'output window, operand 1, single buffered']
    #allocation11 [shape = 's32[1]{0}', space=sflag, size = 0x4, scoped, tag = 'scoped memory for tpu_custom_call.1']
    %12 = vsyncpa [#allocation4], 0
    %13 = vsyncpa [#allocation7], 0
    %14 = vsyncpa [#allocation5], 0
    %15 = vsyncpa [#allocation11], 0
    // Predicated region
    $region2: #{tpu_custom_call.1} parent=1 // pred_check
      _
    $region3: #{tpu_custom_call.1} parent=1 // pred_check_branch
      %17 = sbr.rel (0) target = $region5
    $region4: #{tpu_custom_call.1} parent=1 // pred_region
      %s19 = ssub.s32 256, 256
      %20 = vsyncadd [#allocation4], %s19
      %s21 = sshll.u32 [#allocation3], 4
      %s22 = int_to_ptr.vmem [resolvable:$true] %s21
      %27 = dma.hbm_to_vmem [thread:$0]  %s0, 256, %s22, [#allocation4], 128, 128, 8
    $region5: #{tpu_custom_call.1} parent=1 // pred_fallthru
      _
    // Predicated region
    $region6: #{tpu_custom_call.1} parent=1 // pred_check
      _
    $region7: #{tpu_custom_call.1} parent=1 // pred_check_branch
      %29 = sbr.rel (0) target = $region9
    $region8: #{tpu_custom_call.1} parent=1 // pred_region
      %s31 = ssub.s32 512, 512
      %32 = vsyncadd [#allocation7], %s31
      %s33 = sshll.u32 [#allocation6], 4
      %s34 = int_to_ptr.vmem [resolvable:$true] %s33
      %39 = dma.hbm_to_vmem [thread:$0]  %s1, 512, %s34, [#allocation7], 128, 128, 8
    $region9: #{tpu_custom_call.1} parent=1 // pred_fallthru
      _
    // Predicated region
    $region10: #{tpu_custom_call.1} parent=1 // pred_check
      _
    $region11: #{tpu_custom_call.1} parent=1 // pred_check_branch
      %41 = sbr.rel (0) target = $region13
    $region12: #{tpu_custom_call.1} parent=1 // pred_region
      _
    $region13: #{tpu_custom_call.1} parent=1 // pred_fallthru
      _
    // Predicated region
    $region14: #{tpu_custom_call.1} parent=1 // pred_check
      _
    $region15: #{tpu_custom_call.1} parent=1 // pred_check_branch
      %43 = sbr.rel (0) target = $region17
    $region16: #{tpu_custom_call.1} parent=1 // pred_region
      %s45 = ssub.s32 512, 512
      %46 = vsyncadd [#allocation7], %s45
      %s47 = sshll.u32 [#allocation8], 4
      %s48 = int_to_ptr.vmem [resolvable:$true] %s47
      %53 = dma.hbm_to_vmem [thread:$0]  %s3, 512, %s48, [#allocation7], 128, 128, 8
    $region17: #{tpu_custom_call.1} parent=1 // pred_fallthru
      _
    // Predicated region
    $region18: #{tpu_custom_call.1} parent=1 // pred_check
      _
    $region19: #{tpu_custom_call.1} parent=1 // pred_check_branch
      %55 = sbr.rel (0) target = $region21
    $region20: #{tpu_custom_call.1} parent=1 // pred_region
      _
    $region21: #{tpu_custom_call.1} parent=1 // pred_fallthru
      _
    // Predicated region
    $region22: #{tpu_custom_call.1} parent=1 // pred_check
      _
    $region23: #{tpu_custom_call.1} parent=1 // pred_check_branch
      %57 = sbr.rel (0) target = $region25
    $region24: #{tpu_custom_call.1} parent=1 // pred_region
      %58 = dma.done [#allocation4], 256
    $region25: #{tpu_custom_call.1} parent=1 // pred_fallthru
      _
    // Predicated region
    $region26: #{tpu_custom_call.1} parent=1 // pred_check
      _
    $region27: #{tpu_custom_call.1} parent=1 // pred_check_branch
      %60 = sbr.rel (0) target = $region29
    $region28: #{tpu_custom_call.1} parent=1 // pred_region
      %61 = dma.done [#allocation7], 512
    $region29: #{tpu_custom_call.1} parent=1 // pred_fallthru
      _
    // Predicated region
    $region30: #{tpu_custom_call.1} parent=1 // pred_check
      _
    $region31: #{tpu_custom_call.1} parent=1 // pred_check_branch
      %63 = sbr.rel (0) target = $region33
    $region32: #{tpu_custom_call.1} parent=1 // pred_region
      %64 = dma.done [#allocation7], 512
    $region33: #{tpu_custom_call.1} parent=1 // pred_fallthru
      _
    %v65 = vld [vmem:[#allocation3] sm:$0xff]
    %v66 = vld [vmem:[#allocation3 + $0x8] sm:$0xff]
    %v67 = vld [vmem:[#allocation6] sm:$0xff]
    %v68 = vld [vmem:[#allocation6 + $0x8] sm:$0xff]
    %v69 = vld [vmem:[#allocation6 + $0x10] sm:$0xff]
    %v70 = vld [vmem:[#allocation6 + $0x18] sm:$0xff]
    %v71 = vld [vmem:[%s2] sm:$0x1]
    %v73 = vlaneseq
    %v74 = vshrl.u32 %v73, 7
    %v75 = vsub.s32 0, %v74
    %v76 = vrot.slane %v71, %v75
    %vm78 = vcmask 261120
    %v80 = vsel %vm78, %v65, 0
    %v83 = vsel %vm78, %v66, 0
    %85 = vmatprep.subr.mxu0 0.0
    %86 = vmatpush1.msra.mxu0 0.0
    %87 = vmatprep.subr.mxu0 0.0
    %88 = vmatpush1.msra.mxu0 0.0
    %89 = vmatprep.subr.mxu0 0.0
    %90 = vmatpush1.msra.mxu0 0.0
    %91 = vmatprep.subr.mxu0 0.0
    %92 = vmatpush1.msra.mxu0 0.0
    %93 = vmatprep.subr.mxu0 0.0
    %94 = vmatpush1.msra.mxu0 0.0
    %95 = vmatprep.subr.mxu0 0.0
    %96 = vmatpush1.msra.mxu0 0.0
    %97 = vmatprep.subr.mxu0 0.0
    %98 = vmatpush1.msra.mxu0 0.0
    %99 = vmatprep.subr.mxu0 0.0
    %100 = vmatpush1.msra.mxu0 0.0
    %101 = vmatprep.subr.mxu0 0.0
    %102 = vmatpush1.msra.mxu0 0.0
    %103 = vmatprep.subr.mxu0 0.0
    %104 = vmatpush1.msra.mxu0 0.0
    %105 = vmatprep.subr.mxu0 0.0
    %106 = vmatpush1.msra.mxu0 0.0
    %107 = vmatprep.subr.mxu0 0.0
    %108 = vmatpush1.msra.mxu0 0.0
    %109 = vmatprep.subr.mxu0 0.0
    %110 = vmatpush1.msra.mxu0 %v70
    %111 = vmatprep.subr.mxu0 0.0
    %112 = vmatpush1.msra.mxu0 %v69
    %113 = vmatprep.subr.mxu0 0.0
    %114 = vmatpush1.msra.mxu0 %v68
    %115 = vmatprep.subr.mxu0 0.0
    %116 = vmatpush1.msra.mxu0 %v67
    %117 = vmatprep.subr.mxu0 0.0
    %118 = vmatpush2.msra.mxu0 0.0
    %119 = vmatprep.subr.mxu0 0.0
    %120 = vmatpush2.msra.mxu0 0.0
    %121 = vmatprep.subr.mxu0 0.0
    %122 = vmatpush2.msra.mxu0 0.0
    %123 = vmatprep.subr.mxu0 0.0
    %124 = vmatpush2.msra.mxu0 0.0
    %125 = vmatprep.subr.mxu0 0.0
    %126 = vmatpush2.msra.mxu0 0.0
    %127 = vmatprep.subr.mxu0 0.0
    %128 = vmatpush2.msra.mxu0 0.0
    %129 = vmatprep.subr.mxu0 0.0
    %130 = vmatpush2.msra.mxu0 0.0
    %131 = vmatprep.subr.mxu0 0.0
    %132 = vmatpush2.msra.mxu0 0.0
    %133 = vmatprep.subr.mxu0 0.0
    %134 = vmatpush2.msra.mxu0 0.0
    %135 = vmatprep.subr.mxu0 0.0
    %136 = vmatpush2.msra.mxu0 0.0
    %137 = vmatprep.subr.mxu0 0.0
    %138 = vmatpush2.msra.mxu0 0.0
    %139 = vmatprep.subr.mxu0 0.0
    %140 = vmatpush2.msra.mxu0 0.0
    %141 = vmatprep.subr.mxu0 0.0
    %142 = vmatpush2.msra.mxu0 0.0
    %143 = vmatprep.subr.mxu0 0.0
    %144 = vmatpush2.msra.mxu0 0.0
    %145 = vmatprep.subr.mxu0 0.0
    %146 = vmatpush2.msra.mxu0 0.0
    %147 = vmatprep.subr.mxu0 0.0
    %148 = vmatpush2.msra.mxu0 0.0
    %149 = vmatprep.mubr.f32.mxu0 0.0
    %150 = vmatmul.mubr.f32.gmra.mxu0 %v80
    %v151 = vpop.f32.mrf.mxu0
    %v152 = vadd.f32 %v76, %v151
    %v153 = vpop.f32.mrf.mxu0
    %154 = vmatprep.mubr.f32.mxu0 0.0
    %155 = vmatmul.mubr.f32.gmra.mxu0 %v83
    %v156 = vpop.f32.mrf.mxu0
    %v157 = vadd.f32 %v76, %v156
    %v158 = vpop.f32.mrf.mxu0
    %159 = vdwg.mxu0
    %161 = vrot.lane.b32.xlu0 %v152, 96
    %v162 = vpop.permute.xlu0 %161
    %vm163 = vcmask 31744
    %v164 = vsel %vm163, %v152, 0
    %v166 = vsel %vm163, %v162, 0
    %168 = vmatprep.subr.mxu0 0.0
    %169 = vmatpush1.xpose.msra.mxu0 0.0
    %170 = vmatprep.subr.mxu0 0.0
    %171 = vmatpush1.xpose.msra.mxu0 0.0
    %172 = vmatprep.subr.mxu0 0.0
    %173 = vmatpush1.xpose.msra.mxu0 0.0
    %174 = vmatprep.subr.mxu0 0.0
    %175 = vmatpush1.xpose.msra.mxu0 0.0
    %176 = vmatprep.subr.mxu0 0.0
    %177 = vmatpush1.xpose.msra.mxu0 0.0
    %178 = vmatprep.subr.mxu0 0.0
    %179 = vmatpush1.xpose.msra.mxu0 0.0
    %180 = vmatprep.subr.mxu0 0.0
    %181 = vmatpush1.xpose.msra.mxu0 0.0
    %182 = vmatprep.subr.mxu0 0.0
    %183 = vmatpush1.xpose.msra.mxu0 0.0
    %184 = vmatprep.subr.mxu0 0.0
    %185 = vmatpush1.xpose.msra.mxu0 0.0
    %186 = vmatprep.subr.mxu0 0.0
    %187 = vmatpush1.xpose.msra.mxu0 0.0
    %188 = vmatprep.subr.mxu0 0.0
    %189 = vmatpush1.xpose.msra.mxu0 0.0
    %190 = vmatprep.subr.mxu0 0.0
    %191 = vmatpush1.xpose.msra.mxu0 0.0
    %192 = vmatprep.subr.mxu0 0.0
    %193 = vmatpush1.xpose.msra.mxu0 0.0
    %194 = vmatprep.subr.mxu0 0.0
    %195 = vmatpush1.xpose.msra.mxu0 0.0
    %196 = vmatprep.subr.mxu0 0.0
    %197 = vmatpush1.xpose.msra.mxu0 0.0
    %198 = vmatprep.subr.mxu0 0.0
    %199 = vmatpush1.xpose.msra.mxu0 %v166
    %200 = vmatprep.subr.mxu0 0.0
    %201 = vmatpush2.xpose.msra.mxu0 0.0
    %202 = vmatprep.subr.mxu0 0.0
    %203 = vmatpush2.xpose.msra.mxu0 0.0
    %204 = vmatprep.subr.mxu0 0.0
    %205 = vmatpush2.xpose.msra.mxu0 0.0
    %206 = vmatprep.subr.mxu0 0.0
    %207 = vmatpush2.xpose.msra.mxu0 0.0
    %208 = vmatprep.subr.mxu0 0.0
    %209 = vmatpush2.xpose.msra.mxu0 0.0
    %210 = vmatprep.subr.mxu0 0.0
    %211 = vmatpush2.xpose.msra.mxu0 0.0
    %212 = vmatprep.subr.mxu0 0.0
    %213 = vmatpush2.xpose.msra.mxu0 0.0
    %214 = vmatprep.subr.mxu0 0.0
    %215 = vmatpush2.xpose.msra.mxu0 0.0
    %216 = vmatprep.subr.mxu0 0.0
    %217 = vmatpush2.xpose.msra.mxu0 0.0
    %218 = vmatprep.subr.mxu0 0.0
    %219 = vmatpush2.xpose.msra.mxu0 0.0
    %220 = vmatprep.subr.mxu0 0.0
    %221 = vmatpush2.xpose.msra.mxu0 0.0
    %222 = vmatprep.subr.mxu0 0.0
    %223 = vmatpush2.xpose.msra.mxu0 0.0
    %224 = vmatprep.subr.mxu0 0.0
    %225 = vmatpush2.xpose.msra.mxu0 0.0
    %226 = vmatprep.subr.mxu0 0.0
    %227 = vmatpush2.xpose.msra.mxu0 0.0
    %228 = vmatprep.subr.mxu0 0.0
    %229 = vmatpush2.xpose.msra.mxu0 0.0
    %230 = vmatprep.subr.mxu0 0.0
    %231 = vmatpush2.xpose.msra.mxu0 0.0
    %232 = vmatprep.mubr.f32.mxu0 0.0
    %233 = vmatmul.mubr.f32.gmra.mxu0 %v164
    %v234 = vpop.f32.mrf.mxu0
    %v235 = vadd.f32 0.0, %v234
    %v236 = vpop.f32.mrf.mxu0
    %237 = vdwg.mxu0
    %vm238 = vcmask 64512
    %v239 = vsel %vm238, %v235, -inf
    %240 = vmax.xlane.f32.xlu0 %v239
    %v241 = vpop.xlane.xlu0 %240
    %v242 = vsub.f32 %v235, %v241
    %v243 = vmul.f32 %v242, 1.442695
    %v244 = vpow.pop %v243
    %v245 = vsel %vm238, %v244, 0.0
    %246 = vadd.xlane.f32.xlu0 %v245
    %v247 = vpop.xlane.xlu0 %246
    %v248 = vrcp.pop %v247
    %v249 = vmul.f32 %v244, %v248
    %250 = vrot.lane.b32.xlu0 %v152, 64
    %v251 = vpop.permute.xlu0 %250
    %v254 = vsel %vm238, %v249, 0
    %256 = vmatprep.subr.mxu0 0.0
    %257 = vmatpush1.msra.mxu0 0.0
    %258 = vmatprep.subr.mxu0 0.0
    %259 = vmatpush1.msra.mxu0 0.0
    %260 = vmatprep.subr.mxu0 0.0
    %261 = vmatpush1.msra.mxu0 0.0
    %262 = vmatprep.subr.mxu0 0.0
    %263 = vmatpush1.msra.mxu0 0.0
    %264 = vmatprep.subr.mxu0 0.0
    %265 = vmatpush1.msra.mxu0 0.0
    %266 = vmatprep.subr.mxu0 0.0
    %267 = vmatpush1.msra.mxu0 0.0
    %268 = vmatprep.subr.mxu0 0.0
    %269 = vmatpush1.msra.mxu0 0.0
    %270 = vmatprep.subr.mxu0 0.0
    %271 = vmatpush1.msra.mxu0 0.0
    %272 = vmatprep.subr.mxu0 0.0
    %273 = vmatpush1.msra.mxu0 0.0
    %274 = vmatprep.subr.mxu0 0.0
    %275 = vmatpush1.msra.mxu0 0.0
    %276 = vmatprep.subr.mxu0 0.0
    %277 = vmatpush1.msra.mxu0 0.0
    %278 = vmatprep.subr.mxu0 0.0
    %279 = vmatpush1.msra.mxu0 0.0
    %280 = vmatprep.subr.mxu0 0.0
    %281 = vmatpush1.msra.mxu0 0.0
    %282 = vmatprep.subr.mxu0 0.0
    %283 = vmatpush1.msra.mxu0 0.0
    %284 = vmatprep.subr.mxu0 0.0
    %285 = vmatpush1.msra.mxu0 0.0
    %286 = vmatprep.subr.mxu0 0.0
    %287 = vmatpush1.msra.mxu0 %v251
    %288 = vmatprep.subr.mxu0 0.0
    %289 = vmatpush2.msra.mxu0 0.0
    %290 = vmatprep.subr.mxu0 0.0
    %291 = vmatpush2.msra.mxu0 0.0
    %292 = vmatprep.subr.mxu0 0.0
    %293 = vmatpush2.msra.mxu0 0.0
    %294 = vmatprep.subr.mxu0 0.0
    %295 = vmatpush2.msra.mxu0 0.0
    %296 = vmatprep.subr.mxu0 0.0
    %297 = vmatpush2.msra.mxu0 0.0
    %298 = vmatprep.subr.mxu0 0.0
    %299 = vmatpush2.msra.mxu0 0.0
    %300 = vmatprep.subr.mxu0 0.0
    %301 = vmatpush2.msra.mxu0 0.0
    %302 = vmatprep.subr.mxu0 0.0
    %303 = vmatpush2.msra.mxu0 0.0
    %304 = vmatprep.subr.mxu0 0.0
    %305 = vmatpush2.msra.mxu0 0.0
    %306 = vmatprep.subr.mxu0 0.0
    %307 = vmatpush2.msra.mxu0 0.0
    %308 = vmatprep.subr.mxu0 0.0
    %309 = vmatpush2.msra.mxu0 0.0
    %310 = vmatprep.subr.mxu0 0.0
    %311 = vmatpush2.msra.mxu0 0.0
    %312 = vmatprep.subr.mxu0 0.0
    %313 = vmatpush2.msra.mxu0 0.0
    %314 = vmatprep.subr.mxu0 0.0
    %315 = vmatpush2.msra.mxu0 0.0
    %316 = vmatprep.subr.mxu0 0.0
    %317 = vmatpush2.msra.mxu0 0.0
    %318 = vmatprep.subr.mxu0 0.0
    %319 = vmatpush2.msra.mxu0 0.0
    %320 = vmatprep.mubr.f32.mxu0 0.0
    %321 = vmatmul.mubr.f32.gmra.mxu0 %v254
    %v322 = vpop.f32.mrf.mxu0
    %v323 = vadd.f32 0.0, %v322
    %v324 = vpop.f32.mrf.mxu0
    %325 = vdwg.mxu0
    %326 = vst.msk [vmem:[#allocation2] sm:$0xff] %vm163, %v323
    %v327 = vadd.f32 %v249, 0.0
    %328 = vrot.lane.b32.xlu0 %v152, 124
    %v329 = vpop.permute.xlu0 %328
    %330 = vrot.lane.b32.xlu0 %v152, 92
    %v331 = vpop.permute.xlu0 %330
    %v332 = vsel %vm163, %v329, 0
    %v334 = vsel %vm163, %v331, 0
    %336 = vmatprep.subr.mxu0 0.0
    %337 = vmatpush1.xpose.msra.mxu0 0.0
    %338 = vmatprep.subr.mxu0 0.0
    %339 = vmatpush1.xpose.msra.mxu0 0.0
    %340 = vmatprep.subr.mxu0 0.0
    %341 = vmatpush1.xpose.msra.mxu0 0.0
    %342 = vmatprep.subr.mxu0 0.0
    %343 = vmatpush1.xpose.msra.mxu0 0.0
    %344 = vmatprep.subr.mxu0 0.0
    %345 = vmatpush1.xpose.msra.mxu0 0.0
    %346 = vmatprep.subr.mxu0 0.0
    %347 = vmatpush1.xpose.msra.mxu0 0.0
    %348 = vmatprep.subr.mxu0 0.0
    %349 = vmatpush1.xpose.msra.mxu0 0.0
    %350 = vmatprep.subr.mxu0 0.0
    %351 = vmatpush1.xpose.msra.mxu0 0.0
    %352 = vmatprep.subr.mxu0 0.0
    %353 = vmatpush1.xpose.msra.mxu0 0.0
    %354 = vmatprep.subr.mxu0 0.0
    %355 = vmatpush1.xpose.msra.mxu0 0.0
    %356 = vmatprep.subr.mxu0 0.0
    %357 = vmatpush1.xpose.msra.mxu0 0.0
    %358 = vmatprep.subr.mxu0 0.0
    %359 = vmatpush1.xpose.msra.mxu0 0.0
    %360 = vmatprep.subr.mxu0 0.0
    %361 = vmatpush1.xpose.msra.mxu0 0.0
    %362 = vmatprep.subr.mxu0 0.0
    %363 = vmatpush1.xpose.msra.mxu0 0.0
    %364 = vmatprep.subr.mxu0 0.0
    %365 = vmatpush1.xpose.msra.mxu0 0.0
    %366 = vmatprep.subr.mxu0 0.0
    %367 = vmatpush1.xpose.msra.mxu0 %v334
    %368 = vmatprep.subr.mxu0 0.0
    %369 = vmatpush2.xpose.msra.mxu0 0.0
    %370 = vmatprep.subr.mxu0 0.0
    %371 = vmatpush2.xpose.msra.mxu0 0.0
    %372 = vmatprep.subr.mxu0 0.0
    %373 = vmatpush2.xpose.msra.mxu0 0.0
    %374 = vmatprep.subr.mxu0 0.0
    %375 = vmatpush2.xpose.msra.mxu0 0.0
    %376 = vmatprep.subr.mxu0 0.0
    %377 = vmatpush2.xpose.msra.mxu0 0.0
    %378 = vmatprep.subr.mxu0 0.0
    %379 = vmatpush2.xpose.msra.mxu0 0.0
    %380 = vmatprep.subr.mxu0 0.0
    %381 = vmatpush2.xpose.msra.mxu0 0.0
    %382 = vmatprep.subr.mxu0 0.0
    %383 = vmatpush2.xpose.msra.mxu0 0.0
    %384 = vmatprep.subr.mxu0 0.0
    %385 = vmatpush2.xpose.msra.mxu0 0.0
    %386 = vmatprep.subr.mxu0 0.0
    %387 = vmatpush2.xpose.msra.mxu0 0.0
    %388 = vmatprep.subr.mxu0 0.0
    %389 = vmatpush2.xpose.msra.mxu0 0.0
    %390 = vmatprep.subr.mxu0 0.0
    %391 = vmatpush2.xpose.msra.mxu0 0.0
    %392 = vmatprep.subr.mxu0 0.0
    %393 = vmatpush2.xpose.msra.mxu0 0.0
    %394 = vmatprep.subr.mxu0 0.0
    %395 = vmatpush2.xpose.msra.mxu0 0.0
    %396 = vmatprep.subr.mxu0 0.0
    %397 = vmatpush2.xpose.msra.mxu0 0.0
    %398 = vmatprep.subr.mxu0 0.0
    %399 = vmatpush2.xpose.msra.mxu0 0.0
    %400 = vmatprep.mubr.f32.mxu0 0.0
    %401 = vmatmul.mubr.f32.gmra.mxu0 %v332
    %v402 = vpop.f32.mrf.mxu0
    %v403 = vadd.f32 0.0, %v402
    %v404 = vpop.f32.mrf.mxu0
    %405 = vdwg.mxu0
    %v406 = vsel %vm238, %v403, -inf
    %407 = vmax.xlane.f32.xlu0 %v406
    %v408 = vpop.xlane.xlu0 %407
    %v409 = vsub.f32 %v403, %v408
    %v410 = vmul.f32 %v409, 1.442695
    %v411 = vpow.pop %v410
    %v412 = vsel %vm238, %v411, 0.0
    %413 = vadd.xlane.f32.xlu0 %v412
    %v414 = vpop.xlane.xlu0 %413
    %v415 = vrcp.pop %v414
    %v416 = vmul.f32 %v411, %v415
    %417 = vrot.lane.b32.xlu0 %v152, 60
    %v418 = vpop.permute.xlu0 %417
    %v421 = vsel %vm238, %v416, 0
    %423 = vmatprep.subr.mxu0 0.0
    %424 = vmatpush1.msra.mxu0 0.0
    %425 = vmatprep.subr.mxu0 0.0
    %426 = vmatpush1.msra.mxu0 0.0
    %427 = vmatprep.subr.mxu0 0.0
    %428 = vmatpush1.msra.mxu0 0.0
    %429 = vmatprep.subr.mxu0 0.0
    %430 = vmatpush1.msra.mxu0 0.0
    %431 = vmatprep.subr.mxu0 0.0
    %432 = vmatpush1.msra.mxu0 0.0
    %433 = vmatprep.subr.mxu0 0.0
    %434 = vmatpush1.msra.mxu0 0.0
    %435 = vmatprep.subr.mxu0 0.0
    %436 = vmatpush1.msra.mxu0 0.0
    %437 = vmatprep.subr.mxu0 0.0
    %438 = vmatpush1.msra.mxu0 0.0
    %439 = vmatprep.subr.mxu0 0.0
    %440 = vmatpush1.msra.mxu0 0.0
    %441 = vmatprep.subr.mxu0 0.0
    %442 = vmatpush1.msra.mxu0 0.0
    %443 = vmatprep.subr.mxu0 0.0
    %444 = vmatpush1.msra.mxu0 0.0
    %445 = vmatprep.subr.mxu0 0.0
    %446 = vmatpush1.msra.mxu0 0.0
    %447 = vmatprep.subr.mxu0 0.0
    %448 = vmatpush1.msra.mxu0 0.0
    %449 = vmatprep.subr.mxu0 0.0
    %450 = vmatpush1.msra.mxu0 0.0
    %451 = vmatprep.subr.mxu0 0.0
    %452 = vmatpush1.msra.mxu0 0.0
    %453 = vmatprep.subr.mxu0 0.0
    %454 = vmatpush1.msra.mxu0 %v418
    %455 = vmatprep.subr.mxu0 0.0
    %456 = vmatpush2.msra.mxu0 0.0
    %457 = vmatprep.subr.mxu0 0.0
    %458 = vmatpush2.msra.mxu0 0.0
    %459 = vmatprep.subr.mxu0 0.0
    %460 = vmatpush2.msra.mxu0 0.0
    %461 = vmatprep.subr.mxu0 0.0
    %462 = vmatpush2.msra.mxu0 0.0
    %463 = vmatprep.subr.mxu0 0.0
    %464 = vmatpush2.msra.mxu0 0.0
    %465 = vmatprep.subr.mxu0 0.0
    %466 = vmatpush2.msra.mxu0 0.0
    %467 = vmatprep.subr.mxu0 0.0
    %468 = vmatpush2.msra.mxu0 0.0
    %469 = vmatprep.subr.mxu0 0.0
    %470 = vmatpush2.msra.mxu0 0.0
    %471 = vmatprep.subr.mxu0 0.0
    %472 = vmatpush2.msra.mxu0 0.0
    %473 = vmatprep.subr.mxu0 0.0
    %474 = vmatpush2.msra.mxu0 0.0
    %475 = vmatprep.subr.mxu0 0.0
    %476 = vmatpush2.msra.mxu0 0.0
    %477 = vmatprep.subr.mxu0 0.0
    %478 = vmatpush2.msra.mxu0 0.0
    %479 = vmatprep.subr.mxu0 0.0
    %480 = vmatpush2.msra.mxu0 0.0
    %481 = vmatprep.subr.mxu0 0.0
    %482 = vmatpush2.msra.mxu0 0.0
    %483 = vmatprep.subr.mxu0 0.0
    %484 = vmatpush2.msra.mxu0 0.0
    %485 = vmatprep.subr.mxu0 0.0
    %486 = vmatpush2.msra.mxu0 0.0
    %487 = vmatprep.mubr.f32.mxu0 0.0
    %488 = vmatmul.mubr.f32.gmra.mxu0 %v421
    %v489 = vpop.f32.mrf.mxu0
    %v490 = vadd.f32 0.0, %v489
    %v491 = vpop.f32.mrf.mxu0
    %492 = vdwg.mxu0
    %494 = vrot.lane.b32.xlu0 %v490, 4
    %v495 = vpop.permute.xlu0 %494
    %vm497 = vcmask 64544
    %498 = vst.msk [vmem:[#allocation2] sm:$0xff] %vm497, %v495
    %v499 = vadd.f32 %v327, %v416
    %500 = vrot.lane.b32.xlu0 %v152, 120
    %v501 = vpop.permute.xlu0 %500
    %502 = vrot.lane.b32.xlu0 %v152, 88
    %v503 = vpop.permute.xlu0 %502
    %v504 = vsel %vm163, %v501, 0
    %v506 = vsel %vm163, %v503, 0
    %508 = vmatprep.subr.mxu0 0.0
    %509 = vmatpush1.xpose.msra.mxu0 0.0
    %510 = vmatprep.subr.mxu0 0.0
    %511 = vmatpush1.xpose.msra.mxu0 0.0
    %512 = vmatprep.subr.mxu0 0.0
    %513 = vmatpush1.xpose.msra.mxu0 0.0
    %514 = vmatprep.subr.mxu0 0.0
    %515 = vmatpush1.xpose.msra.mxu0 0.0
    %516 = vmatprep.subr.mxu0 0.0
    %517 = vmatpush1.xpose.msra.mxu0 0.0
    %518 = vmatprep.subr.mxu0 0.0
    %519 = vmatpush1.xpose.msra.mxu0 0.0
    %520 = vmatprep.subr.mxu0 0.0
    %521 = vmatpush1.xpose.msra.mxu0 0.0
    %522 = vmatprep.subr.mxu0 0.0
    %523 = vmatpush1.xpose.msra.mxu0 0.0
    %524 = vmatprep.subr.mxu0 0.0
    %525 = vmatpush1.xpose.msra.mxu0 0.0
    %526 = vmatprep.subr.mxu0 0.0
    %527 = vmatpush1.xpose.msra.mxu0 0.0
    %528 = vmatprep.subr.mxu0 0.0
    %529 = vmatpush1.xpose.msra.mxu0 0.0
    %530 = vmatprep.subr.mxu0 0.0
    %531 = vmatpush1.xpose.msra.mxu0 0.0
    %532 = vmatprep.subr.mxu0 0.0
    %533 = vmatpush1.xpose.msra.mxu0 0.0
    %534 = vmatprep.subr.mxu0 0.0
    %535 = vmatpush1.xpose.msra.mxu0 0.0
    %536 = vmatprep.subr.mxu0 0.0
    %537 = vmatpush1.xpose.msra.mxu0 0.0
    %538 = vmatprep.subr.mxu0 0.0
    %539 = vmatpush1.xpose.msra.mxu0 %v506
    %540 = vmatprep.subr.mxu0 0.0
    %541 = vmatpush2.xpose.msra.mxu0 0.0
    %542 = vmatprep.subr.mxu0 0.0
    %543 = vmatpush2.xpose.msra.mxu0 0.0
    %544 = vmatprep.subr.mxu0 0.0
    %545 = vmatpush2.xpose.msra.mxu0 0.0
    %546 = vmatprep.subr.mxu0 0.0
    %547 = vmatpush2.xpose.msra.mxu0 0.0
    %548 = vmatprep.subr.mxu0 0.0
    %549 = vmatpush2.xpose.msra.mxu0 0.0
    %550 = vmatprep.subr.mxu0 0.0
    %551 = vmatpush2.xpose.msra.mxu0 0.0
    %552 = vmatprep.subr.mxu0 0.0
    %553 = vmatpush2.xpose.msra.mxu0 0.0
    %554 = vmatprep.subr.mxu0 0.0
    %555 = vmatpush2.xpose.msra.mxu0 0.0
    %556 = vmatprep.subr.mxu0 0.0
    %557 = vmatpush2.xpose.msra.mxu0 0.0
    %558 = vmatprep.subr.mxu0 0.0
    %559 = vmatpush2.xpose.msra.mxu0 0.0
    %560 = vmatprep.subr.mxu0 0.0
    %561 = vmatpush2.xpose.msra.mxu0 0.0
    %562 = vmatprep.subr.mxu0 0.0
    %563 = vmatpush2.xpose.msra.mxu0 0.0
    %564 = vmatprep.subr.mxu0 0.0
    %565 = vmatpush2.xpose.msra.mxu0 0.0
    %566 = vmatprep.subr.mxu0 0.0
    %567 = vmatpush2.xpose.msra.mxu0 0.0
    %568 = vmatprep.subr.mxu0 0.0
    %569 = vmatpush2.xpose.msra.mxu0 0.0
    %570 = vmatprep.subr.mxu0 0.0
    %571 = vmatpush2.xpose.msra.mxu0 0.0
    %572 = vmatprep.mubr.f32.mxu0 0.0
    %573 = vmatmul.mubr.f32.gmra.mxu0 %v504
    %v574 = vpop.f32.mrf.mxu0
    %v575 = vadd.f32 0.0, %v574
    %v576 = vpop.f32.mrf.mxu0
    %577 = vdwg.mxu0
    %v578 = vsel %vm238, %v575, -inf
    %579 = vmax.xlane.f32.xlu0 %v578
    %v580 = vpop.xlane.xlu0 %579
    %v581 = vsub.f32 %v575, %v580
    %v582 = vmul.f32 %v581, 1.442695
    %v583 = vpow.pop %v582
    %v584 = vsel %vm238, %v583, 0.0
    %585 = vadd.xlane.f32.xlu0 %v584
    %v586 = vpop.xlane.xlu0 %585
    %v587 = vrcp.pop %v586
    %v588 = vmul.f32 %v583, %v587
    %589 = vrot.lane.b32.xlu0 %v152, 56
    %v590 = vpop.permute.xlu0 %589
    %v593 = vsel %vm238, %v588, 0
    %595 = vmatprep.subr.mxu0 0.0
    %596 = vmatpush1.msra.mxu0 0.0
    %597 = vmatprep.subr.mxu0 0.0
    %598 = vmatpush1.msra.mxu0 0.0
    %599 = vmatprep.subr.mxu0 0.0
    %600 = vmatpush1.msra.mxu0 0.0
    %601 = vmatprep.subr.mxu0 0.0
    %602 = vmatpush1.msra.mxu0 0.0
    %603 = vmatprep.subr.mxu0 0.0
    %604 = vmatpush1.msra.mxu0 0.0
    %605 = vmatprep.subr.mxu0 0.0
    %606 = vmatpush1.msra.mxu0 0.0
    %607 = vmatprep.subr.mxu0 0.0
    %608 = vmatpush1.msra.mxu0 0.0
    %609 = vmatprep.subr.mxu0 0.0
    %610 = vmatpush1.msra.mxu0 0.0
    %611 = vmatprep.subr.mxu0 0.0
    %612 = vmatpush1.msra.mxu0 0.0
    %613 = vmatprep.subr.mxu0 0.0
    %614 = vmatpush1.msra.mxu0 0.0
    %615 = vmatprep.subr.mxu0 0.0
    %616 = vmatpush1.msra.mxu0 0.0
    %617 = vmatprep.subr.mxu0 0.0
    %618 = vmatpush1.msra.mxu0 0.0
    %619 = vmatprep.subr.mxu0 0.0
    %620 = vmatpush1.msra.mxu0 0.0
    %621 = vmatprep.subr.mxu0 0.0
    %622 = vmatpush1.msra.mxu0 0.0
    %623 = vmatprep.subr.mxu0 0.0
    %624 = vmatpush1.msra.mxu0 0.0
    %625 = vmatprep.subr.mxu0 0.0
    %626 = vmatpush1.msra.mxu0 %v590
    %627 = vmatprep.subr.mxu0 0.0
    %628 = vmatpush2.msra.mxu0 0.0
    %629 = vmatprep.subr.mxu0 0.0
    %630 = vmatpush2.msra.mxu0 0.0
    %631 = vmatprep.subr.mxu0 0.0
    %632 = vmatpush2.msra.mxu0 0.0
    %633 = vmatprep.subr.mxu0 0.0
    %634 = vmatpush2.msra.mxu0 0.0
    %635 = vmatprep.subr.mxu0 0.0
    %636 = vmatpush2.msra.mxu0 0.0
    %637 = vmatprep.subr.mxu0 0.0
    %638 = vmatpush2.msra.mxu0 0.0
    %639 = vmatprep.subr.mxu0 0.0
    %640 = vmatpush2.msra.mxu0 0.0
    %641 = vmatprep.subr.mxu0 0.0
    %642 = vmatpush2.msra.mxu0 0.0
    %643 = vmatprep.subr.mxu0 0.0
    %644 = vmatpush2.msra.mxu0 0.0
    %645 = vmatprep.subr.mxu0 0.0
    %646 = vmatpush2.msra.mxu0 0.0
    %647 = vmatprep.subr.mxu0 0.0
    %648 = vmatpush2.msra.mxu0 0.0
    %649 = vmatprep.subr.mxu0 0.0
    %650 = vmatpush2.msra.mxu0 0.0
    %651 = vmatprep.subr.mxu0 0.0
    %652 = vmatpush2.msra.mxu0 0.0
    %653 = vmatprep.subr.mxu0 0.0
    %654 = vmatpush2.msra.mxu0 0.0
    %655 = vmatprep.subr.mxu0 0.0
    %656 = vmatpush2.msra.mxu0 0.0
    %657 = vmatprep.subr.mxu0 0.0
    %658 = vmatpush2.msra.mxu0 0.0
    %659 = vmatprep.mubr.f32.mxu0 0.0
    %660 = vmatmul.mubr.f32.gmra.mxu0 %v593
    %v661 = vpop.f32.mrf.mxu0
    %v662 = vadd.f32 0.0, %v661
    %v663 = vpop.f32.mrf.mxu0
    %664 = vdwg.mxu0
    %666 = vrot.lane.b32.xlu0 %v662, 8
    %v667 = vpop.permute.xlu0 %666
    %vm669 = vcmask 97344
    %670 = vst.msk [vmem:[#allocation2] sm:$0xff] %vm669, %v667
    %v671 = vadd.f32 %v499, %v588
    %672 = vrot.lane.b32.xlu0 %v152, 116
    %v673 = vpop.permute.xlu0 %672
    %674 = vrot.lane.b32.xlu0 %v152, 84
    %v675 = vpop.permute.xlu0 %674
    %v676 = vsel %vm163, %v673, 0
    %v678 = vsel %vm163, %v675, 0
    %680 = vmatprep.subr.mxu0 0.0
    %681 = vmatpush1.xpose.msra.mxu0 0.0
    %682 = vmatprep.subr.mxu0 0.0
    %683 = vmatpush1.xpose.msra.mxu0 0.0
    %684 = vmatprep.subr.mxu0 0.0
    %685 = vmatpush1.xpose.msra.mxu0 0.0
    %686 = vmatprep.subr.mxu0 0.0
    %687 = vmatpush1.xpose.msra.mxu0 0.0
    %688 = vmatprep.subr.mxu0 0.0
    %689 = vmatpush1.xpose.msra.mxu0 0.0
    %690 = vmatprep.subr.mxu0 0.0
    %691 = vmatpush1.xpose.msra.mxu0 0.0
    %692 = vmatprep.subr.mxu0 0.0
    %693 = vmatpush1.xpose.msra.mxu0 0.0
    %694 = vmatprep.subr.mxu0 0.0
    %695 = vmatpush1.xpose.msra.mxu0 0.0
    %696 = vmatprep.subr.mxu0 0.0
    %697 = vmatpush1.xpose.msra.mxu0 0.0
    %698 = vmatprep.subr.mxu0 0.0
    %699 = vmatpush1.xpose.msra.mxu0 0.0
    %700 = vmatprep.subr.mxu0 0.0
    %701 = vmatpush1.xpose.msra.mxu0 0.0
    %702 = vmatprep.subr.mxu0 0.0
    %703 = vmatpush1.xpose.msra.mxu0 0.0
    %704 = vmatprep.subr.mxu0 0.0
    %705 = vmatpush1.xpose.msra.mxu0 0.0
    %706 = vmatprep.subr.mxu0 0.0
    %707 = vmatpush1.xpose.msra.mxu0 0.0
    %708 = vmatprep.subr.mxu0 0.0
    %709 = vmatpush1.xpose.msra.mxu0 0.0
    %710 = vmatprep.subr.mxu0 0.0
    %711 = vmatpush1.xpose.msra.mxu0 %v678
    %712 = vmatprep.subr.mxu0 0.0
    %713 = vmatpush2.xpose.msra.mxu0 0.0
    %714 = vmatprep.subr.mxu0 0.0
    %715 = vmatpush2.xpose.msra.mxu0 0.0
    %716 = vmatprep.subr.mxu0 0.0
    %717 = vmatpush2.xpose.msra.mxu0 0.0
    %718 = vmatprep.subr.mxu0 0.0
    %719 = vmatpush2.xpose.msra.mxu0 0.0
    %720 = vmatprep.subr.mxu0 0.0
    %721 = vmatpush2.xpose.msra.mxu0 0.0
    %722 = vmatprep.subr.mxu0 0.0
    %723 = vmatpush2.xpose.msra.mxu0 0.0
    %724 = vmatprep.subr.mxu0 0.0
    %725 = vmatpush2.xpose.msra.mxu0 0.0
    %726 = vmatprep.subr.mxu0 0.0
    %727 = vmatpush2.xpose.msra.mxu0 0.0
    %728 = vmatprep.subr.mxu0 0.0
    %729 = vmatpush2.xpose.msra.mxu0 0.0
    %730 = vmatprep.subr.mxu0 0.0
    %731 = vmatpush2.xpose.msra.mxu0 0.0
    %732 = vmatprep.subr.mxu0 0.0
    %733 = vmatpush2.xpose.msra.mxu0 0.0
    %734 = vmatprep.subr.mxu0 0.0
    %735 = vmatpush2.xpose.msra.mxu0 0.0
    %736 = vmatprep.subr.mxu0 0.0
    %737 = vmatpush2.xpose.msra.mxu0 0.0
    %738 = vmatprep.subr.mxu0 0.0
    %739 = vmatpush2.xpose.msra.mxu0 0.0
    %740 = vmatprep.subr.mxu0 0.0
    %741 = vmatpush2.xpose.msra.mxu0 0.0
    %742 = vmatprep.subr.mxu0 0.0
    %743 = vmatpush2.xpose.msra.mxu0 0.0
    %744 = vmatprep.mubr.f32.mxu0 0.0
    %745 = vmatmul.mubr.f32.gmra.mxu0 %v676
    %v746 = vpop.f32.mrf.mxu0
    %v747 = vadd.f32 0.0, %v746
    %v748 = vpop.f32.mrf.mxu0
    %749 = vdwg.mxu0
    %v750 = vsel %vm238, %v747, -inf
    %751 = vmax.xlane.f32.xlu0 %v750
    %v752 = vpop.xlane.xlu0 %751
    %v753 = vsub.f32 %v747, %v752
    %v754 = vmul.f32 %v753, 1.442695
    %v755 = vpow.pop %v754
    %v756 = vsel %vm238, %v755, 0.0
    %757 = vadd.xlane.f32.xlu0 %v756
    %v758 = vpop.xlane.xlu0 %757
    %v759 = vrcp.pop %v758
    %v760 = vmul.f32 %v755, %v759
    %761 = vrot.lane.b32.xlu0 %v152, 52
    %v762 = vpop.permute.xlu0 %761
    %v765 = vsel %vm238, %v760, 0
    %767 = vmatprep.subr.mxu0 0.0
    %768 = vmatpush1.msra.mxu0 0.0
    %769 = vmatprep.subr.mxu0 0.0
    %770 = vmatpush1.msra.mxu0 0.0
    %771 = vmatprep.subr.mxu0 0.0
    %772 = vmatpush1.msra.mxu0 0.0
    %773 = vmatprep.subr.mxu0 0.0
    %774 = vmatpush1.msra.mxu0 0.0
    %775 = vmatprep.subr.mxu0 0.0
    %776 = vmatpush1.msra.mxu0 0.0
    %777 = vmatprep.subr.mxu0 0.0
    %778 = vmatpush1.msra.mxu0 0.0
    %779 = vmatprep.subr.mxu0 0.0
    %780 = vmatpush1.msra.mxu0 0.0
    %781 = vmatprep.subr.mxu0 0.0
    %782 = vmatpush1.msra.mxu0 0.0
    %783 = vmatprep.subr.mxu0 0.0
    %784 = vmatpush1.msra.mxu0 0.0
    %785 = vmatprep.subr.mxu0 0.0
    %786 = vmatpush1.msra.mxu0 0.0
    %787 = vmatprep.subr.mxu0 0.0
    %788 = vmatpush1.msra.mxu0 0.0
    %789 = vmatprep.subr.mxu0 0.0
    %790 = vmatpush1.msra.mxu0 0.0
    %791 = vmatprep.subr.mxu0 0.0
    %792 = vmatpush1.msra.mxu0 0.0
    %793 = vmatprep.subr.mxu0 0.0
    %794 = vmatpush1.msra.mxu0 0.0
    %795 = vmatprep.subr.mxu0 0.0
    %796 = vmatpush1.msra.mxu0 0.0
    %797 = vmatprep.subr.mxu0 0.0
    %798 = vmatpush1.msra.mxu0 %v762
    %799 = vmatprep.subr.mxu0 0.0
    %800 = vmatpush2.msra.mxu0 0.0
    %801 = vmatprep.subr.mxu0 0.0
    %802 = vmatpush2.msra.mxu0 0.0
    %803 = vmatprep.subr.mxu0 0.0
    %804 = vmatpush2.msra.mxu0 0.0
    %805 = vmatprep.subr.mxu0 0.0
    %806 = vmatpush2.msra.mxu0 0.0
    %807 = vmatprep.subr.mxu0 0.0
    %808 = vmatpush2.msra.mxu0 0.0
    %809 = vmatprep.subr.mxu0 0.0
    %810 = vmatpush2.msra.mxu0 0.0
    %811 = vmatprep.subr.mxu0 0.0
    %812 = vmatpush2.msra.mxu0 0.0
    %813 = vmatprep.subr.mxu0 0.0
    %814 = vmatpush2.msra.mxu0 0.0
    %815 = vmatprep.subr.mxu0 0.0
    %816 = vmatpush2.msra.mxu0 0.0
    %817 = vmatprep.subr.mxu0 0.0
    %818 = vmatpush2.msra.mxu0 0.0
    %819 = vmatprep.subr.mxu0 0.0
    %820 = vmatpush2.msra.mxu0 0.0
    %821 = vmatprep.subr.mxu0 0.0
    %822 = vmatpush2.msra.mxu0 0.0
    %823 = vmatprep.subr.mxu0 0.0
    %824 = vmatpush2.msra.mxu0 0.0
    %825 = vmatprep.subr.mxu0 0.0
    %826 = vmatpush2.msra.mxu0 0.0
    %827 = vmatprep.subr.mxu0 0.0
    %828 = vmatpush2.msra.mxu0 0.0
    %829 = vmatprep.subr.mxu0 0.0
    %830 = vmatpush2.msra.mxu0 0.0
    %831 = vmatprep.mubr.f32.mxu0 0.0
    %832 = vmatmul.mubr.f32.gmra.mxu0 %v765
    %v833 = vpop.f32.mrf.mxu0
    %v834 = vadd.f32 0.0, %v833
    %v835 = vpop.f32.mrf.mxu0
    %836 = vdwg.mxu0
    %838 = vrot.lane.b32.xlu0 %v834, 12
    %v839 = vpop.permute.xlu0 %838
    %vm841 = vcmask 130144
    %842 = vst.msk [vmem:[#allocation2] sm:$0xff] %vm841, %v839
    %v843 = vadd.f32 %v671, %v760
    %844 = vrot.lane.b32.xlu0 %v152, 112
    %v845 = vpop.permute.xlu0 %844
    %846 = vrot.lane.b32.xlu0 %v152, 80
    %v847 = vpop.permute.xlu0 %846
    %v848 = vsel %vm163, %v845, 0
    %v850 = vsel %vm163, %v847, 0
    %852 = vmatprep.subr.mxu0 0.0
    %853 = vmatpush1.xpose.msra.mxu0 0.0
    %854 = vmatprep.subr.mxu0 0.0
    %855 = vmatpush1.xpose.msra.mxu0 0.0
    %856 = vmatprep.subr.mxu0 0.0
    %857 = vmatpush1.xpose.msra.mxu0 0.0
    %858 = vmatprep.subr.mxu0 0.0
    %859 = vmatpush1.xpose.msra.mxu0 0.0
    %860 = vmatprep.subr.mxu0 0.0
    %861 = vmatpush1.xpose.msra.mxu0 0.0
    %862 = vmatprep.subr.mxu0 0.0
    %863 = vmatpush1.xpose.msra.mxu0 0.0
    %864 = vmatprep.subr.mxu0 0.0
    %865 = vmatpush1.xpose.msra.mxu0 0.0
    %866 = vmatprep.subr.mxu0 0.0
    %867 = vmatpush1.xpose.msra.mxu0 0.0
    %868 = vmatprep.subr.mxu0 0.0
    %869 = vmatpush1.xpose.msra.mxu0 0.0
    %870 = vmatprep.subr.mxu0 0.0
    %871 = vmatpush1.xpose.msra.mxu0 0.0
    %872 = vmatprep.subr.mxu0 0.0
    %873 = vmatpush1.xpose.msra.mxu0 0.0
    %874 = vmatprep.subr.mxu0 0.0
    %875 = vmatpush1.xpose.msra.mxu0 0.0
    %876 = vmatprep.subr.mxu0 0.0
    %877 = vmatpush1.xpose.msra.mxu0 0.0
    %878 = vmatprep.subr.mxu0 0.0
    %879 = vmatpush1.xpose.msra.mxu0 0.0
    %880 = vmatprep.subr.mxu0 0.0
    %881 = vmatpush1.xpose.msra.mxu0 0.0
    %882 = vmatprep.subr.mxu0 0.0
    %883 = vmatpush1.xpose.msra.mxu0 %v850
    %884 = vmatprep.subr.mxu0 0.0
    %885 = vmatpush2.xpose.msra.mxu0 0.0
    %886 = vmatprep.subr.mxu0 0.0
    %887 = vmatpush2.xpose.msra.mxu0 0.0
    %888 = vmatprep.subr.mxu0 0.0
    %889 = vmatpush2.xpose.msra.mxu0 0.0
    %890 = vmatprep.subr.mxu0 0.0
    %891 = vmatpush2.xpose.msra.mxu0 0.0
    %892 = vmatprep.subr.mxu0 0.0
    %893 = vmatpush2.xpose.msra.mxu0 0.0
    %894 = vmatprep.subr.mxu0 0.0
    %895 = vmatpush2.xpose.msra.mxu0 0.0
    %896 = vmatprep.subr.mxu0 0.0
    %897 = vmatpush2.xpose.msra.mxu0 0.0
    %898 = vmatprep.subr.mxu0 0.0
    %899 = vmatpush2.xpose.msra.mxu0 0.0
    %900 = vmatprep.subr.mxu0 0.0
    %901 = vmatpush2.xpose.msra.mxu0 0.0
    %902 = vmatprep.subr.mxu0 0.0
    %903 = vmatpush2.xpose.msra.mxu0 0.0
    %904 = vmatprep.subr.mxu0 0.0
    %905 = vmatpush2.xpose.msra.mxu0 0.0
    %906 = vmatprep.subr.mxu0 0.0
    %907 = vmatpush2.xpose.msra.mxu0 0.0
    %908 = vmatprep.subr.mxu0 0.0
    %909 = vmatpush2.xpose.msra.mxu0 0.0
    %910 = vmatprep.subr.mxu0 0.0
    %911 = vmatpush2.xpose.msra.mxu0 0.0
    %912 = vmatprep.subr.mxu0 0.0
    %913 = vmatpush2.xpose.msra.mxu0 0.0
    %914 = vmatprep.subr.mxu0 0.0
    %915 = vmatpush2.xpose.msra.mxu0 0.0
    %916 = vmatprep.mubr.f32.mxu0 0.0
    %917 = vmatmul.mubr.f32.gmra.mxu0 %v848
    %v918 = vpop.f32.mrf.mxu0
    %v919 = vadd.f32 0.0, %v918
    %v920 = vpop.f32.mrf.mxu0
    %921 = vdwg.mxu0
    %v922 = vsel %vm238, %v919, -inf
    %923 = vmax.xlane.f32.xlu0 %v922
    %v924 = vpop.xlane.xlu0 %923
    %v925 = vsub.f32 %v919, %v924
    %v926 = vmul.f32 %v925, 1.442695
    %v927 = vpow.pop %v926
    %v928 = vsel %vm238, %v927, 0.0
    %929 = vadd.xlane.f32.xlu0 %v928
    %v930 = vpop.xlane.xlu0 %929
    %v931 = vrcp.pop %v930
    %v932 = vmul.f32 %v927, %v931
    %933 = vrot.lane.b32.xlu0 %v152, 48
    %v934 = vpop.permute.xlu0 %933
    %v937 = vsel %vm238, %v932, 0
    %939 = vmatprep.subr.mxu0 0.0
    %940 = vmatpush1.msra.mxu0 0.0
    %941 = vmatprep.subr.mxu0 0.0
    %942 = vmatpush1.msra.mxu0 0.0
    %943 = vmatprep.subr.mxu0 0.0
    %944 = vmatpush1.msra.mxu0 0.0
    %945 = vmatprep.subr.mxu0 0.0
    %946 = vmatpush1.msra.mxu0 0.0
    %947 = vmatprep.subr.mxu0 0.0
    %948 = vmatpush1.msra.mxu0 0.0
    %949 = vmatprep.subr.mxu0 0.0
    %950 = vmatpush1.msra.mxu0 0.0
    %951 = vmatprep.subr.mxu0 0.0
    %952 = vmatpush1.msra.mxu0 0.0
    %953 = vmatprep.subr.mxu0 0.0
    %954 = vmatpush1.msra.mxu0 0.0
    %955 = vmatprep.subr.mxu0 0.0
    %956 = vmatpush1.msra.mxu0 0.0
    %957 = vmatprep.subr.mxu0 0.0
    %958 = vmatpush1.msra.mxu0 0.0
    %959 = vmatprep.subr.mxu0 0.0
    %960 = vmatpush1.msra.mxu0 0.0
    %961 = vmatprep.subr.mxu0 0.0
    %962 = vmatpush1.msra.mxu0 0.0
    %963 = vmatprep.subr.mxu0 0.0
    %964 = vmatpush1.msra.mxu0 0.0
    %965 = vmatprep.subr.mxu0 0.0
    %966 = vmatpush1.msra.mxu0 0.0
    %967 = vmatprep.subr.mxu0 0.0
    %968 = vmatpush1.msra.mxu0 0.0
    %969 = vmatprep.subr.mxu0 0.0
    %970 = vmatpush1.msra.mxu0 %v934
    %971 = vmatprep.subr.mxu0 0.0
    %972 = vmatpush2.msra.mxu0 0.0
    %973 = vmatprep.subr.mxu0 0.0
    %974 = vmatpush2.msra.mxu0 0.0
    %975 = vmatprep.subr.mxu0 0.0
    %976 = vmatpush2.msra.mxu0 0.0
    %977 = vmatprep.subr.mxu0 0.0
    %978 = vmatpush2.msra.mxu0 0.0
    %979 = vmatprep.subr.mxu0 0.0
    %980 = vmatpush2.msra.mxu0 0.0
    %981 = vmatprep.subr.mxu0 0.0
    %982 = vmatpush2.msra.mxu0 0.0
    %983 = vmatprep.subr.mxu0 0.0
    %984 = vmatpush2.msra.mxu0 0.0
    %985 = vmatprep.subr.mxu0 0.0
    %986 = vmatpush2.msra.mxu0 0.0
    %987 = vmatprep.subr.mxu0 0.0
    %988 = vmatpush2.msra.mxu0 0.0
    %989 = vmatprep.subr.mxu0 0.0
    %990 = vmatpush2.msra.mxu0 0.0
    %991 = vmatprep.subr.mxu0 0.0
    %992 = vmatpush2.msra.mxu0 0.0
    %993 = vmatprep.subr.mxu0 0.0
    %994 = vmatpush2.msra.mxu0 0.0
    %995 = vmatprep.subr.mxu0 0.0
    %996 = vmatpush2.msra.mxu0 0.0
    %997 = vmatprep.subr.mxu0 0.0
    %998 = vmatpush2.msra.mxu0 0.0
    %999 = vmatprep.subr.mxu0 0.0
    %1000 = vmatpush2.msra.mxu0 0.0
    %1001 = vmatprep.subr.mxu0 0.0
    %1002 = vmatpush2.msra.mxu0 0.0
    %1003 = vmatprep.mubr.f32.mxu0 0.0
    %1004 = vmatmul.mubr.f32.gmra.mxu0 %v937
    %v1005 = vpop.f32.mrf.mxu0
    %v1006 = vadd.f32 0.0, %v1005
    %v1007 = vpop.f32.mrf.mxu0
    %1008 = vdwg.mxu0
    %1010 = vrot.lane.b32.xlu0 %v1006, 16
    %v1011 = vpop.permute.xlu0 %1010
    %vm1013 = vcmask 162944
    %1014 = vst.msk [vmem:[#allocation2] sm:$0xff] %vm1013, %v1011
    %v1015 = vadd.f32 %v843, %v932
    %1016 = vrot.lane.b32.xlu0 %v152, 108
    %v1017 = vpop.permute.xlu0 %1016
    %1018 = vrot.lane.b32.xlu0 %v152, 76
    %v1019 = vpop.permute.xlu0 %1018
    %v1020 = vsel %vm163, %v1017, 0
    %v1022 = vsel %vm163, %v1019, 0
    %1024 = vmatprep.subr.mxu0 0.0
    %1025 = vmatpush1.xpose.msra.mxu0 0.0
    %1026 = vmatprep.subr.mxu0 0.0
    %1027 = vmatpush1.xpose.msra.mxu0 0.0
    %1028 = vmatprep.subr.mxu0 0.0
    %1029 = vmatpush1.xpose.msra.mxu0 0.0
    %1030 = vmatprep.subr.mxu0 0.0
    %1031 = vmatpush1.xpose.msra.mxu0 0.0
    %1032 = vmatprep.subr.mxu0 0.0
    %1033 = vmatpush1.xpose.msra.mxu0 0.0
    %1034 = vmatprep.subr.mxu0 0.0
    %1035 = vmatpush1.xpose.msra.mxu0 0.0
    %1036 = vmatprep.subr.mxu0 0.0
    %1037 = vmatpush1.xpose.msra.mxu0 0.0
    %1038 = vmatprep.subr.mxu0 0.0
    %1039 = vmatpush1.xpose.msra.mxu0 0.0
    %1040 = vmatprep.subr.mxu0 0.0
    %1041 = vmatpush1.xpose.msra.mxu0 0.0
    %1042 = vmatprep.subr.mxu0 0.0
    %1043 = vmatpush1.xpose.msra.mxu0 0.0
    %1044 = vmatprep.subr.mxu0 0.0
    %1045 = vmatpush1.xpose.msra.mxu0 0.0
    %1046 = vmatprep.subr.mxu0 0.0
    %1047 = vmatpush1.xpose.msra.mxu0 0.0
    %1048 = vmatprep.subr.mxu0 0.0
    %1049 = vmatpush1.xpose.msra.mxu0 0.0
    %1050 = vmatprep.subr.mxu0 0.0
    %1051 = vmatpush1.xpose.msra.mxu0 0.0
    %1052 = vmatprep.subr.mxu0 0.0
    %1053 = vmatpush1.xpose.msra.mxu0 0.0
    %1054 = vmatprep.subr.mxu0 0.0
    %1055 = vmatpush1.xpose.msra.mxu0 %v1022
    %1056 = vmatprep.subr.mxu0 0.0
    %1057 = vmatpush2.xpose.msra.mxu0 0.0
    %1058 = vmatprep.subr.mxu0 0.0
    %1059 = vmatpush2.xpose.msra.mxu0 0.0
    %1060 = vmatprep.subr.mxu0 0.0
    %1061 = vmatpush2.xpose.msra.mxu0 0.0
    %1062 = vmatprep.subr.mxu0 0.0
    %1063 = vmatpush2.xpose.msra.mxu0 0.0
    %1064 = vmatprep.subr.mxu0 0.0
    %1065 = vmatpush2.xpose.msra.mxu0 0.0
    %1066 = vmatprep.subr.mxu0 0.0
    %1067 = vmatpush2.xpose.msra.mxu0 0.0
    %1068 = vmatprep.subr.mxu0 0.0
    %1069 = vmatpush2.xpose.msra.mxu0 0.0
    %1070 = vmatprep.subr.mxu0 0.0
    %1071 = vmatpush2.xpose.msra.mxu0 0.0
    %1072 = vmatprep.subr.mxu0 0.0
    %1073 = vmatpush2.xpose.msra.mxu0 0.0
    %1074 = vmatprep.subr.mxu0 0.0
    %1075 = vmatpush2.xpose.msra.mxu0 0.0
    %1076 = vmatprep.subr.mxu0 0.0
    %1077 = vmatpush2.xpose.msra.mxu0 0.0
    %1078 = vmatprep.subr.mxu0 0.0
    %1079 = vmatpush2.xpose.msra.mxu0 0.0
    %1080 = vmatprep.subr.mxu0 0.0
    %1081 = vmatpush2.xpose.msra.mxu0 0.0
    %1082 = vmatprep.subr.mxu0 0.0
    %1083 = vmatpush2.xpose.msra.mxu0 0.0
    %1084 = vmatprep.subr.mxu0 0.0
    %1085 = vmatpush2.xpose.msra.mxu0 0.0
    %1086 = vmatprep.subr.mxu0 0.0
    %1087 = vmatpush2.xpose.msra.mxu0 0.0
    %1088 = vmatprep.mubr.f32.mxu0 0.0
    %1089 = vmatmul.mubr.f32.gmra.mxu0 %v1020
    %v1090 = vpop.f32.mrf.mxu0
    %v1091 = vadd.f32 0.0, %v1090
    %v1092 = vpop.f32.mrf.mxu0
    %1093 = vdwg.mxu0
    %v1094 = vsel %vm238, %v1091, -inf
    %1095 = vmax.xlane.f32.xlu0 %v1094
    %v1096 = vpop.xlane.xlu0 %1095
    %v1097 = vsub.f32 %v1091, %v1096
    %v1098 = vmul.f32 %v1097, 1.442695
    %v1099 = vpow.pop %v1098
    %v1100 = vsel %vm238, %v1099, 0.0
    %1101 = vadd.xlane.f32.xlu0 %v1100
    %v1102 = vpop.xlane.xlu0 %1101
    %v1103 = vrcp.pop %v1102
    %v1104 = vmul.f32 %v1099, %v1103
    %1105 = vrot.lane.b32.xlu0 %v152, 44
    %v1106 = vpop.permute.xlu0 %1105
    %v1109 = vsel %vm238, %v1104, 0
    %1111 = vmatprep.subr.mxu0 0.0
    %1112 = vmatpush1.msra.mxu0 0.0
    %1113 = vmatprep.subr.mxu0 0.0
    %1114 = vmatpush1.msra.mxu0 0.0
    %1115 = vmatprep.subr.mxu0 0.0
    %1116 = vmatpush1.msra.mxu0 0.0
    %1117 = vmatprep.subr.mxu0 0.0
    %1118 = vmatpush1.msra.mxu0 0.0
    %1119 = vmatprep.subr.mxu0 0.0
    %1120 = vmatpush1.msra.mxu0 0.0
    %1121 = vmatprep.subr.mxu0 0.0
    %1122 = vmatpush1.msra.mxu0 0.0
    %1123 = vmatprep.subr.mxu0 0.0
    %1124 = vmatpush1.msra.mxu0 0.0
    %1125 = vmatprep.subr.mxu0 0.0
    %1126 = vmatpush1.msra.mxu0 0.0
    %1127 = vmatprep.subr.mxu0 0.0
    %1128 = vmatpush1.msra.mxu0 0.0
    %1129 = vmatprep.subr.mxu0 0.0
    %1130 = vmatpush1.msra.mxu0 0.0
    %1131 = vmatprep.subr.mxu0 0.0
    %1132 = vmatpush1.msra.mxu0 0.0
    %1133 = vmatprep.subr.mxu0 0.0
    %1134 = vmatpush1.msra.mxu0 0.0
    %1135 = vmatprep.subr.mxu0 0.0
    %1136 = vmatpush1.msra.mxu0 0.0
    %1137 = vmatprep.subr.mxu0 0.0
    %1138 = vmatpush1.msra.mxu0 0.0
    %1139 = vmatprep.subr.mxu0 0.0
    %1140 = vmatpush1.msra.mxu0 0.0
    %1141 = vmatprep.subr.mxu0 0.0
    %1142 = vmatpush1.msra.mxu0 %v1106
    %1143 = vmatprep.subr.mxu0 0.0
    %1144 = vmatpush2.msra.mxu0 0.0
    %1145 = vmatprep.subr.mxu0 0.0
    %1146 = vmatpush2.msra.mxu0 0.0
    %1147 = vmatprep.subr.mxu0 0.0
    %1148 = vmatpush2.msra.mxu0 0.0
    %1149 = vmatprep.subr.mxu0 0.0
    %1150 = vmatpush2.msra.mxu0 0.0
    %1151 = vmatprep.subr.mxu0 0.0
    %1152 = vmatpush2.msra.mxu0 0.0
    %1153 = vmatprep.subr.mxu0 0.0
    %1154 = vmatpush2.msra.mxu0 0.0
    %1155 = vmatprep.subr.mxu0 0.0
    %1156 = vmatpush2.msra.mxu0 0.0
    %1157 = vmatprep.subr.mxu0 0.0
    %1158 = vmatpush2.msra.mxu0 0.0
    %1159 = vmatprep.subr.mxu0 0.0
    %1160 = vmatpush2.msra.mxu0 0.0
    %1161 = vmatprep.subr.mxu0 0.0
    %1162 = vmatpush2.msra.mxu0 0.0
    %1163 = vmatprep.subr.mxu0 0.0
    %1164 = vmatpush2.msra.mxu0 0.0
    %1165 = vmatprep.subr.mxu0 0.0
    %1166 = vmatpush2.msra.mxu0 0.0
    %1167 = vmatprep.subr.mxu0 0.0
    %1168 = vmatpush2.msra.mxu0 0.0
    %1169 = vmatprep.subr.mxu0 0.0
    %1170 = vmatpush2.msra.mxu0 0.0
    %1171 = vmatprep.subr.mxu0 0.0
    %1172 = vmatpush2.msra.mxu0 0.0
    %1173 = vmatprep.subr.mxu0 0.0
    %1174 = vmatpush2.msra.mxu0 0.0
    %1175 = vmatprep.mubr.f32.mxu0 0.0
    %1176 = vmatmul.mubr.f32.gmra.mxu0 %v1109
    %v1177 = vpop.f32.mrf.mxu0
    %v1178 = vadd.f32 0.0, %v1177
    %v1179 = vpop.f32.mrf.mxu0
    %1180 = vdwg.mxu0
    %1182 = vrot.lane.b32.xlu0 %v1178, 20
    %v1183 = vpop.permute.xlu0 %1182
    %vm1185 = vcmask 195744
    %1186 = vst.msk [vmem:[#allocation2] sm:$0xff] %vm1185, %v1183
    %v1187 = vadd.f32 %v1015, %v1104
    %1188 = vrot.lane.b32.xlu0 %v152, 104
    %v1189 = vpop.permute.xlu0 %1188
    %1190 = vrot.lane.b32.xlu0 %v152, 72
    %v1191 = vpop.permute.xlu0 %1190
    %v1192 = vsel %vm163, %v1189, 0
    %v1194 = vsel %vm163, %v1191, 0
    %1196 = vmatprep.subr.mxu0 0.0
    %1197 = vmatpush1.xpose.msra.mxu0 0.0
    %1198 = vmatprep.subr.mxu0 0.0
    %1199 = vmatpush1.xpose.msra.mxu0 0.0
    %1200 = vmatprep.subr.mxu0 0.0
    %1201 = vmatpush1.xpose.msra.mxu0 0.0
    %1202 = vmatprep.subr.mxu0 0.0
    %1203 = vmatpush1.xpose.msra.mxu0 0.0
    %1204 = vmatprep.subr.mxu0 0.0
    %1205 = vmatpush1.xpose.msra.mxu0 0.0
    %1206 = vmatprep.subr.mxu0 0.0
    %1207 = vmatpush1.xpose.msra.mxu0 0.0
    %1208 = vmatprep.subr.mxu0 0.0
    %1209 = vmatpush1.xpose.msra.mxu0 0.0
    %1210 = vmatprep.subr.mxu0 0.0
    %1211 = vmatpush1.xpose.msra.mxu0 0.0
    %1212 = vmatprep.subr.mxu0 0.0
    %1213 = vmatpush1.xpose.msra.mxu0 0.0
    %1214 = vmatprep.subr.mxu0 0.0
    %1215 = vmatpush1.xpose.msra.mxu0 0.0
    %1216 = vmatprep.subr.mxu0 0.0
    %1217 = vmatpush1.xpose.msra.mxu0 0.0
    %1218 = vmatprep.subr.mxu0 0.0
    %1219 = vmatpush1.xpose.msra.mxu0 0.0
    %1220 = vmatprep.subr.mxu0 0.0
    %1221 = vmatpush1.xpose.msra.mxu0 0.0
    %1222 = vmatprep.subr.mxu0 0.0
    %1223 = vmatpush1.xpose.msra.mxu0 0.0
    %1224 = vmatprep.subr.mxu0 0.0
    %1225 = vmatpush1.xpose.msra.mxu0 0.0
    %1226 = vmatprep.subr.mxu0 0.0
    %1227 = vmatpush1.xpose.msra.mxu0 %v1194
    %1228 = vmatprep.subr.mxu0 0.0
    %1229 = vmatpush2.xpose.msra.mxu0 0.0
    %1230 = vmatprep.subr.mxu0 0.0
    %1231 = vmatpush2.xpose.msra.mxu0 0.0
    %1232 = vmatprep.subr.mxu0 0.0
    %1233 = vmatpush2.xpose.msra.mxu0 0.0
    %1234 = vmatprep.subr.mxu0 0.0
    %1235 = vmatpush2.xpose.msra.mxu0 0.0
    %1236 = vmatprep.subr.mxu0 0.0
    %1237 = vmatpush2.xpose.msra.mxu0 0.0
    %1238 = vmatprep.subr.mxu0 0.0
    %1239 = vmatpush2.xpose.msra.mxu0 0.0
    %1240 = vmatprep.subr.mxu0 0.0
    %1241 = vmatpush2.xpose.msra.mxu0 0.0
    %1242 = vmatprep.subr.mxu0 0.0
    %1243 = vmatpush2.xpose.msra.mxu0 0.0
    %1244 = vmatprep.subr.mxu0 0.0
    %1245 = vmatpush2.xpose.msra.mxu0 0.0
    %1246 = vmatprep.subr.mxu0 0.0
    %1247 = vmatpush2.xpose.msra.mxu0 0.0
    %1248 = vmatprep.subr.mxu0 0.0
    %1249 = vmatpush2.xpose.msra.mxu0 0.0
    %1250 = vmatprep.subr.mxu0 0.0
    %1251 = vmatpush2.xpose.msra.mxu0 0.0
    %1252 = vmatprep.subr.mxu0 0.0
    %1253 = vmatpush2.xpose.msra.mxu0 0.0
    %1254 = vmatprep.subr.mxu0 0.0
    %1255 = vmatpush2.xpose.msra.mxu0 0.0
    %1256 = vmatprep.subr.mxu0 0.0
    %1257 = vmatpush2.xpose.msra.mxu0 0.0
    %1258 = vmatprep.subr.mxu0 0.0
    %1259 = vmatpush2.xpose.msra.mxu0 0.0
    %1260 = vmatprep.mubr.f32.mxu0 0.0
    %1261 = vmatmul.mubr.f32.gmra.mxu0 %v1192
    %v1262 = vpop.f32.mrf.mxu0
    %v1263 = vadd.f32 0.0, %v1262
    %v1264 = vpop.f32.mrf.mxu0
    %1265 = vdwg.mxu0
    %v1266 = vsel %vm238, %v1263, -inf
    %1267 = vmax.xlane.f32.xlu0 %v1266
    %v1268 = vpop.xlane.xlu0 %1267
    %v1269 = vsub.f32 %v1263, %v1268
    %v1270 = vmul.f32 %v1269, 1.442695
    %v1271 = vpow.pop %v1270
    %v1272 = vsel %vm238, %v1271, 0.0
    %1273 = vadd.xlane.f32.xlu0 %v1272
    %v1274 = vpop.xlane.xlu0 %1273
    %v1275 = vrcp.pop %v1274
    %v1276 = vmul.f32 %v1271, %v1275
    %1277 = vrot.lane.b32.xlu0 %v152, 40
    %v1278 = vpop.permute.xlu0 %1277
    %v1281 = vsel %vm238, %v1276, 0
    %1283 = vmatprep.subr.mxu0 0.0
    %1284 = vmatpush1.msra.mxu0 0.0
    %1285 = vmatprep.subr.mxu0 0.0
    %1286 = vmatpush1.msra.mxu0 0.0
    %1287 = vmatprep.subr.mxu0 0.0
    %1288 = vmatpush1.msra.mxu0 0.0
    %1289 = vmatprep.subr.mxu0 0.0
    %1290 = vmatpush1.msra.mxu0 0.0
    %1291 = vmatprep.subr.mxu0 0.0
    %1292 = vmatpush1.msra.mxu0 0.0
    %1293 = vmatprep.subr.mxu0 0.0
    %1294 = vmatpush1.msra.mxu0 0.0
    %1295 = vmatprep.subr.mxu0 0.0
    %1296 = vmatpush1.msra.mxu0 0.0
    %1297 = vmatprep.subr.mxu0 0.0
    %1298 = vmatpush1.msra.mxu0 0.0
    %1299 = vmatprep.subr.mxu0 0.0
    %1300 = vmatpush1.msra.mxu0 0.0
    %1301 = vmatprep.subr.mxu0 0.0
    %1302 = vmatpush1.msra.mxu0 0.0
    %1303 = vmatprep.subr.mxu0 0.0
    %1304 = vmatpush1.msra.mxu0 0.0
    %1305 = vmatprep.subr.mxu0 0.0
    %1306 = vmatpush1.msra.mxu0 0.0
    %1307 = vmatprep.subr.mxu0 0.0
    %1308 = vmatpush1.msra.mxu0 0.0
    %1309 = vmatprep.subr.mxu0 0.0
    %1310 = vmatpush1.msra.mxu0 0.0
    %1311 = vmatprep.subr.mxu0 0.0
    %1312 = vmatpush1.msra.mxu0 0.0
    %1313 = vmatprep.subr.mxu0 0.0
    %1314 = vmatpush1.msra.mxu0 %v1278
    %1315 = vmatprep.subr.mxu0 0.0
    %1316 = vmatpush2.msra.mxu0 0.0
    %1317 = vmatprep.subr.mxu0 0.0
    %1318 = vmatpush2.msra.mxu0 0.0
    %1319 = vmatprep.subr.mxu0 0.0
    %1320 = vmatpush2.msra.mxu0 0.0
    %1321 = vmatprep.subr.mxu0 0.0
    %1322 = vmatpush2.msra.mxu0 0.0
    %1323 = vmatprep.subr.mxu0 0.0
    %1324 = vmatpush2.msra.mxu0 0.0
    %1325 = vmatprep.subr.mxu0 0.0
    %1326 = vmatpush2.msra.mxu0 0.0
    %1327 = vmatprep.subr.mxu0 0.0
    %1328 = vmatpush2.msra.mxu0 0.0
    %1329 = vmatprep.subr.mxu0 0.0
    %1330 = vmatpush2.msra.mxu0 0.0
    %1331 = vmatprep.subr.mxu0 0.0
    %1332 = vmatpush2.msra.mxu0 0.0
    %1333 = vmatprep.subr.mxu0 0.0
    %1334 = vmatpush2.msra.mxu0 0.0
    %1335 = vmatprep.subr.mxu0 0.0
    %1336 = vmatpush2.msra.mxu0 0.0
    %1337 = vmatprep.subr.mxu0 0.0
    %1338 = vmatpush2.msra.mxu0 0.0
    %1339 = vmatprep.subr.mxu0 0.0
    %1340 = vmatpush2.msra.mxu0 0.0
    %1341 = vmatprep.subr.mxu0 0.0
    %1342 = vmatpush2.msra.mxu0 0.0
    %1343 = vmatprep.subr.mxu0 0.0
    %1344 = vmatpush2.msra.mxu0 0.0
    %1345 = vmatprep.subr.mxu0 0.0
    %1346 = vmatpush2.msra.mxu0 0.0
    %1347 = vmatprep.mubr.f32.mxu0 0.0
    %1348 = vmatmul.mubr.f32.gmra.mxu0 %v1281
    %v1349 = vpop.f32.mrf.mxu0
    %v1350 = vadd.f32 0.0, %v1349
    %v1351 = vpop.f32.mrf.mxu0
    %1352 = vdwg.mxu0
    %1354 = vrot.lane.b32.xlu0 %v1350, 24
    %v1355 = vpop.permute.xlu0 %1354
    %vm1357 = vcmask 228544
    %1358 = vst.msk [vmem:[#allocation2] sm:$0xff] %vm1357, %v1355
    %v1359 = vadd.f32 %v1187, %v1276
    %1360 = vrot.lane.b32.xlu0 %v152, 100
    %v1361 = vpop.permute.xlu0 %1360
    %1362 = vrot.lane.b32.xlu0 %v152, 68
    %v1363 = vpop.permute.xlu0 %1362
    %v1364 = vsel %vm163, %v1361, 0
    %v1366 = vsel %vm163, %v1363, 0
    %1368 = vmatprep.subr.mxu0 0.0
    %1369 = vmatpush1.xpose.msra.mxu0 0.0
    %1370 = vmatprep.subr.mxu0 0.0
    %1371 = vmatpush1.xpose.msra.mxu0 0.0
    %1372 = vmatprep.subr.mxu0 0.0
    %1373 = vmatpush1.xpose.msra.mxu0 0.0
    %1374 = vmatprep.subr.mxu0 0.0
    %1375 = vmatpush1.xpose.msra.mxu0 0.0
    %1376 = vmatprep.subr.mxu0 0.0
    %1377 = vmatpush1.xpose.msra.mxu0 0.0
    %1378 = vmatprep.subr.mxu0 0.0
    %1379 = vmatpush1.xpose.msra.mxu0 0.0
    %1380 = vmatprep.subr.mxu0 0.0
    %1381 = vmatpush1.xpose.msra.mxu0 0.0
    %1382 = vmatprep.subr.mxu0 0.0
    %1383 = vmatpush1.xpose.msra.mxu0 0.0
    %1384 = vmatprep.subr.mxu0 0.0
    %1385 = vmatpush1.xpose.msra.mxu0 0.0
    %1386 = vmatprep.subr.mxu0 0.0
    %1387 = vmatpush1.xpose.msra.mxu0 0.0
    %1388 = vmatprep.subr.mxu0 0.0
    %1389 = vmatpush1.xpose.msra.mxu0 0.0
    %1390 = vmatprep.subr.mxu0 0.0
    %1391 = vmatpush1.xpose.msra.mxu0 0.0
    %1392 = vmatprep.subr.mxu0 0.0
    %1393 = vmatpush1.xpose.msra.mxu0 0.0
    %1394 = vmatprep.subr.mxu0 0.0
    %1395 = vmatpush1.xpose.msra.mxu0 0.0
    %1396 = vmatprep.subr.mxu0 0.0
    %1397 = vmatpush1.xpose.msra.mxu0 0.0
    %1398 = vmatprep.subr.mxu0 0.0
    %1399 = vmatpush1.xpose.msra.mxu0 %v1366
    %1400 = vmatprep.subr.mxu0 0.0
    %1401 = vmatpush2.xpose.msra.mxu0 0.0
    %1402 = vmatprep.subr.mxu0 0.0
    %1403 = vmatpush2.xpose.msra.mxu0 0.0
    %1404 = vmatprep.subr.mxu0 0.0
    %1405 = vmatpush2.xpose.msra.mxu0 0.0
    %1406 = vmatprep.subr.mxu0 0.0
    %1407 = vmatpush2.xpose.msra.mxu0 0.0
    %1408 = vmatprep.subr.mxu0 0.0
    %1409 = vmatpush2.xpose.msra.mxu0 0.0
    %1410 = vmatprep.subr.mxu0 0.0
    %1411 = vmatpush2.xpose.msra.mxu0 0.0
    %1412 = vmatprep.subr.mxu0 0.0
    %1413 = vmatpush2.xpose.msra.mxu0 0.0
    %1414 = vmatprep.subr.mxu0 0.0
    %1415 = vmatpush2.xpose.msra.mxu0 0.0
    %1416 = vmatprep.subr.mxu0 0.0
    %1417 = vmatpush2.xpose.msra.mxu0 0.0
    %1418 = vmatprep.subr.mxu0 0.0
    %1419 = vmatpush2.xpose.msra.mxu0 0.0
    %1420 = vmatprep.subr.mxu0 0.0
    %1421 = vmatpush2.xpose.msra.mxu0 0.0
    %1422 = vmatprep.subr.mxu0 0.0
    %1423 = vmatpush2.xpose.msra.mxu0 0.0
    %1424 = vmatprep.subr.mxu0 0.0
    %1425 = vmatpush2.xpose.msra.mxu0 0.0
    %1426 = vmatprep.subr.mxu0 0.0
    %1427 = vmatpush2.xpose.msra.mxu0 0.0
    %1428 = vmatprep.subr.mxu0 0.0
    %1429 = vmatpush2.xpose.msra.mxu0 0.0
    %1430 = vmatprep.subr.mxu0 0.0
    %1431 = vmatpush2.xpose.msra.mxu0 0.0
    %1432 = vmatprep.mubr.f32.mxu0 0.0
    %1433 = vmatmul.mubr.f32.gmra.mxu0 %v1364
    %v1434 = vpop.f32.mrf.mxu0
    %v1435 = vadd.f32 0.0, %v1434
    %v1436 = vpop.f32.mrf.mxu0
    %1437 = vdwg.mxu0
    %v1438 = vsel %vm238, %v1435, -inf
    %1439 = vmax.xlane.f32.xlu0 %v1438
    %v1440 = vpop.xlane.xlu0 %1439
    %v1441 = vsub.f32 %v1435, %v1440
    %v1442 = vmul.f32 %v1441, 1.442695
    %v1443 = vpow.pop %v1442
    %v1444 = vsel %vm238, %v1443, 0.0
    %1445 = vadd.xlane.f32.xlu0 %v1444
    %v1446 = vpop.xlane.xlu0 %1445
    %v1447 = vrcp.pop %v1446
    %v1448 = vmul.f32 %v1443, %v1447
    %1449 = vrot.lane.b32.xlu0 %v152, 36
    %v1450 = vpop.permute.xlu0 %1449
    %v1453 = vsel %vm238, %v1448, 0
    %1455 = vmatprep.subr.mxu0 0.0
    %1456 = vmatpush1.msra.mxu0 0.0
    %1457 = vmatprep.subr.mxu0 0.0
    %1458 = vmatpush1.msra.mxu0 0.0
    %1459 = vmatprep.subr.mxu0 0.0
    %1460 = vmatpush1.msra.mxu0 0.0
    %1461 = vmatprep.subr.mxu0 0.0
    %1462 = vmatpush1.msra.mxu0 0.0
    %1463 = vmatprep.subr.mxu0 0.0
    %1464 = vmatpush1.msra.mxu0 0.0
    %1465 = vmatprep.subr.mxu0 0.0
    %1466 = vmatpush1.msra.mxu0 0.0
    %1467 = vmatprep.subr.mxu0 0.0
    %1468 = vmatpush1.msra.mxu0 0.0
    %1469 = vmatprep.subr.mxu0 0.0
    %1470 = vmatpush1.msra.mxu0 0.0
    %1471 = vmatprep.subr.mxu0 0.0
    %1472 = vmatpush1.msra.mxu0 0.0
    %1473 = vmatprep.subr.mxu0 0.0
    %1474 = vmatpush1.msra.mxu0 0.0
    %1475 = vmatprep.subr.mxu0 0.0
    %1476 = vmatpush1.msra.mxu0 0.0
    %1477 = vmatprep.subr.mxu0 0.0
    %1478 = vmatpush1.msra.mxu0 0.0
    %1479 = vmatprep.subr.mxu0 0.0
    %1480 = vmatpush1.msra.mxu0 0.0
    %1481 = vmatprep.subr.mxu0 0.0
    %1482 = vmatpush1.msra.mxu0 0.0
    %1483 = vmatprep.subr.mxu0 0.0
    %1484 = vmatpush1.msra.mxu0 0.0
    %1485 = vmatprep.subr.mxu0 0.0
    %1486 = vmatpush1.msra.mxu0 %v1450
    %1487 = vmatprep.subr.mxu0 0.0
    %1488 = vmatpush2.msra.mxu0 0.0
    %1489 = vmatprep.subr.mxu0 0.0
    %1490 = vmatpush2.msra.mxu0 0.0
    %1491 = vmatprep.subr.mxu0 0.0
    %1492 = vmatpush2.msra.mxu0 0.0
    %1493 = vmatprep.subr.mxu0 0.0
    %1494 = vmatpush2.msra.mxu0 0.0
    %1495 = vmatprep.subr.mxu0 0.0
    %1496 = vmatpush2.msra.mxu0 0.0
    %1497 = vmatprep.subr.mxu0 0.0
    %1498 = vmatpush2.msra.mxu0 0.0
    %1499 = vmatprep.subr.mxu0 0.0
    %1500 = vmatpush2.msra.mxu0 0.0
    %1501 = vmatprep.subr.mxu0 0.0
    %1502 = vmatpush2.msra.mxu0 0.0
    %1503 = vmatprep.subr.mxu0 0.0
    %1504 = vmatpush2.msra.mxu0 0.0
    %1505 = vmatprep.subr.mxu0 0.0
    %1506 = vmatpush2.msra.mxu0 0.0
    %1507 = vmatprep.subr.mxu0 0.0
    %1508 = vmatpush2.msra.mxu0 0.0
    %1509 = vmatprep.subr.mxu0 0.0
    %1510 = vmatpush2.msra.mxu0 0.0
    %1511 = vmatprep.subr.mxu0 0.0
    %1512 = vmatpush2.msra.mxu0 0.0
    %1513 = vmatprep.subr.mxu0 0.0
    %1514 = vmatpush2.msra.mxu0 0.0
    %1515 = vmatprep.subr.mxu0 0.0
    %1516 = vmatpush2.msra.mxu0 0.0
    %1517 = vmatprep.subr.mxu0 0.0
    %1518 = vmatpush2.msra.mxu0 0.0
    %1519 = vmatprep.mubr.f32.mxu0 0.0
    %1520 = vmatmul.mubr.f32.gmra.mxu0 %v1453
    %v1521 = vpop.f32.mrf.mxu0
    %v1522 = vadd.f32 0.0, %v1521
    %v1523 = vpop.f32.mrf.mxu0
    %1524 = vdwg.mxu0
    %1526 = vrot.lane.b32.xlu0 %v1522, 28
    %v1527 = vpop.permute.xlu0 %1526
    %vm1529 = vcmask 261344
    %1530 = vst.msk [vmem:[#allocation2] sm:$0xff] %vm1529, %v1527
    %v1531 = vadd.f32 %v1359, %v1448
    %v1532 = vmul.f32 %v1531, 0.125
    %1533 = vst.msk [vmem:[#allocation10] sm:$0xff] %vm238, %v1532
    %1535 = vrot.lane.b32.xlu0 %v157, 96
    %v1536 = vpop.permute.xlu0 %1535
    %v1537 = vsel %vm163, %v157, 0
    %v1539 = vsel %vm163, %v1536, 0
    %1541 = vmatprep.subr.mxu0 0.0
    %1542 = vmatpush1.xpose.msra.mxu0 0.0
    %1543 = vmatprep.subr.mxu0 0.0
    %1544 = vmatpush1.xpose.msra.mxu0 0.0
    %1545 = vmatprep.subr.mxu0 0.0
    %1546 = vmatpush1.xpose.msra.mxu0 0.0
    %1547 = vmatprep.subr.mxu0 0.0
    %1548 = vmatpush1.xpose.msra.mxu0 0.0
    %1549 = vmatprep.subr.mxu0 0.0
    %1550 = vmatpush1.xpose.msra.mxu0 0.0
    %1551 = vmatprep.subr.mxu0 0.0
    %1552 = vmatpush1.xpose.msra.mxu0 0.0
    %1553 = vmatprep.subr.mxu0 0.0
    %1554 = vmatpush1.xpose.msra.mxu0 0.0
    %1555 = vmatprep.subr.mxu0 0.0
    %1556 = vmatpush1.xpose.msra.mxu0 0.0
    %1557 = vmatprep.subr.mxu0 0.0
    %1558 = vmatpush1.xpose.msra.mxu0 0.0
    %1559 = vmatprep.subr.mxu0 0.0
    %1560 = vmatpush1.xpose.msra.mxu0 0.0
    %1561 = vmatprep.subr.mxu0 0.0
    %1562 = vmatpush1.xpose.msra.mxu0 0.0
    %1563 = vmatprep.subr.mxu0 0.0
    %1564 = vmatpush1.xpose.msra.mxu0 0.0
    %1565 = vmatprep.subr.mxu0 0.0
    %1566 = vmatpush1.xpose.msra.mxu0 0.0
    %1567 = vmatprep.subr.mxu0 0.0
    %1568 = vmatpush1.xpose.msra.mxu0 0.0
    %1569 = vmatprep.subr.mxu0 0.0
    %1570 = vmatpush1.xpose.msra.mxu0 0.0
    %1571 = vmatprep.subr.mxu0 0.0
    %1572 = vmatpush1.xpose.msra.mxu0 %v1539
    %1573 = vmatprep.subr.mxu0 0.0
    %1574 = vmatpush2.xpose.msra.mxu0 0.0
    %1575 = vmatprep.subr.mxu0 0.0
    %1576 = vmatpush2.xpose.msra.mxu0 0.0
    %1577 = vmatprep.subr.mxu0 0.0
    %1578 = vmatpush2.xpose.msra.mxu0 0.0
    %1579 = vmatprep.subr.mxu0 0.0
    %1580 = vmatpush2.xpose.msra.mxu0 0.0
    %1581 = vmatprep.subr.mxu0 0.0
    %1582 = vmatpush2.xpose.msra.mxu0 0.0
    %1583 = vmatprep.subr.mxu0 0.0
    %1584 = vmatpush2.xpose.msra.mxu0 0.0
    %1585 = vmatprep.subr.mxu0 0.0
    %1586 = vmatpush2.xpose.msra.mxu0 0.0
    %1587 = vmatprep.subr.mxu0 0.0
    %1588 = vmatpush2.xpose.msra.mxu0 0.0
    %1589 = vmatprep.subr.mxu0 0.0
    %1590 = vmatpush2.xpose.msra.mxu0 0.0
    %1591 = vmatprep.subr.mxu0 0.0
    %1592 = vmatpush2.xpose.msra.mxu0 0.0
    %1593 = vmatprep.subr.mxu0 0.0
    %1594 = vmatpush2.xpose.msra.mxu0 0.0
    %1595 = vmatprep.subr.mxu0 0.0
    %1596 = vmatpush2.xpose.msra.mxu0 0.0
    %1597 = vmatprep.subr.mxu0 0.0
    %1598 = vmatpush2.xpose.msra.mxu0 0.0
    %1599 = vmatprep.subr.mxu0 0.0
    %1600 = vmatpush2.xpose.msra.mxu0 0.0
    %1601 = vmatprep.subr.mxu0 0.0
    %1602 = vmatpush2.xpose.msra.mxu0 0.0
    %1603 = vmatprep.subr.mxu0 0.0
    %1604 = vmatpush2.xpose.msra.mxu0 0.0
    %1605 = vmatprep.mubr.f32.mxu0 0.0
    %1606 = vmatmul.mubr.f32.gmra.mxu0 %v1537
    %v1607 = vpop.f32.mrf.mxu0
    %v1608 = vadd.f32 0.0, %v1607
    %v1609 = vpop.f32.mrf.mxu0
    %1610 = vdwg.mxu0
    %v1611 = vsel %vm238, %v1608, -inf
    %1612 = vmax.xlane.f32.xlu0 %v1611
    %v1613 = vpop.xlane.xlu0 %1612
    %v1614 = vsub.f32 %v1608, %v1613
    %v1615 = vmul.f32 %v1614, 1.442695
    %v1616 = vpow.pop %v1615
    %v1617 = vsel %vm238, %v1616, 0.0
    %1618 = vadd.xlane.f32.xlu0 %v1617
    %v1619 = vpop.xlane.xlu0 %1618
    %v1620 = vrcp.pop %v1619
    %v1621 = vmul.f32 %v1616, %v1620
    %1622 = vrot.lane.b32.xlu0 %v157, 64
    %v1623 = vpop.permute.xlu0 %1622
    %v1626 = vsel %vm238, %v1621, 0
    %1628 = vmatprep.subr.mxu0 0.0
    %1629 = vmatpush1.msra.mxu0 0.0
    %1630 = vmatprep.subr.mxu0 0.0
    %1631 = vmatpush1.msra.mxu0 0.0
    %1632 = vmatprep.subr.mxu0 0.0
    %1633 = vmatpush1.msra.mxu0 0.0
    %1634 = vmatprep.subr.mxu0 0.0
    %1635 = vmatpush1.msra.mxu0 0.0
    %1636 = vmatprep.subr.mxu0 0.0
    %1637 = vmatpush1.msra.mxu0 0.0
    %1638 = vmatprep.subr.mxu0 0.0
    %1639 = vmatpush1.msra.mxu0 0.0
    %1640 = vmatprep.subr.mxu0 0.0
    %1641 = vmatpush1.msra.mxu0 0.0
    %1642 = vmatprep.subr.mxu0 0.0
    %1643 = vmatpush1.msra.mxu0 0.0
    %1644 = vmatprep.subr.mxu0 0.0
    %1645 = vmatpush1.msra.mxu0 0.0
    %1646 = vmatprep.subr.mxu0 0.0
    %1647 = vmatpush1.msra.mxu0 0.0
    %1648 = vmatprep.subr.mxu0 0.0
    %1649 = vmatpush1.msra.mxu0 0.0
    %1650 = vmatprep.subr.mxu0 0.0
    %1651 = vmatpush1.msra.mxu0 0.0
    %1652 = vmatprep.subr.mxu0 0.0
    %1653 = vmatpush1.msra.mxu0 0.0
    %1654 = vmatprep.subr.mxu0 0.0
    %1655 = vmatpush1.msra.mxu0 0.0
    %1656 = vmatprep.subr.mxu0 0.0
    %1657 = vmatpush1.msra.mxu0 0.0
    %1658 = vmatprep.subr.mxu0 0.0
    %1659 = vmatpush1.msra.mxu0 %v1623
    %1660 = vmatprep.subr.mxu0 0.0
    %1661 = vmatpush2.msra.mxu0 0.0
    %1662 = vmatprep.subr.mxu0 0.0
    %1663 = vmatpush2.msra.mxu0 0.0
    %1664 = vmatprep.subr.mxu0 0.0
    %1665 = vmatpush2.msra.mxu0 0.0
    %1666 = vmatprep.subr.mxu0 0.0
    %1667 = vmatpush2.msra.mxu0 0.0
    %1668 = vmatprep.subr.mxu0 0.0
    %1669 = vmatpush2.msra.mxu0 0.0
    %1670 = vmatprep.subr.mxu0 0.0
    %1671 = vmatpush2.msra.mxu0 0.0
    %1672 = vmatprep.subr.mxu0 0.0
    %1673 = vmatpush2.msra.mxu0 0.0
    %1674 = vmatprep.subr.mxu0 0.0
    %1675 = vmatpush2.msra.mxu0 0.0
    %1676 = vmatprep.subr.mxu0 0.0
    %1677 = vmatpush2.msra.mxu0 0.0
    %1678 = vmatprep.subr.mxu0 0.0
    %1679 = vmatpush2.msra.mxu0 0.0
    %1680 = vmatprep.subr.mxu0 0.0
    %1681 = vmatpush2.msra.mxu0 0.0
    %1682 = vmatprep.subr.mxu0 0.0
    %1683 = vmatpush2.msra.mxu0 0.0
    %1684 = vmatprep.subr.mxu0 0.0
    %1685 = vmatpush2.msra.mxu0 0.0
    %1686 = vmatprep.subr.mxu0 0.0
    %1687 = vmatpush2.msra.mxu0 0.0
    %1688 = vmatprep.subr.mxu0 0.0
    %1689 = vmatpush2.msra.mxu0 0.0
    %1690 = vmatprep.subr.mxu0 0.0
    %1691 = vmatpush2.msra.mxu0 0.0
    %1692 = vmatprep.mubr.f32.mxu0 0.0
    %1693 = vmatmul.mubr.f32.gmra.mxu0 %v1626
    %v1694 = vpop.f32.mrf.mxu0
    %v1695 = vadd.f32 0.0, %v1694
    %v1696 = vpop.f32.mrf.mxu0
    %1697 = vdwg.mxu0
    %1698 = vst.msk [vmem:[#allocation2 + $0x8] sm:$0xff] %vm163, %v1695
    %v1699 = vadd.f32 %v1621, 0.0
    %1700 = vrot.lane.b32.xlu0 %v157, 124
    %v1701 = vpop.permute.xlu0 %1700
    %1702 = vrot.lane.b32.xlu0 %v157, 92
    %v1703 = vpop.permute.xlu0 %1702
    %v1704 = vsel %vm163, %v1701, 0
    %v1706 = vsel %vm163, %v1703, 0
    %1708 = vmatprep.subr.mxu0 0.0
    %1709 = vmatpush1.xpose.msra.mxu0 0.0
    %1710 = vmatprep.subr.mxu0 0.0
    %1711 = vmatpush1.xpose.msra.mxu0 0.0
    %1712 = vmatprep.subr.mxu0 0.0
    %1713 = vmatpush1.xpose.msra.mxu0 0.0
    %1714 = vmatprep.subr.mxu0 0.0
    %1715 = vmatpush1.xpose.msra.mxu0 0.0
    %1716 = vmatprep.subr.mxu0 0.0
    %1717 = vmatpush1.xpose.msra.mxu0 0.0
    %1718 = vmatprep.subr.mxu0 0.0
    %1719 = vmatpush1.xpose.msra.mxu0 0.0
    %1720 = vmatprep.subr.mxu0 0.0
    %1721 = vmatpush1.xpose.msra.mxu0 0.0
    %1722 = vmatprep.subr.mxu0 0.0
    %1723 = vmatpush1.xpose.msra.mxu0 0.0
    %1724 = vmatprep.subr.mxu0 0.0
    %1725 = vmatpush1.xpose.msra.mxu0 0.0
    %1726 = vmatprep.subr.mxu0 0.0
    %1727 = vmatpush1.xpose.msra.mxu0 0.0
    %1728 = vmatprep.subr.mxu0 0.0
    %1729 = vmatpush1.xpose.msra.mxu0 0.0
    %1730 = vmatprep.subr.mxu0 0.0
    %1731 = vmatpush1.xpose.msra.mxu0 0.0
    %1732 = vmatprep.subr.mxu0 0.0
    %1733 = vmatpush1.xpose.msra.mxu0 0.0
    %1734 = vmatprep.subr.mxu0 0.0
    %1735 = vmatpush1.xpose.msra.mxu0 0.0
    %1736 = vmatprep.subr.mxu0 0.0
    %1737 = vmatpush1.xpose.msra.mxu0 0.0
    %1738 = vmatprep.subr.mxu0 0.0
    %1739 = vmatpush1.xpose.msra.mxu0 %v1706
    %1740 = vmatprep.subr.mxu0 0.0
    %1741 = vmatpush2.xpose.msra.mxu0 0.0
    %1742 = vmatprep.subr.mxu0 0.0
    %1743 = vmatpush2.xpose.msra.mxu0 0.0
    %1744 = vmatprep.subr.mxu0 0.0
    %1745 = vmatpush2.xpose.msra.mxu0 0.0
    %1746 = vmatprep.subr.mxu0 0.0
    %1747 = vmatpush2.xpose.msra.mxu0 0.0
    %1748 = vmatprep.subr.mxu0 0.0
    %1749 = vmatpush2.xpose.msra.mxu0 0.0
    %1750 = vmatprep.subr.mxu0 0.0
    %1751 = vmatpush2.xpose.msra.mxu0 0.0
    %1752 = vmatprep.subr.mxu0 0.0
    %1753 = vmatpush2.xpose.msra.mxu0 0.0
    %1754 = vmatprep.subr.mxu0 0.0
    %1755 = vmatpush2.xpose.msra.mxu0 0.0
    %1756 = vmatprep.subr.mxu0 0.0
    %1757 = vmatpush2.xpose.msra.mxu0 0.0
    %1758 = vmatprep.subr.mxu0 0.0
    %1759 = vmatpush2.xpose.msra.mxu0 0.0
    %1760 = vmatprep.subr.mxu0 0.0
    %1761 = vmatpush2.xpose.msra.mxu0 0.0
    %1762 = vmatprep.subr.mxu0 0.0
    %1763 = vmatpush2.xpose.msra.mxu0 0.0
    %1764 = vmatprep.subr.mxu0 0.0
    %1765 = vmatpush2.xpose.msra.mxu0 0.0
    %1766 = vmatprep.subr.mxu0 0.0
    %1767 = vmatpush2.xpose.msra.mxu0 0.0
    %1768 = vmatprep.subr.mxu0 0.0
    %1769 = vmatpush2.xpose.msra.mxu0 0.0
    %1770 = vmatprep.subr.mxu0 0.0
    %1771 = vmatpush2.xpose.msra.mxu0 0.0
    %1772 = vmatprep.mubr.f32.mxu0 0.0
    %1773 = vmatmul.mubr.f32.gmra.mxu0 %v1704
    %v1774 = vpop.f32.mrf.mxu0
    %v1775 = vadd.f32 0.0, %v1774
    %v1776 = vpop.f32.mrf.mxu0
    %1777 = vdwg.mxu0
    %v1778 = vsel %vm238, %v1775, -inf
    %1779 = vmax.xlane.f32.xlu0 %v1778
    %v1780 = vpop.xlane.xlu0 %1779
    %v1781 = vsub.f32 %v1775, %v1780
    %v1782 = vmul.f32 %v1781, 1.442695
    %v1783 = vpow.pop %v1782
    %v1784 = vsel %vm238, %v1783, 0.0
    %1785 = vadd.xlane.f32.xlu0 %v1784
    %v1786 = vpop.xlane.xlu0 %1785
    %v1787 = vrcp.pop %v1786
    %v1788 = vmul.f32 %v1783, %v1787
    %1789 = vrot.lane.b32.xlu0 %v157, 60
    %v1790 = vpop.permute.xlu0 %1789
    %v1793 = vsel %vm238, %v1788, 0
    %1795 = vmatprep.subr.mxu0 0.0
    %1796 = vmatpush1.msra.mxu0 0.0
    %1797 = vmatprep.subr.mxu0 0.0
    %1798 = vmatpush1.msra.mxu0 0.0
    %1799 = vmatprep.subr.mxu0 0.0
    %1800 = vmatpush1.msra.mxu0 0.0
    %1801 = vmatprep.subr.mxu0 0.0
    %1802 = vmatpush1.msra.mxu0 0.0
    %1803 = vmatprep.subr.mxu0 0.0
    %1804 = vmatpush1.msra.mxu0 0.0
    %1805 = vmatprep.subr.mxu0 0.0
    %1806 = vmatpush1.msra.mxu0 0.0
    %1807 = vmatprep.subr.mxu0 0.0
    %1808 = vmatpush1.msra.mxu0 0.0
    %1809 = vmatprep.subr.mxu0 0.0
    %1810 = vmatpush1.msra.mxu0 0.0
    %1811 = vmatprep.subr.mxu0 0.0
    %1812 = vmatpush1.msra.mxu0 0.0
    %1813 = vmatprep.subr.mxu0 0.0
    %1814 = vmatpush1.msra.mxu0 0.0
    %1815 = vmatprep.subr.mxu0 0.0
    %1816 = vmatpush1.msra.mxu0 0.0
    %1817 = vmatprep.subr.mxu0 0.0
    %1818 = vmatpush1.msra.mxu0 0.0
    %1819 = vmatprep.subr.mxu0 0.0
    %1820 = vmatpush1.msra.mxu0 0.0
    %1821 = vmatprep.subr.mxu0 0.0
    %1822 = vmatpush1.msra.mxu0 0.0
    %1823 = vmatprep.subr.mxu0 0.0
    %1824 = vmatpush1.msra.mxu0 0.0
    %1825 = vmatprep.subr.mxu0 0.0
    %1826 = vmatpush1.msra.mxu0 %v1790
    %1827 = vmatprep.subr.mxu0 0.0
    %1828 = vmatpush2.msra.mxu0 0.0
    %1829 = vmatprep.subr.mxu0 0.0
    %1830 = vmatpush2.msra.mxu0 0.0
    %1831 = vmatprep.subr.mxu0 0.0
    %1832 = vmatpush2.msra.mxu0 0.0
    %1833 = vmatprep.subr.mxu0 0.0
    %1834 = vmatpush2.msra.mxu0 0.0
    %1835 = vmatprep.subr.mxu0 0.0
    %1836 = vmatpush2.msra.mxu0 0.0
    %1837 = vmatprep.subr.mxu0 0.0
    %1838 = vmatpush2.msra.mxu0 0.0
    %1839 = vmatprep.subr.mxu0 0.0
    %1840 = vmatpush2.msra.mxu0 0.0
    %1841 = vmatprep.subr.mxu0 0.0
    %1842 = vmatpush2.msra.mxu0 0.0
    %1843 = vmatprep.subr.mxu0 0.0
    %1844 = vmatpush2.msra.mxu0 0.0
    %1845 = vmatprep.subr.mxu0 0.0
    %1846 = vmatpush2.msra.mxu0 0.0
    %1847 = vmatprep.subr.mxu0 0.0
    %1848 = vmatpush2.msra.mxu0 0.0
    %1849 = vmatprep.subr.mxu0 0.0
    %1850 = vmatpush2.msra.mxu0 0.0
    %1851 = vmatprep.subr.mxu0 0.0
    %1852 = vmatpush2.msra.mxu0 0.0
    %1853 = vmatprep.subr.mxu0 0.0
    %1854 = vmatpush2.msra.mxu0 0.0
    %1855 = vmatprep.subr.mxu0 0.0
    %1856 = vmatpush2.msra.mxu0 0.0
    %1857 = vmatprep.subr.mxu0 0.0
    %1858 = vmatpush2.msra.mxu0 0.0
    %1859 = vmatprep.mubr.f32.mxu0 0.0
    %1860 = vmatmul.mubr.f32.gmra.mxu0 %v1793
    %v1861 = vpop.f32.mrf.mxu0
    %v1862 = vadd.f32 0.0, %v1861
    %v1863 = vpop.f32.mrf.mxu0
    %1864 = vdwg.mxu0
    %1866 = vrot.lane.b32.xlu0 %v1862, 4
    %v1867 = vpop.permute.xlu0 %1866
    %1869 = vst.msk [vmem:[#allocation2 + $0x8] sm:$0xff] %vm497, %v1867
    %v1870 = vadd.f32 %v1699, %v1788
    %1871 = vrot.lane.b32.xlu0 %v157, 120
    %v1872 = vpop.permute.xlu0 %1871
    %1873 = vrot.lane.b32.xlu0 %v157, 88
    %v1874 = vpop.permute.xlu0 %1873
    %v1875 = vsel %vm163, %v1872, 0
    %v1877 = vsel %vm163, %v1874, 0
    %1879 = vmatprep.subr.mxu0 0.0
    %1880 = vmatpush1.xpose.msra.mxu0 0.0
    %1881 = vmatprep.subr.mxu0 0.0
    %1882 = vmatpush1.xpose.msra.mxu0 0.0
    %1883 = vmatprep.subr.mxu0 0.0
    %1884 = vmatpush1.xpose.msra.mxu0 0.0
    %1885 = vmatprep.subr.mxu0 0.0
    %1886 = vmatpush1.xpose.msra.mxu0 0.0
    %1887 = vmatprep.subr.mxu0 0.0
    %1888 = vmatpush1.xpose.msra.mxu0 0.0
    %1889 = vmatprep.subr.mxu0 0.0
    %1890 = vmatpush1.xpose.msra.mxu0 0.0
    %1891 = vmatprep.subr.mxu0 0.0
    %1892 = vmatpush1.xpose.msra.mxu0 0.0
    %1893 = vmatprep.subr.mxu0 0.0
    %1894 = vmatpush1.xpose.msra.mxu0 0.0
    %1895 = vmatprep.subr.mxu0 0.0
    %1896 = vmatpush1.xpose.msra.mxu0 0.0
    %1897 = vmatprep.subr.mxu0 0.0
    %1898 = vmatpush1.xpose.msra.mxu0 0.0
    %1899 = vmatprep.subr.mxu0 0.0
    %1900 = vmatpush1.xpose.msra.mxu0 0.0
    %1901 = vmatprep.subr.mxu0 0.0
    %1902 = vmatpush1.xpose.msra.mxu0 0.0
    %1903 = vmatprep.subr.mxu0 0.0
    %1904 = vmatpush1.xpose.msra.mxu0 0.0
    %1905 = vmatprep.subr.mxu0 0.0
    %1906 = vmatpush1.xpose.msra.mxu0 0.0
    %1907 = vmatprep.subr.mxu0 0.0
    %1908 = vmatpush1.xpose.msra.mxu0 0.0
    %1909 = vmatprep.subr.mxu0 0.0
    %1910 = vmatpush1.xpose.msra.mxu0 %v1877
    %1911 = vmatprep.subr.mxu0 0.0
    %1912 = vmatpush2.xpose.msra.mxu0 0.0
    %1913 = vmatprep.subr.mxu0 0.0
    %1914 = vmatpush2.xpose.msra.mxu0 0.0
    %1915 = vmatprep.subr.mxu0 0.0
    %1916 = vmatpush2.xpose.msra.mxu0 0.0
    %1917 = vmatprep.subr.mxu0 0.0
    %1918 = vmatpush2.xpose.msra.mxu0 0.0
    %1919 = vmatprep.subr.mxu0 0.0
    %1920 = vmatpush2.xpose.msra.mxu0 0.0
    %1921 = vmatprep.subr.mxu0 0.0
    %1922 = vmatpush2.xpose.msra.mxu0 0.0
    %1923 = vmatprep.subr.mxu0 0.0
    %1924 = vmatpush2.xpose.msra.mxu0 0.0
    %1925 = vmatprep.subr.mxu0 0.0
    %1926 = vmatpush2.xpose.msra.mxu0 0.0
    %1927 = vmatprep.subr.mxu0 0.0
    %1928 = vmatpush2.xpose.msra.mxu0 0.0
    %1929 = vmatprep.subr.mxu0 0.0
    %1930 = vmatpush2.xpose.msra.mxu0 0.0
    %1931 = vmatprep.subr.mxu0 0.0
    %1932 = vmatpush2.xpose.msra.mxu0 0.0
    %1933 = vmatprep.subr.mxu0 0.0
    %1934 = vmatpush2.xpose.msra.mxu0 0.0
    %1935 = vmatprep.subr.mxu0 0.0
    %1936 = vmatpush2.xpose.msra.mxu0 0.0
    %1937 = vmatprep.subr.mxu0 0.0
    %1938 = vmatpush2.xpose.msra.mxu0 0.0
    %1939 = vmatprep.subr.mxu0 0.0
    %1940 = vmatpush2.xpose.msra.mxu0 0.0
    %1941 = vmatprep.subr.mxu0 0.0
    %1942 = vmatpush2.xpose.msra.mxu0 0.0
    %1943 = vmatprep.mubr.f32.mxu0 0.0
    %1944 = vmatmul.mubr.f32.gmra.mxu0 %v1875
    %v1945 = vpop.f32.mrf.mxu0
    %v1946 = vadd.f32 0.0, %v1945
    %v1947 = vpop.f32.mrf.mxu0
    %1948 = vdwg.mxu0
    %v1949 = vsel %vm238, %v1946, -inf
    %1950 = vmax.xlane.f32.xlu0 %v1949
    %v1951 = vpop.xlane.xlu0 %1950
    %v1952 = vsub.f32 %v1946, %v1951
    %v1953 = vmul.f32 %v1952, 1.442695
    %v1954 = vpow.pop %v1953
    %v1955 = vsel %vm238, %v1954, 0.0
    %1956 = vadd.xlane.f32.xlu0 %v1955
    %v1957 = vpop.xlane.xlu0 %1956
    %v1958 = vrcp.pop %v1957
    %v1959 = vmul.f32 %v1954, %v1958
    %1960 = vrot.lane.b32.xlu0 %v157, 56
    %v1961 = vpop.permute.xlu0 %1960
    %v1964 = vsel %vm238, %v1959, 0
    %1966 = vmatprep.subr.mxu0 0.0
    %1967 = vmatpush1.msra.mxu0 0.0
    %1968 = vmatprep.subr.mxu0 0.0
    %1969 = vmatpush1.msra.mxu0 0.0
    %1970 = vmatprep.subr.mxu0 0.0
    %1971 = vmatpush1.msra.mxu0 0.0
    %1972 = vmatprep.subr.mxu0 0.0
    %1973 = vmatpush1.msra.mxu0 0.0
    %1974 = vmatprep.subr.mxu0 0.0
    %1975 = vmatpush1.msra.mxu0 0.0
    %1976 = vmatprep.subr.mxu0 0.0
    %1977 = vmatpush1.msra.mxu0 0.0
    %1978 = vmatprep.subr.mxu0 0.0
    %1979 = vmatpush1.msra.mxu0 0.0
    %1980 = vmatprep.subr.mxu0 0.0
    %1981 = vmatpush1.msra.mxu0 0.0
    %1982 = vmatprep.subr.mxu0 0.0
    %1983 = vmatpush1.msra.mxu0 0.0
    %1984 = vmatprep.subr.mxu0 0.0
    %1985 = vmatpush1.msra.mxu0 0.0
    %1986 = vmatprep.subr.mxu0 0.0
    %1987 = vmatpush1.msra.mxu0 0.0
    %1988 = vmatprep.subr.mxu0 0.0
    %1989 = vmatpush1.msra.mxu0 0.0
    %1990 = vmatprep.subr.mxu0 0.0
    %1991 = vmatpush1.msra.mxu0 0.0
    %1992 = vmatprep.subr.mxu0 0.0
    %1993 = vmatpush1.msra.mxu0 0.0
    %1994 = vmatprep.subr.mxu0 0.0
    %1995 = vmatpush1.msra.mxu0 0.0
    %1996 = vmatprep.subr.mxu0 0.0
    %1997 = vmatpush1.msra.mxu0 %v1961
    %1998 = vmatprep.subr.mxu0 0.0
    %1999 = vmatpush2.msra.mxu0 0.0
    %2000 = vmatprep.subr.mxu0 0.0
    %2001 = vmatpush2.msra.mxu0 0.0
    %2002 = vmatprep.subr.mxu0 0.0
    %2003 = vmatpush2.msra.mxu0 0.0
    %2004 = vmatprep.subr.mxu0 0.0
    %2005 = vmatpush2.msra.mxu0 0.0
    %2006 = vmatprep.subr.mxu0 0.0
    %2007 = vmatpush2.msra.mxu0 0.0
    %2008 = vmatprep.subr.mxu0 0.0
    %2009 = vmatpush2.msra.mxu0 0.0
    %2010 = vmatprep.subr.mxu0 0.0
    %2011 = vmatpush2.msra.mxu0 0.0
    %2012 = vmatprep.subr.mxu0 0.0
    %2013 = vmatpush2.msra.mxu0 0.0
    %2014 = vmatprep.subr.mxu0 0.0
    %2015 = vmatpush2.msra.mxu0 0.0
    %2016 = vmatprep.subr.mxu0 0.0
    %2017 = vmatpush2.msra.mxu0 0.0
    %2018 = vmatprep.subr.mxu0 0.0
    %2019 = vmatpush2.msra.mxu0 0.0
    %2020 = vmatprep.subr.mxu0 0.0
    %2021 = vmatpush2.msra.mxu0 0.0
    %2022 = vmatprep.subr.mxu0 0.0
    %2023 = vmatpush2.msra.mxu0 0.0
    %2024 = vmatprep.subr.mxu0 0.0
    %2025 = vmatpush2.msra.mxu0 0.0
    %2026 = vmatprep.subr.mxu0 0.0
    %2027 = vmatpush2.msra.mxu0 0.0
    %2028 = vmatprep.subr.mxu0 0.0
    %2029 = vmatpush2.msra.mxu0 0.0
    %2030 = vmatprep.mubr.f32.mxu0 0.0
    %2031 = vmatmul.mubr.f32.gmra.mxu0 %v1964
    %v2032 = vpop.f32.mrf.mxu0
    %v2033 = vadd.f32 0.0, %v2032
    %v2034 = vpop.f32.mrf.mxu0
    %2035 = vdwg.mxu0
    %2037 = vrot.lane.b32.xlu0 %v2033, 8
    %v2038 = vpop.permute.xlu0 %2037
    %2040 = vst.msk [vmem:[#allocation2 + $0x8] sm:$0xff] %vm669, %v2038
    %v2041 = vadd.f32 %v1870, %v1959
    %2042 = vrot.lane.b32.xlu0 %v157, 116
    %v2043 = vpop.permute.xlu0 %2042
    %2044 = vrot.lane.b32.xlu0 %v157, 84
    %v2045 = vpop.permute.xlu0 %2044
    %v2046 = vsel %vm163, %v2043, 0
    %v2048 = vsel %vm163, %v2045, 0
    %2050 = vmatprep.subr.mxu0 0.0
    %2051 = vmatpush1.xpose.msra.mxu0 0.0
    %2052 = vmatprep.subr.mxu0 0.0
    %2053 = vmatpush1.xpose.msra.mxu0 0.0
    %2054 = vmatprep.subr.mxu0 0.0
    %2055 = vmatpush1.xpose.msra.mxu0 0.0
    %2056 = vmatprep.subr.mxu0 0.0
    %2057 = vmatpush1.xpose.msra.mxu0 0.0
    %2058 = vmatprep.subr.mxu0 0.0
    %2059 = vmatpush1.xpose.msra.mxu0 0.0
    %2060 = vmatprep.subr.mxu0 0.0
    %2061 = vmatpush1.xpose.msra.mxu0 0.0
    %2062 = vmatprep.subr.mxu0 0.0
    %2063 = vmatpush1.xpose.msra.mxu0 0.0
    %2064 = vmatprep.subr.mxu0 0.0
    %2065 = vmatpush1.xpose.msra.mxu0 0.0
    %2066 = vmatprep.subr.mxu0 0.0
    %2067 = vmatpush1.xpose.msra.mxu0 0.0
    %2068 = vmatprep.subr.mxu0 0.0
    %2069 = vmatpush1.xpose.msra.mxu0 0.0
    %2070 = vmatprep.subr.mxu0 0.0
    %2071 = vmatpush1.xpose.msra.mxu0 0.0
    %2072 = vmatprep.subr.mxu0 0.0
    %2073 = vmatpush1.xpose.msra.mxu0 0.0
    %2074 = vmatprep.subr.mxu0 0.0
    %2075 = vmatpush1.xpose.msra.mxu0 0.0
    %2076 = vmatprep.subr.mxu0 0.0
    %2077 = vmatpush1.xpose.msra.mxu0 0.0
    %2078 = vmatprep.subr.mxu0 0.0
    %2079 = vmatpush1.xpose.msra.mxu0 0.0
    %2080 = vmatprep.subr.mxu0 0.0
    %2081 = vmatpush1.xpose.msra.mxu0 %v2048
    %2082 = vmatprep.subr.mxu0 0.0
    %2083 = vmatpush2.xpose.msra.mxu0 0.0
    %2084 = vmatprep.subr.mxu0 0.0
    %2085 = vmatpush2.xpose.msra.mxu0 0.0
    %2086 = vmatprep.subr.mxu0 0.0
    %2087 = vmatpush2.xpose.msra.mxu0 0.0
    %2088 = vmatprep.subr.mxu0 0.0
    %2089 = vmatpush2.xpose.msra.mxu0 0.0
    %2090 = vmatprep.subr.mxu0 0.0
    %2091 = vmatpush2.xpose.msra.mxu0 0.0
    %2092 = vmatprep.subr.mxu0 0.0
    %2093 = vmatpush2.xpose.msra.mxu0 0.0
    %2094 = vmatprep.subr.mxu0 0.0
    %2095 = vmatpush2.xpose.msra.mxu0 0.0
    %2096 = vmatprep.subr.mxu0 0.0
    %2097 = vmatpush2.xpose.msra.mxu0 0.0
    %2098 = vmatprep.subr.mxu0 0.0
    %2099 = vmatpush2.xpose.msra.mxu0 0.0
    %2100 = vmatprep.subr.mxu0 0.0
    %2101 = vmatpush2.xpose.msra.mxu0 0.0
    %2102 = vmatprep.subr.mxu0 0.0
    %2103 = vmatpush2.xpose.msra.mxu0 0.0
    %2104 = vmatprep.subr.mxu0 0.0
    %2105 = vmatpush2.xpose.msra.mxu0 0.0
    %2106 = vmatprep.subr.mxu0 0.0
    %2107 = vmatpush2.xpose.msra.mxu0 0.0
    %2108 = vmatprep.subr.mxu0 0.0
    %2109 = vmatpush2.xpose.msra.mxu0 0.0
    %2110 = vmatprep.subr.mxu0 0.0
    %2111 = vmatpush2.xpose.msra.mxu0 0.0
    %2112 = vmatprep.subr.mxu0 0.0
    %2113 = vmatpush2.xpose.msra.mxu0 0.0
    %2114 = vmatprep.mubr.f32.mxu0 0.0
    %2115 = vmatmul.mubr.f32.gmra.mxu0 %v2046
    %v2116 = vpop.f32.mrf.mxu0
    %v2117 = vadd.f32 0.0, %v2116
    %v2118 = vpop.f32.mrf.mxu0
    %2119 = vdwg.mxu0
    %v2120 = vsel %vm238, %v2117, -inf
    %2121 = vmax.xlane.f32.xlu0 %v2120
    %v2122 = vpop.xlane.xlu0 %2121
    %v2123 = vsub.f32 %v2117, %v2122
    %v2124 = vmul.f32 %v2123, 1.442695
    %v2125 = vpow.pop %v2124
    %v2126 = vsel %vm238, %v2125, 0.0
    %2127 = vadd.xlane.f32.xlu0 %v2126
    %v2128 = vpop.xlane.xlu0 %2127
    %v2129 = vrcp.pop %v2128
    %v2130 = vmul.f32 %v2125, %v2129
    %2131 = vrot.lane.b32.xlu0 %v157, 52
    %v2132 = vpop.permute.xlu0 %2131
    %v2135 = vsel %vm238, %v2130, 0
    %2137 = vmatprep.subr.mxu0 0.0
    %2138 = vmatpush1.msra.mxu0 0.0
    %2139 = vmatprep.subr.mxu0 0.0
    %2140 = vmatpush1.msra.mxu0 0.0
    %2141 = vmatprep.subr.mxu0 0.0
    %2142 = vmatpush1.msra.mxu0 0.0
    %2143 = vmatprep.subr.mxu0 0.0
    %2144 = vmatpush1.msra.mxu0 0.0
    %2145 = vmatprep.subr.mxu0 0.0
    %2146 = vmatpush1.msra.mxu0 0.0
    %2147 = vmatprep.subr.mxu0 0.0
    %2148 = vmatpush1.msra.mxu0 0.0
    %2149 = vmatprep.subr.mxu0 0.0
    %2150 = vmatpush1.msra.mxu0 0.0
    %2151 = vmatprep.subr.mxu0 0.0
    %2152 = vmatpush1.msra.mxu0 0.0
    %2153 = vmatprep.subr.mxu0 0.0
    %2154 = vmatpush1.msra.mxu0 0.0
    %2155 = vmatprep.subr.mxu0 0.0
    %2156 = vmatpush1.msra.mxu0 0.0
    %2157 = vmatprep.subr.mxu0 0.0
    %2158 = vmatpush1.msra.mxu0 0.0
    %2159 = vmatprep.subr.mxu0 0.0
    %2160 = vmatpush1.msra.mxu0 0.0
    %2161 = vmatprep.subr.mxu0 0.0
    %2162 = vmatpush1.msra.mxu0 0.0
    %2163 = vmatprep.subr.mxu0 0.0
    %2164 = vmatpush1.msra.mxu0 0.0
    %2165 = vmatprep.subr.mxu0 0.0
    %2166 = vmatpush1.msra.mxu0 0.0
    %2167 = vmatprep.subr.mxu0 0.0
    %2168 = vmatpush1.msra.mxu0 %v2132
    %2169 = vmatprep.subr.mxu0 0.0
    %2170 = vmatpush2.msra.mxu0 0.0
    %2171 = vmatprep.subr.mxu0 0.0
    %2172 = vmatpush2.msra.mxu0 0.0
    %2173 = vmatprep.subr.mxu0 0.0
    %2174 = vmatpush2.msra.mxu0 0.0
    %2175 = vmatprep.subr.mxu0 0.0
    %2176 = vmatpush2.msra.mxu0 0.0
    %2177 = vmatprep.subr.mxu0 0.0
    %2178 = vmatpush2.msra.mxu0 0.0
    %2179 = vmatprep.subr.mxu0 0.0
    %2180 = vmatpush2.msra.mxu0 0.0
    %2181 = vmatprep.subr.mxu0 0.0
    %2182 = vmatpush2.msra.mxu0 0.0
    %2183 = vmatprep.subr.mxu0 0.0
    %2184 = vmatpush2.msra.mxu0 0.0
    %2185 = vmatprep.subr.mxu0 0.0
    %2186 = vmatpush2.msra.mxu0 0.0
    %2187 = vmatprep.subr.mxu0 0.0
    %2188 = vmatpush2.msra.mxu0 0.0
    %2189 = vmatprep.subr.mxu0 0.0
    %2190 = vmatpush2.msra.mxu0 0.0
    %2191 = vmatprep.subr.mxu0 0.0
    %2192 = vmatpush2.msra.mxu0 0.0
    %2193 = vmatprep.subr.mxu0 0.0
    %2194 = vmatpush2.msra.mxu0 0.0
    %2195 = vmatprep.subr.mxu0 0.0
    %2196 = vmatpush2.msra.mxu0 0.0
    %2197 = vmatprep.subr.mxu0 0.0
    %2198 = vmatpush2.msra.mxu0 0.0
    %2199 = vmatprep.subr.mxu0 0.0
    %2200 = vmatpush2.msra.mxu0 0.0
    %2201 = vmatprep.mubr.f32.mxu0 0.0
    %2202 = vmatmul.mubr.f32.gmra.mxu0 %v2135
    %v2203 = vpop.f32.mrf.mxu0
    %v2204 = vadd.f32 0.0, %v2203
    %v2205 = vpop.f32.mrf.mxu0
    %2206 = vdwg.mxu0
    %2208 = vrot.lane.b32.xlu0 %v2204, 12
    %v2209 = vpop.permute.xlu0 %2208
    %2211 = vst.msk [vmem:[#allocation2 + $0x8] sm:$0xff] %vm841, %v2209
    %v2212 = vadd.f32 %v2041, %v2130
    %2213 = vrot.lane.b32.xlu0 %v157, 112
    %v2214 = vpop.permute.xlu0 %2213
    %2215 = vrot.lane.b32.xlu0 %v157, 80
    %v2216 = vpop.permute.xlu0 %2215
    %v2217 = vsel %vm163, %v2214, 0
    %v2219 = vsel %vm163, %v2216, 0
    %2221 = vmatprep.subr.mxu0 0.0
    %2222 = vmatpush1.xpose.msra.mxu0 0.0
    %2223 = vmatprep.subr.mxu0 0.0
    %2224 = vmatpush1.xpose.msra.mxu0 0.0
    %2225 = vmatprep.subr.mxu0 0.0
    %2226 = vmatpush1.xpose.msra.mxu0 0.0
    %2227 = vmatprep.subr.mxu0 0.0
    %2228 = vmatpush1.xpose.msra.mxu0 0.0
    %2229 = vmatprep.subr.mxu0 0.0
    %2230 = vmatpush1.xpose.msra.mxu0 0.0
    %2231 = vmatprep.subr.mxu0 0.0
    %2232 = vmatpush1.xpose.msra.mxu0 0.0
    %2233 = vmatprep.subr.mxu0 0.0
    %2234 = vmatpush1.xpose.msra.mxu0 0.0
    %2235 = vmatprep.subr.mxu0 0.0
    %2236 = vmatpush1.xpose.msra.mxu0 0.0
    %2237 = vmatprep.subr.mxu0 0.0
    %2238 = vmatpush1.xpose.msra.mxu0 0.0
    %2239 = vmatprep.subr.mxu0 0.0
    %2240 = vmatpush1.xpose.msra.mxu0 0.0
    %2241 = vmatprep.subr.mxu0 0.0
    %2242 = vmatpush1.xpose.msra.mxu0 0.0
    %2243 = vmatprep.subr.mxu0 0.0
    %2244 = vmatpush1.xpose.msra.mxu0 0.0
    %2245 = vmatprep.subr.mxu0 0.0
    %2246 = vmatpush1.xpose.msra.mxu0 0.0
    %2247 = vmatprep.subr.mxu0 0.0
    %2248 = vmatpush1.xpose.msra.mxu0 0.0
    %2249 = vmatprep.subr.mxu0 0.0
    %2250 = vmatpush1.xpose.msra.mxu0 0.0
    %2251 = vmatprep.subr.mxu0 0.0
    %2252 = vmatpush1.xpose.msra.mxu0 %v2219
    %2253 = vmatprep.subr.mxu0 0.0
    %2254 = vmatpush2.xpose.msra.mxu0 0.0
    %2255 = vmatprep.subr.mxu0 0.0
    %2256 = vmatpush2.xpose.msra.mxu0 0.0
    %2257 = vmatprep.subr.mxu0 0.0
    %2258 = vmatpush2.xpose.msra.mxu0 0.0
    %2259 = vmatprep.subr.mxu0 0.0
    %2260 = vmatpush2.xpose.msra.mxu0 0.0
    %2261 = vmatprep.subr.mxu0 0.0
    %2262 = vmatpush2.xpose.msra.mxu0 0.0
    %2263 = vmatprep.subr.mxu0 0.0
    %2264 = vmatpush2.xpose.msra.mxu0 0.0
    %2265 = vmatprep.subr.mxu0 0.0
    %2266 = vmatpush2.xpose.msra.mxu0 0.0
    %2267 = vmatprep.subr.mxu0 0.0
    %2268 = vmatpush2.xpose.msra.mxu0 0.0
    %2269 = vmatprep.subr.mxu0 0.0
    %2270 = vmatpush2.xpose.msra.mxu0 0.0
    %2271 = vmatprep.subr.mxu0 0.0
    %2272 = vmatpush2.xpose.msra.mxu0 0.0
    %2273 = vmatprep.subr.mxu0 0.0
    %2274 = vmatpush2.xpose.msra.mxu0 0.0
    %2275 = vmatprep.subr.mxu0 0.0
    %2276 = vmatpush2.xpose.msra.mxu0 0.0
    %2277 = vmatprep.subr.mxu0 0.0
    %2278 = vmatpush2.xpose.msra.mxu0 0.0
    %2279 = vmatprep.subr.mxu0 0.0
    %2280 = vmatpush2.xpose.msra.mxu0 0.0
    %2281 = vmatprep.subr.mxu0 0.0
    %2282 = vmatpush2.xpose.msra.mxu0 0.0
    %2283 = vmatprep.subr.mxu0 0.0
    %2284 = vmatpush2.xpose.msra.mxu0 0.0
    %2285 = vmatprep.mubr.f32.mxu0 0.0
    %2286 = vmatmul.mubr.f32.gmra.mxu0 %v2217
    %v2287 = vpop.f32.mrf.mxu0
    %v2288 = vadd.f32 0.0, %v2287
    %v2289 = vpop.f32.mrf.mxu0
    %2290 = vdwg.mxu0
    %v2291 = vsel %vm238, %v2288, -inf
    %2292 = vmax.xlane.f32.xlu0 %v2291
    %v2293 = vpop.xlane.xlu0 %2292
    %v2294 = vsub.f32 %v2288, %v2293
    %v2295 = vmul.f32 %v2294, 1.442695
    %v2296 = vpow.pop %v2295
    %v2297 = vsel %vm238, %v2296, 0.0
    %2298 = vadd.xlane.f32.xlu0 %v2297
    %v2299 = vpop.xlane.xlu0 %2298
    %v2300 = vrcp.pop %v2299
    %v2301 = vmul.f32 %v2296, %v2300
    %2302 = vrot.lane.b32.xlu0 %v157, 48
    %v2303 = vpop.permute.xlu0 %2302
    %v2306 = vsel %vm238, %v2301, 0
    %2308 = vmatprep.subr.mxu0 0.0
    %2309 = vmatpush1.msra.mxu0 0.0
    %2310 = vmatprep.subr.mxu0 0.0
    %2311 = vmatpush1.msra.mxu0 0.0
    %2312 = vmatprep.subr.mxu0 0.0
    %2313 = vmatpush1.msra.mxu0 0.0
    %2314 = vmatprep.subr.mxu0 0.0
    %2315 = vmatpush1.msra.mxu0 0.0
    %2316 = vmatprep.subr.mxu0 0.0
    %2317 = vmatpush1.msra.mxu0 0.0
    %2318 = vmatprep.subr.mxu0 0.0
    %2319 = vmatpush1.msra.mxu0 0.0
    %2320 = vmatprep.subr.mxu0 0.0
    %2321 = vmatpush1.msra.mxu0 0.0
    %2322 = vmatprep.subr.mxu0 0.0
    %2323 = vmatpush1.msra.mxu0 0.0
    %2324 = vmatprep.subr.mxu0 0.0
    %2325 = vmatpush1.msra.mxu0 0.0
    %2326 = vmatprep.subr.mxu0 0.0
    %2327 = vmatpush1.msra.mxu0 0.0
    %2328 = vmatprep.subr.mxu0 0.0
    %2329 = vmatpush1.msra.mxu0 0.0
    %2330 = vmatprep.subr.mxu0 0.0
    %2331 = vmatpush1.msra.mxu0 0.0
    %2332 = vmatprep.subr.mxu0 0.0
    %2333 = vmatpush1.msra.mxu0 0.0
    %2334 = vmatprep.subr.mxu0 0.0
    %2335 = vmatpush1.msra.mxu0 0.0
    %2336 = vmatprep.subr.mxu0 0.0
    %2337 = vmatpush1.msra.mxu0 0.0
    %2338 = vmatprep.subr.mxu0 0.0
    %2339 = vmatpush1.msra.mxu0 %v2303
    %2340 = vmatprep.subr.mxu0 0.0
    %2341 = vmatpush2.msra.mxu0 0.0
    %2342 = vmatprep.subr.mxu0 0.0
    %2343 = vmatpush2.msra.mxu0 0.0
    %2344 = vmatprep.subr.mxu0 0.0
    %2345 = vmatpush2.msra.mxu0 0.0
    %2346 = vmatprep.subr.mxu0 0.0
    %2347 = vmatpush2.msra.mxu0 0.0
    %2348 = vmatprep.subr.mxu0 0.0
    %2349 = vmatpush2.msra.mxu0 0.0
    %2350 = vmatprep.subr.mxu0 0.0
    %2351 = vmatpush2.msra.mxu0 0.0
    %2352 = vmatprep.subr.mxu0 0.0
    %2353 = vmatpush2.msra.mxu0 0.0
    %2354 = vmatprep.subr.mxu0 0.0
    %2355 = vmatpush2.msra.mxu0 0.0
    %2356 = vmatprep.subr.mxu0 0.0
    %2357 = vmatpush2.msra.mxu0 0.0
    %2358 = vmatprep.subr.mxu0 0.0
    %2359 = vmatpush2.msra.mxu0 0.0
    %2360 = vmatprep.subr.mxu0 0.0
    %2361 = vmatpush2.msra.mxu0 0.0
    %2362 = vmatprep.subr.mxu0 0.0
    %2363 = vmatpush2.msra.mxu0 0.0
    %2364 = vmatprep.subr.mxu0 0.0
    %2365 = vmatpush2.msra.mxu0 0.0
    %2366 = vmatprep.subr.mxu0 0.0
    %2367 = vmatpush2.msra.mxu0 0.0
    %2368 = vmatprep.subr.mxu0 0.0
    %2369 = vmatpush2.msra.mxu0 0.0
    %2370 = vmatprep.subr.mxu0 0.0
    %2371 = vmatpush2.msra.mxu0 0.0
    %2372 = vmatprep.mubr.f32.mxu0 0.0
    %2373 = vmatmul.mubr.f32.gmra.mxu0 %v2306
    %v2374 = vpop.f32.mrf.mxu0
    %v2375 = vadd.f32 0.0, %v2374
    %v2376 = vpop.f32.mrf.mxu0
    %2377 = vdwg.mxu0
    %2379 = vrot.lane.b32.xlu0 %v2375, 16
    %v2380 = vpop.permute.xlu0 %2379
    %2382 = vst.msk [vmem:[#allocation2 + $0x8] sm:$0xff] %vm1013, %v2380
    %v2383 = vadd.f32 %v2212, %v2301
    %2384 = vrot.lane.b32.xlu0 %v157, 108
    %v2385 = vpop.permute.xlu0 %2384
    %2386 = vrot.lane.b32.xlu0 %v157, 76
    %v2387 = vpop.permute.xlu0 %2386
    %v2388 = vsel %vm163, %v2385, 0
    %v2390 = vsel %vm163, %v2387, 0
    %2392 = vmatprep.subr.mxu0 0.0
    %2393 = vmatpush1.xpose.msra.mxu0 0.0
    %2394 = vmatprep.subr.mxu0 0.0
    %2395 = vmatpush1.xpose.msra.mxu0 0.0
    %2396 = vmatprep.subr.mxu0 0.0
    %2397 = vmatpush1.xpose.msra.mxu0 0.0
    %2398 = vmatprep.subr.mxu0 0.0
    %2399 = vmatpush1.xpose.msra.mxu0 0.0
    %2400 = vmatprep.subr.mxu0 0.0
    %2401 = vmatpush1.xpose.msra.mxu0 0.0
    %2402 = vmatprep.subr.mxu0 0.0
    %2403 = vmatpush1.xpose.msra.mxu0 0.0
    %2404 = vmatprep.subr.mxu0 0.0
    %2405 = vmatpush1.xpose.msra.mxu0 0.0
    %2406 = vmatprep.subr.mxu0 0.0
    %2407 = vmatpush1.xpose.msra.mxu0 0.0
    %2408 = vmatprep.subr.mxu0 0.0
    %2409 = vmatpush1.xpose.msra.mxu0 0.0
    %2410 = vmatprep.subr.mxu0 0.0
    %2411 = vmatpush1.xpose.msra.mxu0 0.0
    %2412 = vmatprep.subr.mxu0 0.0
    %2413 = vmatpush1.xpose.msra.mxu0 0.0
    %2414 = vmatprep.subr.mxu0 0.0
    %2415 = vmatpush1.xpose.msra.mxu0 0.0
    %2416 = vmatprep.subr.mxu0 0.0
    %2417 = vmatpush1.xpose.msra.mxu0 0.0
    %2418 = vmatprep.subr.mxu0 0.0
    %2419 = vmatpush1.xpose.msra.mxu0 0.0
    %2420 = vmatprep.subr.mxu0 0.0
    %2421 = vmatpush1.xpose.msra.mxu0 0.0
    %2422 = vmatprep.subr.mxu0 0.0
    %2423 = vmatpush1.xpose.msra.mxu0 %v2390
    %2424 = vmatprep.subr.mxu0 0.0
    %2425 = vmatpush2.xpose.msra.mxu0 0.0
    %2426 = vmatprep.subr.mxu0 0.0
    %2427 = vmatpush2.xpose.msra.mxu0 0.0
    %2428 = vmatprep.subr.mxu0 0.0
    %2429 = vmatpush2.xpose.msra.mxu0 0.0
    %2430 = vmatprep.subr.mxu0 0.0
    %2431 = vmatpush2.xpose.msra.mxu0 0.0
    %2432 = vmatprep.subr.mxu0 0.0
    %2433 = vmatpush2.xpose.msra.mxu0 0.0
    %2434 = vmatprep.subr.mxu0 0.0
    %2435 = vmatpush2.xpose.msra.mxu0 0.0
    %2436 = vmatprep.subr.mxu0 0.0
    %2437 = vmatpush2.xpose.msra.mxu0 0.0
    %2438 = vmatprep.subr.mxu0 0.0
    %2439 = vmatpush2.xpose.msra.mxu0 0.0
    %2440 = vmatprep.subr.mxu0 0.0
    %2441 = vmatpush2.xpose.msra.mxu0 0.0
    %2442 = vmatprep.subr.mxu0 0.0
    %2443 = vmatpush2.xpose.msra.mxu0 0.0
    %2444 = vmatprep.subr.mxu0 0.0
    %2445 = vmatpush2.xpose.msra.mxu0 0.0
    %2446 = vmatprep.subr.mxu0 0.0
    %2447 = vmatpush2.xpose.msra.mxu0 0.0
    %2448 = vmatprep.subr.mxu0 0.0
    %2449 = vmatpush2.xpose.msra.mxu0 0.0
    %2450 = vmatprep.subr.mxu0 0.0
    %2451 = vmatpush2.xpose.msra.mxu0 0.0
    %2452 = vmatprep.subr.mxu0 0.0
    %2453 = vmatpush2.xpose.msra.mxu0 0.0
    %2454 = vmatprep.subr.mxu0 0.0
    %2455 = vmatpush2.xpose.msra.mxu0 0.0
    %2456 = vmatprep.mubr.f32.mxu0 0.0
    %2457 = vmatmul.mubr.f32.gmra.mxu0 %v2388
    %v2458 = vpop.f32.mrf.mxu0
    %v2459 = vadd.f32 0.0, %v2458
    %v2460 = vpop.f32.mrf.mxu0
    %2461 = vdwg.mxu0
    %v2462 = vsel %vm238, %v2459, -inf
    %2463 = vmax.xlane.f32.xlu0 %v2462
    %v2464 = vpop.xlane.xlu0 %2463
    %v2465 = vsub.f32 %v2459, %v2464
    %v2466 = vmul.f32 %v2465, 1.442695
    %v2467 = vpow.pop %v2466
    %v2468 = vsel %vm238, %v2467, 0.0
    %2469 = vadd.xlane.f32.xlu0 %v2468
    %v2470 = vpop.xlane.xlu0 %2469
    %v2471 = vrcp.pop %v2470
    %v2472 = vmul.f32 %v2467, %v2471
    %2473 = vrot.lane.b32.xlu0 %v157, 44
    %v2474 = vpop.permute.xlu0 %2473
    %v2477 = vsel %vm238, %v2472, 0
    %2479 = vmatprep.subr.mxu0 0.0
    %2480 = vmatpush1.msra.mxu0 0.0
    %2481 = vmatprep.subr.mxu0 0.0
    %2482 = vmatpush1.msra.mxu0 0.0
    %2483 = vmatprep.subr.mxu0 0.0
    %2484 = vmatpush1.msra.mxu0 0.0
    %2485 = vmatprep.subr.mxu0 0.0
    %2486 = vmatpush1.msra.mxu0 0.0
    %2487 = vmatprep.subr.mxu0 0.0
    %2488 = vmatpush1.msra.mxu0 0.0
    %2489 = vmatprep.subr.mxu0 0.0
    %2490 = vmatpush1.msra.mxu0 0.0
    %2491 = vmatprep.subr.mxu0 0.0
    %2492 = vmatpush1.msra.mxu0 0.0
    %2493 = vmatprep.subr.mxu0 0.0
    %2494 = vmatpush1.msra.mxu0 0.0
    %2495 = vmatprep.subr.mxu0 0.0
    %2496 = vmatpush1.msra.mxu0 0.0
    %2497 = vmatprep.subr.mxu0 0.0
    %2498 = vmatpush1.msra.mxu0 0.0
    %2499 = vmatprep.subr.mxu0 0.0
    %2500 = vmatpush1.msra.mxu0 0.0
    %2501 = vmatprep.subr.mxu0 0.0
    %2502 = vmatpush1.msra.mxu0 0.0
    %2503 = vmatprep.subr.mxu0 0.0
    %2504 = vmatpush1.msra.mxu0 0.0
    %2505 = vmatprep.subr.mxu0 0.0
    %2506 = vmatpush1.msra.mxu0 0.0
    %2507 = vmatprep.subr.mxu0 0.0
    %2508 = vmatpush1.msra.mxu0 0.0
    %2509 = vmatprep.subr.mxu0 0.0
    %2510 = vmatpush1.msra.mxu0 %v2474
    %2511 = vmatprep.subr.mxu0 0.0
    %2512 = vmatpush2.msra.mxu0 0.0
    %2513 = vmatprep.subr.mxu0 0.0
    %2514 = vmatpush2.msra.mxu0 0.0
    %2515 = vmatprep.subr.mxu0 0.0
    %2516 = vmatpush2.msra.mxu0 0.0
    %2517 = vmatprep.subr.mxu0 0.0
    %2518 = vmatpush2.msra.mxu0 0.0
    %2519 = vmatprep.subr.mxu0 0.0
    %2520 = vmatpush2.msra.mxu0 0.0
    %2521 = vmatprep.subr.mxu0 0.0
    %2522 = vmatpush2.msra.mxu0 0.0
    %2523 = vmatprep.subr.mxu0 0.0
    %2524 = vmatpush2.msra.mxu0 0.0
    %2525 = vmatprep.subr.mxu0 0.0
    %2526 = vmatpush2.msra.mxu0 0.0
    %2527 = vmatprep.subr.mxu0 0.0
    %2528 = vmatpush2.msra.mxu0 0.0
    %2529 = vmatprep.subr.mxu0 0.0
    %2530 = vmatpush2.msra.mxu0 0.0
    %2531 = vmatprep.subr.mxu0 0.0
    %2532 = vmatpush2.msra.mxu0 0.0
    %2533 = vmatprep.subr.mxu0 0.0
    %2534 = vmatpush2.msra.mxu0 0.0
    %2535 = vmatprep.subr.mxu0 0.0
    %2536 = vmatpush2.msra.mxu0 0.0
    %2537 = vmatprep.subr.mxu0 0.0
    %2538 = vmatpush2.msra.mxu0 0.0
    %2539 = vmatprep.subr.mxu0 0.0
    %2540 = vmatpush2.msra.mxu0 0.0
    %2541 = vmatprep.subr.mxu0 0.0
    %2542 = vmatpush2.msra.mxu0 0.0
    %2543 = vmatprep.mubr.f32.mxu0 0.0
    %2544 = vmatmul.mubr.f32.gmra.mxu0 %v2477
    %v2545 = vpop.f32.mrf.mxu0
    %v2546 = vadd.f32 0.0, %v2545
    %v2547 = vpop.f32.mrf.mxu0
    %2548 = vdwg.mxu0
    %2550 = vrot.lane.b32.xlu0 %v2546, 20
    %v2551 = vpop.permute.xlu0 %2550
    %2553 = vst.msk [vmem:[#allocation2 + $0x8] sm:$0xff] %vm1185, %v2551
    %v2554 = vadd.f32 %v2383, %v2472
    %2555 = vrot.lane.b32.xlu0 %v157, 104
    %v2556 = vpop.permute.xlu0 %2555
    %2557 = vrot.lane.b32.xlu0 %v157, 72
    %v2558 = vpop.permute.xlu0 %2557
    %v2559 = vsel %vm163, %v2556, 0
    %v2561 = vsel %vm163, %v2558, 0
    %2563 = vmatprep.subr.mxu0 0.0
    %2564 = vmatpush1.xpose.msra.mxu0 0.0
    %2565 = vmatprep.subr.mxu0 0.0
    %2566 = vmatpush1.xpose.msra.mxu0 0.0
    %2567 = vmatprep.subr.mxu0 0.0
    %2568 = vmatpush1.xpose.msra.mxu0 0.0
    %2569 = vmatprep.subr.mxu0 0.0
    %2570 = vmatpush1.xpose.msra.mxu0 0.0
    %2571 = vmatprep.subr.mxu0 0.0
    %2572 = vmatpush1.xpose.msra.mxu0 0.0
    %2573 = vmatprep.subr.mxu0 0.0
    %2574 = vmatpush1.xpose.msra.mxu0 0.0
    %2575 = vmatprep.subr.mxu0 0.0
    %2576 = vmatpush1.xpose.msra.mxu0 0.0
    %2577 = vmatprep.subr.mxu0 0.0
    %2578 = vmatpush1.xpose.msra.mxu0 0.0
    %2579 = vmatprep.subr.mxu0 0.0
    %2580 = vmatpush1.xpose.msra.mxu0 0.0
    %2581 = vmatprep.subr.mxu0 0.0
    %2582 = vmatpush1.xpose.msra.mxu0 0.0
    %2583 = vmatprep.subr.mxu0 0.0
    %2584 = vmatpush1.xpose.msra.mxu0 0.0
    %2585 = vmatprep.subr.mxu0 0.0
    %2586 = vmatpush1.xpose.msra.mxu0 0.0
    %2587 = vmatprep.subr.mxu0 0.0
    %2588 = vmatpush1.xpose.msra.mxu0 0.0
    %2589 = vmatprep.subr.mxu0 0.0
    %2590 = vmatpush1.xpose.msra.mxu0 0.0
    %2591 = vmatprep.subr.mxu0 0.0
    %2592 = vmatpush1.xpose.msra.mxu0 0.0
    %2593 = vmatprep.subr.mxu0 0.0
    %2594 = vmatpush1.xpose.msra.mxu0 %v2561
    %2595 = vmatprep.subr.mxu0 0.0
    %2596 = vmatpush2.xpose.msra.mxu0 0.0
    %2597 = vmatprep.subr.mxu0 0.0
    %2598 = vmatpush2.xpose.msra.mxu0 0.0
    %2599 = vmatprep.subr.mxu0 0.0
    %2600 = vmatpush2.xpose.msra.mxu0 0.0
    %2601 = vmatprep.subr.mxu0 0.0
    %2602 = vmatpush2.xpose.msra.mxu0 0.0
    %2603 = vmatprep.subr.mxu0 0.0
    %2604 = vmatpush2.xpose.msra.mxu0 0.0
    %2605 = vmatprep.subr.mxu0 0.0
    %2606 = vmatpush2.xpose.msra.mxu0 0.0
    %2607 = vmatprep.subr.mxu0 0.0
    %2608 = vmatpush2.xpose.msra.mxu0 0.0
    %2609 = vmatprep.subr.mxu0 0.0
    %2610 = vmatpush2.xpose.msra.mxu0 0.0
    %2611 = vmatprep.subr.mxu0 0.0
    %2612 = vmatpush2.xpose.msra.mxu0 0.0
    %2613 = vmatprep.subr.mxu0 0.0
    %2614 = vmatpush2.xpose.msra.mxu0 0.0
    %2615 = vmatprep.subr.mxu0 0.0
    %2616 = vmatpush2.xpose.msra.mxu0 0.0
    %2617 = vmatprep.subr.mxu0 0.0
    %2618 = vmatpush2.xpose.msra.mxu0 0.0
    %2619 = vmatprep.subr.mxu0 0.0
    %2620 = vmatpush2.xpose.msra.mxu0 0.0
    %2621 = vmatprep.subr.mxu0 0.0
    %2622 = vmatpush2.xpose.msra.mxu0 0.0
    %2623 = vmatprep.subr.mxu0 0.0
    %2624 = vmatpush2.xpose.msra.mxu0 0.0
    %2625 = vmatprep.subr.mxu0 0.0
    %2626 = vmatpush2.xpose.msra.mxu0 0.0
    %2627 = vmatprep.mubr.f32.mxu0 0.0
    %2628 = vmatmul.mubr.f32.gmra.mxu0 %v2559
    %v2629 = vpop.f32.mrf.mxu0
    %v2630 = vadd.f32 0.0, %v2629
    %v2631 = vpop.f32.mrf.mxu0
    %2632 = vdwg.mxu0
    %v2633 = vsel %vm238, %v2630, -inf
    %2634 = vmax.xlane.f32.xlu0 %v2633
    %v2635 = vpop.xlane.xlu0 %2634
    %v2636 = vsub.f32 %v2630, %v2635
    %v2637 = vmul.f32 %v2636, 1.442695
    %v2638 = vpow.pop %v2637
    %v2639 = vsel %vm238, %v2638, 0.0
    %2640 = vadd.xlane.f32.xlu0 %v2639
    %v2641 = vpop.xlane.xlu0 %2640
    %v2642 = vrcp.pop %v2641
    %v2643 = vmul.f32 %v2638, %v2642
    %2644 = vrot.lane.b32.xlu0 %v157, 40
    %v2645 = vpop.permute.xlu0 %2644
    %v2648 = vsel %vm238, %v2643, 0
    %2650 = vmatprep.subr.mxu0 0.0
    %2651 = vmatpush1.msra.mxu0 0.0
    %2652 = vmatprep.subr.mxu0 0.0
    %2653 = vmatpush1.msra.mxu0 0.0
    %2654 = vmatprep.subr.mxu0 0.0
    %2655 = vmatpush1.msra.mxu0 0.0
    %2656 = vmatprep.subr.mxu0 0.0
    %2657 = vmatpush1.msra.mxu0 0.0
    %2658 = vmatprep.subr.mxu0 0.0
    %2659 = vmatpush1.msra.mxu0 0.0
    %2660 = vmatprep.subr.mxu0 0.0
    %2661 = vmatpush1.msra.mxu0 0.0
    %2662 = vmatprep.subr.mxu0 0.0
    %2663 = vmatpush1.msra.mxu0 0.0
    %2664 = vmatprep.subr.mxu0 0.0
    %2665 = vmatpush1.msra.mxu0 0.0
    %2666 = vmatprep.subr.mxu0 0.0
    %2667 = vmatpush1.msra.mxu0 0.0
    %2668 = vmatprep.subr.mxu0 0.0
    %2669 = vmatpush1.msra.mxu0 0.0
    %2670 = vmatprep.subr.mxu0 0.0
    %2671 = vmatpush1.msra.mxu0 0.0
    %2672 = vmatprep.subr.mxu0 0.0
    %2673 = vmatpush1.msra.mxu0 0.0
    %2674 = vmatprep.subr.mxu0 0.0
    %2675 = vmatpush1.msra.mxu0 0.0
    %2676 = vmatprep.subr.mxu0 0.0
    %2677 = vmatpush1.msra.mxu0 0.0
    %2678 = vmatprep.subr.mxu0 0.0
    %2679 = vmatpush1.msra.mxu0 0.0
    %2680 = vmatprep.subr.mxu0 0.0
    %2681 = vmatpush1.msra.mxu0 %v2645
    %2682 = vmatprep.subr.mxu0 0.0
    %2683 = vmatpush2.msra.mxu0 0.0
    %2684 = vmatprep.subr.mxu0 0.0
    %2685 = vmatpush2.msra.mxu0 0.0
    %2686 = vmatprep.subr.mxu0 0.0
    %2687 = vmatpush2.msra.mxu0 0.0
    %2688 = vmatprep.subr.mxu0 0.0
    %2689 = vmatpush2.msra.mxu0 0.0
    %2690 = vmatprep.subr.mxu0 0.0
    %2691 = vmatpush2.msra.mxu0 0.0
    %2692 = vmatprep.subr.mxu0 0.0
    %2693 = vmatpush2.msra.mxu0 0.0
    %2694 = vmatprep.subr.mxu0 0.0
    %2695 = vmatpush2.msra.mxu0 0.0
    %2696 = vmatprep.subr.mxu0 0.0
    %2697 = vmatpush2.msra.mxu0 0.0
    %2698 = vmatprep.subr.mxu0 0.0
    %2699 = vmatpush2.msra.mxu0 0.0
    %2700 = vmatprep.subr.mxu0 0.0
    %2701 = vmatpush2.msra.mxu0 0.0
    %2702 = vmatprep.subr.mxu0 0.0
    %2703 = vmatpush2.msra.mxu0 0.0
    %2704 = vmatprep.subr.mxu0 0.0
    %2705 = vmatpush2.msra.mxu0 0.0
    %2706 = vmatprep.subr.mxu0 0.0
    %2707 = vmatpush2.msra.mxu0 0.0
    %2708 = vmatprep.subr.mxu0 0.0
    %2709 = vmatpush2.msra.mxu0 0.0
    %2710 = vmatprep.subr.mxu0 0.0
    %2711 = vmatpush2.msra.mxu0 0.0
    %2712 = vmatprep.subr.mxu0 0.0
    %2713 = vmatpush2.msra.mxu0 0.0
    %2714 = vmatprep.mubr.f32.mxu0 0.0
    %2715 = vmatmul.mubr.f32.gmra.mxu0 %v2648
    %v2716 = vpop.f32.mrf.mxu0
    %v2717 = vadd.f32 0.0, %v2716
    %v2718 = vpop.f32.mrf.mxu0
    %2719 = vdwg.mxu0
    %2721 = vrot.lane.b32.xlu0 %v2717, 24
    %v2722 = vpop.permute.xlu0 %2721
    %2724 = vst.msk [vmem:[#allocation2 + $0x8] sm:$0xff] %vm1357, %v2722
    %v2725 = vadd.f32 %v2554, %v2643
    %2726 = vrot.lane.b32.xlu0 %v157, 100
    %v2727 = vpop.permute.xlu0 %2726
    %2728 = vrot.lane.b32.xlu0 %v157, 68
    %v2729 = vpop.permute.xlu0 %2728
    %v2730 = vsel %vm163, %v2727, 0
    %v2732 = vsel %vm163, %v2729, 0
    %2734 = vmatprep.subr.mxu0 0.0
    %2735 = vmatpush1.xpose.msra.mxu0 0.0
    %2736 = vmatprep.subr.mxu0 0.0
    %2737 = vmatpush1.xpose.msra.mxu0 0.0
    %2738 = vmatprep.subr.mxu0 0.0
    %2739 = vmatpush1.xpose.msra.mxu0 0.0
    %2740 = vmatprep.subr.mxu0 0.0
    %2741 = vmatpush1.xpose.msra.mxu0 0.0
    %2742 = vmatprep.subr.mxu0 0.0
    %2743 = vmatpush1.xpose.msra.mxu0 0.0
    %2744 = vmatprep.subr.mxu0 0.0
    %2745 = vmatpush1.xpose.msra.mxu0 0.0
    %2746 = vmatprep.subr.mxu0 0.0
    %2747 = vmatpush1.xpose.msra.mxu0 0.0
    %2748 = vmatprep.subr.mxu0 0.0
    %2749 = vmatpush1.xpose.msra.mxu0 0.0
    %2750 = vmatprep.subr.mxu0 0.0
    %2751 = vmatpush1.xpose.msra.mxu0 0.0
    %2752 = vmatprep.subr.mxu0 0.0
    %2753 = vmatpush1.xpose.msra.mxu0 0.0
    %2754 = vmatprep.subr.mxu0 0.0
    %2755 = vmatpush1.xpose.msra.mxu0 0.0
    %2756 = vmatprep.subr.mxu0 0.0
    %2757 = vmatpush1.xpose.msra.mxu0 0.0
    %2758 = vmatprep.subr.mxu0 0.0
    %2759 = vmatpush1.xpose.msra.mxu0 0.0
    %2760 = vmatprep.subr.mxu0 0.0
    %2761 = vmatpush1.xpose.msra.mxu0 0.0
    %2762 = vmatprep.subr.mxu0 0.0
    %2763 = vmatpush1.xpose.msra.mxu0 0.0
    %2764 = vmatprep.subr.mxu0 0.0
    %2765 = vmatpush1.xpose.msra.mxu0 %v2732
    %2766 = vmatprep.subr.mxu0 0.0
    %2767 = vmatpush2.xpose.msra.mxu0 0.0
    %2768 = vmatprep.subr.mxu0 0.0
    %2769 = vmatpush2.xpose.msra.mxu0 0.0
    %2770 = vmatprep.subr.mxu0 0.0
    %2771 = vmatpush2.xpose.msra.mxu0 0.0
    %2772 = vmatprep.subr.mxu0 0.0
    %2773 = vmatpush2.xpose.msra.mxu0 0.0
    %2774 = vmatprep.subr.mxu0 0.0
    %2775 = vmatpush2.xpose.msra.mxu0 0.0
    %2776 = vmatprep.subr.mxu0 0.0
    %2777 = vmatpush2.xpose.msra.mxu0 0.0
    %2778 = vmatprep.subr.mxu0 0.0
    %2779 = vmatpush2.xpose.msra.mxu0 0.0
    %2780 = vmatprep.subr.mxu0 0.0
    %2781 = vmatpush2.xpose.msra.mxu0 0.0
    %2782 = vmatprep.subr.mxu0 0.0
    %2783 = vmatpush2.xpose.msra.mxu0 0.0
    %2784 = vmatprep.subr.mxu0 0.0
    %2785 = vmatpush2.xpose.msra.mxu0 0.0
    %2786 = vmatprep.subr.mxu0 0.0
    %2787 = vmatpush2.xpose.msra.mxu0 0.0
    %2788 = vmatprep.subr.mxu0 0.0
    %2789 = vmatpush2.xpose.msra.mxu0 0.0
    %2790 = vmatprep.subr.mxu0 0.0
    %2791 = vmatpush2.xpose.msra.mxu0 0.0
    %2792 = vmatprep.subr.mxu0 0.0
    %2793 = vmatpush2.xpose.msra.mxu0 0.0
    %2794 = vmatprep.subr.mxu0 0.0
    %2795 = vmatpush2.xpose.msra.mxu0 0.0
    %2796 = vmatprep.subr.mxu0 0.0
    %2797 = vmatpush2.xpose.msra.mxu0 0.0
    %2798 = vmatprep.mubr.f32.mxu0 0.0
    %2799 = vmatmul.mubr.f32.gmra.mxu0 %v2730
    %v2800 = vpop.f32.mrf.mxu0
    %v2801 = vadd.f32 0.0, %v2800
    %v2802 = vpop.f32.mrf.mxu0
    %2803 = vdwg.mxu0
    %v2804 = vsel %vm238, %v2801, -inf
    %2805 = vmax.xlane.f32.xlu0 %v2804
    %v2806 = vpop.xlane.xlu0 %2805
    %v2807 = vsub.f32 %v2801, %v2806
    %v2808 = vmul.f32 %v2807, 1.442695
    %v2809 = vpow.pop %v2808
    %v2810 = vsel %vm238, %v2809, 0.0
    %2811 = vadd.xlane.f32.xlu0 %v2810
    %v2812 = vpop.xlane.xlu0 %2811
    %v2813 = vrcp.pop %v2812
    %v2814 = vmul.f32 %v2809, %v2813
    %2815 = vrot.lane.b32.xlu0 %v157, 36
    %v2816 = vpop.permute.xlu0 %2815
    %v2819 = vsel %vm238, %v2814, 0
    %2821 = vmatprep.subr.mxu0 0.0
    %2822 = vmatpush1.msra.mxu0 0.0
    %2823 = vmatprep.subr.mxu0 0.0
    %2824 = vmatpush1.msra.mxu0 0.0
    %2825 = vmatprep.subr.mxu0 0.0
    %2826 = vmatpush1.msra.mxu0 0.0
    %2827 = vmatprep.subr.mxu0 0.0
    %2828 = vmatpush1.msra.mxu0 0.0
    %2829 = vmatprep.subr.mxu0 0.0
    %2830 = vmatpush1.msra.mxu0 0.0
    %2831 = vmatprep.subr.mxu0 0.0
    %2832 = vmatpush1.msra.mxu0 0.0
    %2833 = vmatprep.subr.mxu0 0.0
    %2834 = vmatpush1.msra.mxu0 0.0
    %2835 = vmatprep.subr.mxu0 0.0
    %2836 = vmatpush1.msra.mxu0 0.0
    %2837 = vmatprep.subr.mxu0 0.0
    %2838 = vmatpush1.msra.mxu0 0.0
    %2839 = vmatprep.subr.mxu0 0.0
    %2840 = vmatpush1.msra.mxu0 0.0
    %2841 = vmatprep.subr.mxu0 0.0
    %2842 = vmatpush1.msra.mxu0 0.0
    %2843 = vmatprep.subr.mxu0 0.0
    %2844 = vmatpush1.msra.mxu0 0.0
    %2845 = vmatprep.subr.mxu0 0.0
    %2846 = vmatpush1.msra.mxu0 0.0
    %2847 = vmatprep.subr.mxu0 0.0
    %2848 = vmatpush1.msra.mxu0 0.0
    %2849 = vmatprep.subr.mxu0 0.0
    %2850 = vmatpush1.msra.mxu0 0.0
    %2851 = vmatprep.subr.mxu0 0.0
    %2852 = vmatpush1.msra.mxu0 %v2816
    %2853 = vmatprep.subr.mxu0 0.0
    %2854 = vmatpush2.msra.mxu0 0.0
    %2855 = vmatprep.subr.mxu0 0.0
    %2856 = vmatpush2.msra.mxu0 0.0
    %2857 = vmatprep.subr.mxu0 0.0
    %2858 = vmatpush2.msra.mxu0 0.0
    %2859 = vmatprep.subr.mxu0 0.0
    %2860 = vmatpush2.msra.mxu0 0.0
    %2861 = vmatprep.subr.mxu0 0.0
    %2862 = vmatpush2.msra.mxu0 0.0
    %2863 = vmatprep.subr.mxu0 0.0
    %2864 = vmatpush2.msra.mxu0 0.0
    %2865 = vmatprep.subr.mxu0 0.0
    %2866 = vmatpush2.msra.mxu0 0.0
    %2867 = vmatprep.subr.mxu0 0.0
    %2868 = vmatpush2.msra.mxu0 0.0
    %2869 = vmatprep.subr.mxu0 0.0
    %2870 = vmatpush2.msra.mxu0 0.0
    %2871 = vmatprep.subr.mxu0 0.0
    %2872 = vmatpush2.msra.mxu0 0.0
    %2873 = vmatprep.subr.mxu0 0.0
    %2874 = vmatpush2.msra.mxu0 0.0
    %2875 = vmatprep.subr.mxu0 0.0
    %2876 = vmatpush2.msra.mxu0 0.0
    %2877 = vmatprep.subr.mxu0 0.0
    %2878 = vmatpush2.msra.mxu0 0.0
    %2879 = vmatprep.subr.mxu0 0.0
    %2880 = vmatpush2.msra.mxu0 0.0
    %2881 = vmatprep.subr.mxu0 0.0
    %2882 = vmatpush2.msra.mxu0 0.0
    %2883 = vmatprep.subr.mxu0 0.0
    %2884 = vmatpush2.msra.mxu0 0.0
    %2885 = vmatprep.mubr.f32.mxu0 0.0
    %2886 = vmatmul.mubr.f32.gmra.mxu0 %v2819
    %v2887 = vpop.f32.mrf.mxu0
    %v2888 = vadd.f32 0.0, %v2887
    %v2889 = vpop.f32.mrf.mxu0
    %2890 = vdwg.mxu0
    %2892 = vrot.lane.b32.xlu0 %v2888, 28
    %v2893 = vpop.permute.xlu0 %2892
    %2895 = vst.msk [vmem:[#allocation2 + $0x8] sm:$0xff] %vm1529, %v2893
    %v2896 = vadd.f32 %v2725, %v2814
    %v2897 = vmul.f32 %v2896, 0.125
    %s2898 = scalar_lea.vmem [#allocation10], 8
    %2899 = vst.msk [vmem:[%s2898] sm:$0xff] %vm238, %v2897
    %v2900 = vld [vmem:[#allocation2] sm:$0xff]
    %v2901 = vld [vmem:[#allocation2 + $0x8] sm:$0xff]
    %v2902 = vld [vmem:[#allocation8] sm:$0xff]
    %v2903 = vld [vmem:[#allocation8 + $0x8] sm:$0xff]
    %v2904 = vld [vmem:[#allocation8 + $0x10] sm:$0xff]
    %v2905 = vld [vmem:[#allocation8 + $0x18] sm:$0xff]
    %v2906 = vld [vmem:[%s4] sm:$0x1]
    %v2908 = vlaneseq
    %v2909 = vshrl.u32 %v2908, 7
    %v2910 = vsub.s32 0, %v2909
    %v2911 = vrot.slane %v2906, %v2910
    %v2914 = vsel %vm78, %v2900, 0
    %v2917 = vsel %vm78, %v2901, 0
    %2919 = vmatprep.subr.mxu0 0.0
    %2920 = vmatpush1.msra.mxu0 0.0
    %2921 = vmatprep.subr.mxu0 0.0
    %2922 = vmatpush1.msra.mxu0 0.0
    %2923 = vmatprep.subr.mxu0 0.0
    %2924 = vmatpush1.msra.mxu0 0.0
    %2925 = vmatprep.subr.mxu0 0.0
    %2926 = vmatpush1.msra.mxu0 0.0
    %2927 = vmatprep.subr.mxu0 0.0
    %2928 = vmatpush1.msra.mxu0 0.0
    %2929 = vmatprep.subr.mxu0 0.0
    %2930 = vmatpush1.msra.mxu0 0.0
    %2931 = vmatprep.subr.mxu0 0.0
    %2932 = vmatpush1.msra.mxu0 0.0
    %2933 = vmatprep.subr.mxu0 0.0
    %2934 = vmatpush1.msra.mxu0 0.0
    %2935 = vmatprep.subr.mxu0 0.0
    %2936 = vmatpush1.msra.mxu0 0.0
    %2937 = vmatprep.subr.mxu0 0.0
    %2938 = vmatpush1.msra.mxu0 0.0
    %2939 = vmatprep.subr.mxu0 0.0
    %2940 = vmatpush1.msra.mxu0 0.0
    %2941 = vmatprep.subr.mxu0 0.0
    %2942 = vmatpush1.msra.mxu0 0.0
    %2943 = vmatprep.subr.mxu0 0.0
    %2944 = vmatpush1.msra.mxu0 %v2905
    %2945 = vmatprep.subr.mxu0 0.0
    %2946 = vmatpush1.msra.mxu0 %v2904
    %2947 = vmatprep.subr.mxu0 0.0
    %2948 = vmatpush1.msra.mxu0 %v2903
    %2949 = vmatprep.subr.mxu0 0.0
    %2950 = vmatpush1.msra.mxu0 %v2902
    %2951 = vmatprep.subr.mxu0 0.0
    %2952 = vmatpush2.msra.mxu0 0.0
    %2953 = vmatprep.subr.mxu0 0.0
    %2954 = vmatpush2.msra.mxu0 0.0
    %2955 = vmatprep.subr.mxu0 0.0
    %2956 = vmatpush2.msra.mxu0 0.0
    %2957 = vmatprep.subr.mxu0 0.0
    %2958 = vmatpush2.msra.mxu0 0.0
    %2959 = vmatprep.subr.mxu0 0.0
    %2960 = vmatpush2.msra.mxu0 0.0
    %2961 = vmatprep.subr.mxu0 0.0
    %2962 = vmatpush2.msra.mxu0 0.0
    %2963 = vmatprep.subr.mxu0 0.0
    %2964 = vmatpush2.msra.mxu0 0.0
    %2965 = vmatprep.subr.mxu0 0.0
    %2966 = vmatpush2.msra.mxu0 0.0
    %2967 = vmatprep.subr.mxu0 0.0
    %2968 = vmatpush2.msra.mxu0 0.0
    %2969 = vmatprep.subr.mxu0 0.0
    %2970 = vmatpush2.msra.mxu0 0.0
    %2971 = vmatprep.subr.mxu0 0.0
    %2972 = vmatpush2.msra.mxu0 0.0
    %2973 = vmatprep.subr.mxu0 0.0
    %2974 = vmatpush2.msra.mxu0 0.0
    %2975 = vmatprep.subr.mxu0 0.0
    %2976 = vmatpush2.msra.mxu0 0.0
    %2977 = vmatprep.subr.mxu0 0.0
    %2978 = vmatpush2.msra.mxu0 0.0
    %2979 = vmatprep.subr.mxu0 0.0
    %2980 = vmatpush2.msra.mxu0 0.0
    %2981 = vmatprep.subr.mxu0 0.0
    %2982 = vmatpush2.msra.mxu0 0.0
    %2983 = vmatprep.mubr.f32.mxu0 0.0
    %2984 = vmatmul.mubr.f32.gmra.mxu0 %v2914
    %v2985 = vpop.f32.mrf.mxu0
    %v2986 = vadd.f32 %v2911, %v2985
    %v2987 = vpop.f32.mrf.mxu0
    %2988 = vmatprep.mubr.f32.mxu0 0.0
    %2989 = vmatmul.mubr.f32.gmra.mxu0 %v2917
    %v2990 = vpop.f32.mrf.mxu0
    %v2991 = vadd.f32 %v2911, %v2990
    %v2992 = vpop.f32.mrf.mxu0
    %2993 = vdwg.mxu0
    %v2995 = vcombine.high %v2986, %v2986
    %v2997 = vunpack.c.l.s4 1966171168
    %v2998 = vunpack.c.0.s8 %v2997
    %v2999 = vlaneseq
    %v3000 = vshrl.u32 %v2999, 7
    %v3001 = vsub.s32 %v2998, %v3000
    %v3002 = vrot.slane %v2986, %v3001
    %v3004 = vunpack.c.l.s4 1966171168
    %v3005 = vunpack.c.0.s8 %v3004
    %v3006 = vlaneseq
    %v3007 = vshrl.u32 %v3006, 7
    %v3008 = vsub.s32 %v3005, %v3007
    %v3009 = vrot.slane %v2995, %v3008
    %v3010 = vcombine.high %v3002, %v3002
    %v3011 = vcombine.high %v3009, %v3009
    %v3013 = vunpack.c.l.s4 1966171168
    %v3014 = vunpack.c.0.s8 %v3013
    %v3015 = vlaneseq
    %v3016 = vshrl.u32 %v3015, 7
    %v3017 = vsub.s32 %v3014, %v3016
    %v3018 = vrot.slane %v3002, %v3017
    %v3020 = vunpack.c.l.s4 1966171168
    %v3021 = vunpack.c.0.s8 %v3020
    %v3022 = vlaneseq
    %v3023 = vshrl.u32 %v3022, 7
    %v3024 = vsub.s32 %v3021, %v3023
    %v3025 = vrot.slane %v3009, %v3024
    %v3027 = vunpack.c.l.s4 1966171168
    %v3028 = vunpack.c.0.s8 %v3027
    %v3029 = vlaneseq
    %v3030 = vshrl.u32 %v3029, 7
    %v3031 = vsub.s32 %v3028, %v3030
    %v3032 = vrot.slane %v3010, %v3031
    %v3034 = vunpack.c.l.s4 1966171168
    %v3035 = vunpack.c.0.s8 %v3034
    %v3036 = vlaneseq
    %v3037 = vshrl.u32 %v3036, 7
    %v3038 = vsub.s32 %v3035, %v3037
    %v3039 = vrot.slane %v3011, %v3038
    %v3040 = vcombine.high %v3018, %v3018
    %v3041 = vcombine.high %v3025, %v3025
    %v3042 = vcombine.high %v3032, %v3032
    %v3043 = vcombine.high %v3039, %v3039
    %vm3052 = vcmask 253952
    %3053 = vst.msk [vmem:[#allocation9] sm:$0x1] %vm3052, %v3018
    %3054 = vst.msk [vmem:[#allocation9 + $0x2] sm:$0x1] %vm3052, %v3032
    %3055 = vst.msk [vmem:[#allocation9 + $0x4] sm:$0x1] %vm3052, %v3040
    %3056 = vst.msk [vmem:[#allocation9 + $0x6] sm:$0x1] %vm3052, %v3042
    %3057 = vst.msk [vmem:[#allocation9 + $0x8] sm:$0x1] %vm3052, %v3025
    %3058 = vst.msk [vmem:[#allocation9 + $0xa] sm:$0x1] %vm3052, %v3039
    %3059 = vst.msk [vmem:[#allocation9 + $0xc] sm:$0x1] %vm3052, %v3041
    %3060 = vst.msk [vmem:[#allocation9 + $0xe] sm:$0x1] %vm3052, %v3043
    %v3062 = vcombine.high %v2991, %v2991
    %v3064 = vunpack.c.l.s4 1966171168
    %v3065 = vunpack.c.0.s8 %v3064
    %v3066 = vlaneseq
    %v3067 = vshrl.u32 %v3066, 7
    %v3068 = vsub.s32 %v3065, %v3067
    %v3069 = vrot.slane %v2991, %v3068
    %v3071 = vunpack.c.l.s4 1966171168
    %v3072 = vunpack.c.0.s8 %v3071
    %v3073 = vlaneseq
    %v3074 = vshrl.u32 %v3073, 7
    %v3075 = vsub.s32 %v3072, %v3074
    %v3076 = vrot.slane %v3062, %v3075
    %v3077 = vcombine.high %v3069, %v3069
    %v3078 = vcombine.high %v3076, %v3076
    %v3080 = vunpack.c.l.s4 1966171168
    %v3081 = vunpack.c.0.s8 %v3080
    %v3082 = vlaneseq
    %v3083 = vshrl.u32 %v3082, 7
    %v3084 = vsub.s32 %v3081, %v3083
    %v3085 = vrot.slane %v3069, %v3084
    %v3087 = vunpack.c.l.s4 1966171168
    %v3088 = vunpack.c.0.s8 %v3087
    %v3089 = vlaneseq
    %v3090 = vshrl.u32 %v3089, 7
    %v3091 = vsub.s32 %v3088, %v3090
    %v3092 = vrot.slane %v3076, %v3091
    %v3094 = vunpack.c.l.s4 1966171168
    %v3095 = vunpack.c.0.s8 %v3094
    %v3096 = vlaneseq
    %v3097 = vshrl.u32 %v3096, 7
    %v3098 = vsub.s32 %v3095, %v3097
    %v3099 = vrot.slane %v3077, %v3098
    %v3101 = vunpack.c.l.s4 1966171168
    %v3102 = vunpack.c.0.s8 %v3101
    %v3103 = vlaneseq
    %v3104 = vshrl.u32 %v3103, 7
    %v3105 = vsub.s32 %v3102, %v3104
    %v3106 = vrot.slane %v3078, %v3105
    %v3107 = vcombine.high %v3085, %v3085
    %v3108 = vcombine.high %v3092, %v3092
    %v3109 = vcombine.high %v3099, %v3099
    %v3110 = vcombine.high %v3106, %v3106
    %3119 = vst.msk [vmem:[#allocation9 + $0x1] sm:$0x1] %vm3052, %v3085
    %3120 = vst.msk [vmem:[#allocation9 + $0x3] sm:$0x1] %vm3052, %v3099
    %3121 = vst.msk [vmem:[#allocation9 + $0x5] sm:$0x1] %vm3052, %v3107
    %3122 = vst.msk [vmem:[#allocation9 + $0x7] sm:$0x1] %vm3052, %v3109
    %3123 = vst.msk [vmem:[#allocation9 + $0x9] sm:$0x1] %vm3052, %v3092
    %3124 = vst.msk [vmem:[#allocation9 + $0xb] sm:$0x1] %vm3052, %v3106
    %3125 = vst.msk [vmem:[#allocation9 + $0xd] sm:$0x1] %vm3052, %v3108
    %3126 = vst.msk [vmem:[#allocation9 + $0xf] sm:$0x1] %vm3052, %v3110
    // Predicated region
    $region34: #{tpu_custom_call.1} parent=1 // pred_check
      _
    $region35: #{tpu_custom_call.1} parent=1 // pred_check_branch
      %3128 = sbr.rel (0) target = $region37
    $region36: #{tpu_custom_call.1} parent=1 // pred_region
      %s3130 = ssub.s32 256, 256
      %3131 = vsyncadd [#allocation5], %s3130
      %s3132 = sshll.u32 [#allocation9], 4
      %s3133 = int_to_ptr.vmem [resolvable:$true] %s3132
      %3138 = dma.vmem_to_hbm [thread:$0]  %s3133, 256, %s5, [#allocation5], 32, 32, 2
    $region37: #{tpu_custom_call.1} parent=1 // pred_fallthru
      _
    // Predicated region
    $region38: #{tpu_custom_call.1} parent=1 // pred_check
      _
    $region39: #{tpu_custom_call.1} parent=1 // pred_check_branch
      %3140 = sbr.rel (0) target = $region41
    $region40: #{tpu_custom_call.1} parent=1 // pred_region
      %s3142 = ssub.s32 256, 256
      %3143 = vsyncadd [#allocation11], %s3142
      %s3144 = sshll.u32 [#allocation10], 4
      %s3145 = int_to_ptr.vmem [resolvable:$true] %s3144
      %3150 = dma.vmem_to_hbm [thread:$0]  %s3145, 256, %s6, [#allocation11], 128, 128, 8
    $region41: #{tpu_custom_call.1} parent=1 // pred_fallthru
      _
    // Predicated region
    $region42: #{tpu_custom_call.1} parent=1 // pred_check
      _
    $region43: #{tpu_custom_call.1} parent=1 // pred_check_branch
      %3152 = sbr.rel (0) target = $region45
    $region44: #{tpu_custom_call.1} parent=1 // pred_region
      %3153 = dma.done [#allocation5], 256
    $region45: #{tpu_custom_call.1} parent=1 // pred_fallthru
      _
    // Predicated region
    $region46: #{tpu_custom_call.1} parent=1 // pred_check
      _
    $region47: #{tpu_custom_call.1} parent=1 // pred_check_branch
      %3155 = sbr.rel (0) target = $region49
    $region48: #{tpu_custom_call.1} parent=1 // pred_region
      %3156 = dma.done [#allocation11], 256
    $region49: #{tpu_custom_call.1} parent=1 // pred_fallthru
      _
    %3157 = vsyncpa [#allocation4], 1
    %3158 = vsyncpa [#allocation7], 1
    %3159 = vsyncpa [#allocation5], 1
    %3160 = vsyncpa [#allocation11], 1

</llo_original>
